<compile_context>
chip_gen: v7x
topology: tpu7x:2x2x1
jax: 0.10.0
libtpu: 0.0.40
codegen_flags: <defaults>
</compile_context>

<pallas_src>
import functools
import math

import jax
import jax.numpy as jnp
from jax.experimental import pallas as pl
from jax.experimental.pallas import tpu as pltpu


NTK_SAMPLES = 4
ALPHA = 0.01
LATENT_DIM = 8
STATE_DIM = 16          # observation_shape (non-pixel)
DEC_HIDDEN = 64         # synthetic decoder hidden width
FEAT_DIM = 128          # feature_extractor output width
PROJ_HIDDEN = 512
PROJ_OUT = 256
LAT_FEAT = 128
MINE_HIDDEN = 512


# ---------------------------------------------------------------------------
# Bias slab layout: every (1, w) bias / LN param packed at 128-aligned lanes.
# ---------------------------------------------------------------------------
_BIAS_LAYOUT = (
    ("db1", DEC_HIDDEN), ("db2", STATE_DIM),
    ("fb1", 128), ("fb2", 256), ("fb3", FEAT_DIM),
    ("jb1", PROJ_HIDDEN), ("jg", PROJ_HIDDEN), ("jbeta", PROJ_HIDDEN),
    ("jb2", PROJ_OUT),
    ("lb1", 128), ("lb2", LAT_FEAT),
    ("mb1", MINE_HIDDEN), ("mb2", MINE_HIDDEN), ("mb3", 1),
)


def _round128(w):
    return ((w + 127) // 128) * 128


_BIAS_OFFS = {}
_off = 0
for _name, _w in _BIAS_LAYOUT:
    _BIAS_OFFS[_name] = (_off, _w)
    _off += _round128(_w)
_BIAS_TOTAL = _off


# ---------------------------------------------------------------------------
# Fused Pallas kernel: decoder -> NTK diffs -> feature_extractor -> projector
#                      -> latent_processor -> MINE (perm folded) -> MI head
# ---------------------------------------------------------------------------
def _fused_kernel(z_stack_ref, perm_ref, bias_ref,
                  dw1_ref, dw2_ref, fw1_ref, fw2_ref, fw3_ref,
                  lw1_ref, lw2_ref, mw3_ref,
                  jw1_hbm, jw2_hbm, mw1j_hbm, mw1l_hbm, mw2_hbm,
                  out_ref,
                  jw1_buf, jw2_buf, mw1j_buf, mw1l_buf, mw2_buf, sem,
                  *, n_rows, n_pad, ntk_samples):
    f32 = jnp.float32
    bf16 = jnp.bfloat16

    # Kick off DMAs for the late-stage (projector / MINE) weights so they land
    # while the decoder / feature-extractor chain computes.
    cp_jw1 = pltpu.make_async_copy(jw1_hbm, jw1_buf, sem.at[0]); cp_jw1.start()
    cp_jw2 = pltpu.make_async_copy(jw2_hbm, jw2_buf, sem.at[1]); cp_jw2.start()
    cp_m1j = pltpu.make_async_copy(mw1j_hbm, mw1j_buf, sem.at[2]); cp_m1j.start()
    cp_m1l = pltpu.make_async_copy(mw1l_hbm, mw1l_buf, sem.at[3]); cp_m1l.start()
    cp_mw2 = pltpu.make_async_copy(mw2_hbm, mw2_buf, sem.at[4]); cp_mw2.start()

    def bias(name):
        off, w = _BIAS_OFFS[name]
        return bias_ref[:, off:off + w]          # static, 128-aligned lane slice

    # --- decoder on stacked rows [z; z+d1; ...; z+dS]  ((1+S)*n_pad, latent) ---
    zs = z_stack_ref[...]
    h = jnp.maximum(jnp.dot(zs, dw1_ref[...],
                            preferred_element_type=f32) + bias("db1"), 0.0)
    f_all = jnp.dot(h, dw2_ref[...], preferred_element_type=f32) + bias("db2")

    f_z = f_all[:n_pad, :]
    # 1/perturbation_scale is folded into fw1 (glue), so diffs are unscaled here.
    diff = jnp.concatenate(
        [f_all[(s + 1) * n_pad:(s + 2) * n_pad, :] - f_z
         for s in range(ntk_samples)], axis=0)                     # (S*n_pad, D)

    # --- feature_extractor: Linear-ReLU-Linear-ReLU-Linear on all diffs ---
    h = jnp.maximum(jnp.dot(diff, fw1_ref[...],
                            preferred_element_type=f32) + bias("fb1"), 0.0)
    h = jnp.maximum(jnp.dot(h.astype(bf16), fw2_ref[...],
                            preferred_element_type=f32) + bias("fb2"), 0.0)
    jac = jnp.dot(h.astype(bf16), fw3_ref[...],
                  preferred_element_type=f32) + bias("fb3")        # (S*n_pad, 128)

    # --- latent_processor on z (first n_pad stacked rows) ---
    z = zs[:n_pad, :]
    h = jnp.maximum(jnp.dot(z, lw1_ref[...],
                            preferred_element_type=f32) + bias("lb1"), 0.0)
    lf = jnp.dot(h, lw2_ref[...], preferred_element_type=f32) + bias("lb2")

    # --- jacobian_projector layer 1 as K-split accumulation (no lane-concat) ---
    cp_jw1.wait()
    jac_bf = jac.astype(bf16)
    acc = jnp.dot(jac_bf[0:n_pad, :], jw1_buf[0:FEAT_DIM, :],
                  preferred_element_type=f32)
    for s in range(1, ntk_samples):
        acc = acc + jnp.dot(jac_bf[s * n_pad:(s + 1) * n_pad, :],
                            jw1_buf[s * FEAT_DIM:(s + 1) * FEAT_DIM, :],
                            preferred_element_type=f32)
    hp = acc + bias("jb1")                                          # (n_pad, 512)

    # LayerNorm -> ReLU (f32 elementwise; Dropout = identity, eval mode)
    mu = jnp.mean(hp, axis=-1, keepdims=True)
    var = jnp.mean((hp - mu) * (hp - mu), axis=-1, keepdims=True)
    hp = (hp - mu) * jax.lax.rsqrt(var + 1e-5)
    hp = jnp.maximum(hp * bias("jg") + bias("jbeta"), 0.0)

    cp_jw2.wait()
    jf = jnp.dot(hp.astype(bf16), jw2_buf[...],
                 preferred_element_type=f32) + bias("jb2")          # (n_pad, 256)

    # --- MINE layer 1 with the block-diag permutation folded in ---
    cp_m1j.wait()
    u = jnp.dot(jf.astype(bf16), mw1j_buf[...], preferred_element_type=f32)
    cp_m1l.wait()
    v = jnp.dot(lf.astype(bf16), mw1l_buf[...], preferred_element_type=f32)
    u_marg = jnp.dot(perm_ref[...], u, preferred_element_type=f32)  # perm@(jf@W1_j)
    mb1 = bias("mb1")
    h_joint = jnp.maximum(u + v + mb1, 0.0)
    h_marg = jnp.maximum(u_marg + v + mb1, 0.0)

    # --- MINE layer 2 + 512->1 head (VPU multiply + lane reduce) ---
    cp_mw2.wait()
    h2 = jnp.concatenate([h_joint, h_marg], axis=0)                 # (2*n_pad, 512)
    h2 = jnp.maximum(jnp.dot(h2.astype(bf16), mw2_buf[...],
                             preferred_element_type=f32) + bias("mb2"), 0.0)
    t = jnp.sum(h2 * mw3_ref[...], axis=-1, keepdims=True) + bias("mb3")

    # --- MINE lower bound, masking the pad rows (rows >= n_rows) ---
    t_joint = t[:n_pad, :]
    t_marg = t[n_pad:, :]
    row = jax.lax.broadcasted_iota(jnp.int32, (n_pad, 1), 0)
    valid = row < n_rows
    joint_mean = jnp.sum(jnp.where(valid, t_joint, 0.0)) / n_rows
    tm = jnp.where(valid, t_marg, -1e30)
    m = jnp.max(tm)
    t_log = m + jnp.log(jnp.sum(jnp.exp(tm - m)) / n_rows)
    mi = joint_mean - t_log
    mi_clamped = jnp.maximum(mi, 0.0)

    # lane-dense (1,128) metrics slab: [mi_clamped, mi_raw, joint_term, marginal_term, 0...]
    lane = jax.lax.broadcasted_iota(jnp.int32, out_ref.shape, 1)
    out_ref[...] = jnp.where(lane == 0, mi_clamped,
                   jnp.where(lane == 1, mi,
                   jnp.where(lane == 2, joint_mean,
                   jnp.where(lane == 3, t_log, 0.0))))


def _run_fused(params, z_stack, perm_mat, fw1_scaled, n_rows, n_pad):
    vmem = pltpu.MemorySpace.VMEM
    inputs = (z_stack, perm_mat, params["bias_slab"],
              params["dw1"], params["dw2"],
              fw1_scaled, params["fw2"], params["fw3"],
              params["lw1"], params["lw2"], params["mw3_row"],
              params["jw1"], params["jw2"],
              params["mw1_j"], params["mw1_l"], params["mw2"])
    in_specs = ([pl.BlockSpec(memory_space=vmem)] * 11          # small, auto-DMA
                + [pl.BlockSpec(memory_space=pl.ANY)] * 5)      # big, manual DMA
    scratch_shapes = [
        pltpu.VMEM(params["jw1"].shape, jnp.bfloat16),
        pltpu.VMEM(params["jw2"].shape, jnp.bfloat16),
        pltpu.VMEM(params["mw1_j"].shape, jnp.bfloat16),
        pltpu.VMEM(params["mw1_l"].shape, jnp.bfloat16),
        pltpu.VMEM(params["mw2"].shape, jnp.bfloat16),
        pltpu.SemaphoreType.DMA((5,)),
    ]
    return pl.pallas_call(
        functools.partial(_fused_kernel, n_rows=n_rows, n_pad=n_pad,
                          ntk_samples=NTK_SAMPLES),
        out_shape=jax.ShapeDtypeStruct((1, 128), jnp.float32),
        in_specs=in_specs,
        out_specs=pl.BlockSpec(memory_space=vmem),
        scratch_shapes=scratch_shapes,
        cost_estimate=pl.CostEstimate(flops=45_000_000, transcendentals=64,
                                      bytes_accessed=2_400_000),
    )(*inputs)


# ---------------------------------------------------------------------------
# Parameter initialization (deterministic, PyTorch-Linear-style uniform)
# ---------------------------------------------------------------------------
def init_linear(key, fan_in, fan_out, dtype=jnp.float32):
    kw, kb = jax.random.split(key)
    bound = 1.0 / math.sqrt(fan_in)
    w = jax.random.uniform(kw, (fan_in, fan_out), jnp.float32, -bound, bound)
    b = jax.random.uniform(kb, (1, fan_out), jnp.float32, -bound, bound)
    return w.astype(dtype), b


def init_params(key, latent_dim=LATENT_DIM, state_dim=STATE_DIM):
    ks = jax.random.split(key, 12)
    bf16 = jnp.bfloat16
    biases = {}

    # synthetic decoder: Linear(latent, 64) -> ReLU -> Linear(64, state_dim)
    dw1, biases["db1"] = init_linear(ks[0], latent_dim, DEC_HIDDEN)
    dw2, biases["db2"] = init_linear(ks[1], DEC_HIDDEN, state_dim)
    # feature_extractor: Linear(state,128) ReLU Linear(128,256) ReLU Linear(256,128)
    fw1, biases["fb1"] = init_linear(ks[2], state_dim, 128)
    fw2, biases["fb2"] = init_linear(ks[3], 128, 256, bf16)
    fw3, biases["fb3"] = init_linear(ks[4], 256, FEAT_DIM, bf16)
    # jacobian_projector: Linear(512,512) LN ReLU Dropout Linear(512,256)
    jw1, biases["jb1"] = init_linear(ks[5], FEAT_DIM * NTK_SAMPLES, PROJ_HIDDEN, bf16)
    biases["jg"] = jnp.ones((1, PROJ_HIDDEN), jnp.float32)
    biases["jbeta"] = jnp.zeros((1, PROJ_HIDDEN), jnp.float32)
    jw2, biases["jb2"] = init_linear(ks[6], PROJ_HIDDEN, PROJ_OUT, bf16)
    # latent_processor: Linear(latent,128) ReLU Linear(128,128)
    lw1, biases["lb1"] = init_linear(ks[7], latent_dim, 128)
    lw2, biases["lb2"] = init_linear(ks[8], 128, LAT_FEAT)
    # mine_network: Linear(384,512) ReLU Drop Linear(512,512) ReLU Drop Linear(512,1)
    mw1, biases["mb1"] = init_linear(ks[9], PROJ_OUT + LAT_FEAT, MINE_HIDDEN, bf16)
    mw2, biases["mb2"] = init_linear(ks[10], MINE_HIDDEN, MINE_HIDDEN, bf16)
    mw3, biases["mb3"] = init_linear(ks[11], MINE_HIDDEN, 1)

    # pack all (1, w) biases / LN params into a single lane-aligned slab
    parts = []
    for name, w in _BIAS_LAYOUT:
        b = biases[name].astype(jnp.float32)
        padw = _round128(w)
        if padw > w:
            b = jnp.pad(b, ((0, 0), (0, padw - w)))
        parts.append(b)
    bias_slab = jnp.concatenate(parts, axis=1)                  # (1, _BIAS_TOTAL)

    return {
        "dw1": dw1, "dw2": dw2,
        "fw1": fw1, "fw2": fw2, "fw3": fw3,
        "jw1": jw1, "jw2": jw2,
        "lw1": lw1, "lw2": lw2,
        "mw1_j": mw1[:PROJ_OUT, :], "mw1_l": mw1[PROJ_OUT:, :],   # perm-fold split
        "mw2": mw2, "mw3_row": mw3.T,                             # (1, 512)
        "bias_slab": bias_slab,
        "perturbation_scale": jnp.float32(0.1),
        "running_mean": jnp.float32(0.0),
    }


# ---------------------------------------------------------------------------
# Forward pass (mirrors FunctionSpaceEpistemicEstimator.forward, non-pixel path)
# ---------------------------------------------------------------------------
@functools.partial(jax.jit, static_argnames=("num_samples",))
def forward(params, next_latent_mean, next_latent_logvar, key, num_samples=5):
    batch_size, latent_dim = next_latent_mean.shape
    n = num_samples * batch_size
    n_pad = ((n + 7) // 8) * 8          # 8-aligned rows => tile-aligned kernel slices
    k_z, k_ntk, k_perm = jax.random.split(key, 3)

    # --- sample z from q(z) = N(mean, exp(logvar)) ---
    eps_n = jax.random.normal(k_z, (num_samples, batch_size, latent_dim), jnp.float32)
    z_all = (next_latent_mean[None] +
             eps_n * jnp.exp(0.5 * next_latent_logvar)[None]).reshape(n, latent_dim)
    z_pad = jnp.zeros((n_pad, latent_dim), jnp.float32).at[:n].set(z_all)

    # --- NTK perturbation directions: F.normalize(randn) * perturbation_scale ---
    epsilon = params["perturbation_scale"]
    delta = jax.random.normal(k_ntk, (NTK_SAMPLES, n_pad, latent_dim), jnp.float32)
    norm = jnp.linalg.norm(delta, axis=-1, keepdims=True)
    delta = delta / jnp.maximum(norm, 1e-12) * epsilon
    z_stack = jnp.concatenate([z_pad[None], z_pad[None] + delta], axis=0
                              ).reshape((NTK_SAMPLES + 1) * n_pad, latent_dim)

    # --- per-block random permutation as a block-diagonal 0/1 matrix ---
    perm_keys = jax.random.split(k_perm, num_samples)
    perm_mat = jnp.zeros((n_pad, n_pad), jnp.float32)
    for i in range(num_samples):
        perm = jax.random.permutation(perm_keys[i], batch_size)
        oh = jax.nn.one_hot(perm, batch_size, dtype=jnp.float32)
        perm_mat = perm_mat.at[i * batch_size:(i + 1) * batch_size,
                               i * batch_size:(i + 1) * batch_size].set(oh)

    # fold 1/epsilon finite-difference scaling into the first FE weight
    fw1_scaled = params["fw1"] * (1.0 / epsilon)

    # --- single fused Pallas kernel for the whole pipeline ---
    out = _run_fused(params, z_stack, perm_mat, fw1_scaled, n, n_pad)  # (1, 128)
    mi_clamped = out[0, 0]
    mi_lower_bound = out[0, 1]
    joint_term = out[0, 2]
    t_log = out[0, 3]

    epistemic_value = jnp.full((batch_size,), mi_clamped, jnp.float32)

    # --- metrics (matches ema_loss / EMALoss running-mean semantics) ---
    t_exp = jnp.exp(t_log)
    running_mean = jnp.where(params["running_mean"] == 0.0, t_exp,
                             ALPHA * t_exp + (1.0 - ALPHA) * params["running_mean"])
    metrics = {
        "epistemic/mi_estimate": mi_lower_bound,
        "epistemic/joint_term": joint_term,
        "epistemic/marginal_term": t_log,
        "epistemic/running_mean": running_mean,
    }
    return epistemic_value, metrics


# ---------------------------------------------------------------------------
if __name__ == "__main__":
    batch = 2
    num_samples = 5

    root = jax.random.PRNGKey(0)
    k_param, k_mean, k_logvar, k_fwd = jax.random.split(root, 4)

    params = init_params(k_param)
    next_latent_mean = jax.random.normal(k_mean, (batch, LATENT_DIM), jnp.float32)
    next_latent_logvar = 0.1 * jax.random.normal(k_logvar, (batch, LATENT_DIM),
                                                 jnp.float32)

    epistemic, metrics = forward(params, next_latent_mean, next_latent_logvar,
                                 k_fwd, num_samples=num_samples)
    epistemic = jax.block_until_ready(epistemic)
    jax.block_until_ready(metrics["epistemic/mi_estimate"])

    assert epistemic.shape == (batch,)
    assert bool(jnp.all(epistemic >= 0.0))
    assert bool(jnp.isfinite(metrics["epistemic/mi_estimate"]))
    print("KERNEL_OK")
</pallas_src>

<mosaic_0001>
module attributes {stable_mosaic.version = 11 : i64} {
  func.func @_fused_kernel(%arg0: memref<80x8xf32, #tpu.memory_space<vmem>>, %arg1: memref<16x16xf32, #tpu.memory_space<vmem>>, %arg2: memref<1x3968xf32, #tpu.memory_space<vmem>>, %arg3: memref<8x64xf32, #tpu.memory_space<vmem>>, %arg4: memref<64x16xf32, #tpu.memory_space<vmem>>, %arg5: memref<16x128xf32, #tpu.memory_space<vmem>>, %arg6: memref<128x256xbf16, #tpu.memory_space<vmem>>, %arg7: memref<256x128xbf16, #tpu.memory_space<vmem>>, %arg8: memref<8x128xf32, #tpu.memory_space<vmem>>, %arg9: memref<128x128xf32, #tpu.memory_space<vmem>>, %arg10: memref<1x512xf32, #tpu.memory_space<vmem>>, %arg11: memref<512x512xbf16, #tpu.memory_space<any>>, %arg12: memref<512x256xbf16, #tpu.memory_space<any>>, %arg13: memref<256x512xbf16, #tpu.memory_space<any>>, %arg14: memref<128x512xbf16, #tpu.memory_space<any>>, %arg15: memref<512x512xbf16, #tpu.memory_space<any>>, %arg16: memref<1x128xf32, #tpu.memory_space<vmem>>, %arg17: memref<512x512xbf16, #tpu.memory_space<vmem>>, %arg18: memref<512x256xbf16, #tpu.memory_space<vmem>>, %arg19: memref<256x512xbf16, #tpu.memory_space<vmem>>, %arg20: memref<128x512xbf16, #tpu.memory_space<vmem>>, %arg21: memref<512x512xbf16, #tpu.memory_space<vmem>>, %arg22: memref<5x!tpu.dma_semaphore, #tpu.memory_space<semaphore_mem>>) attributes {dimension_semantics = [], scalar_prefetch = 0 : i64, scratch_operands = 6 : i64, tpu.core_type = #tpu.core_type<tc>} {
    %c0_i32 = arith.constant 0 : i32
    %0 = tpu.memref_slice %arg22[%c0_i32] : memref<5x!tpu.dma_semaphore, #tpu.memory_space<semaphore_mem>> -> memref<1x!tpu.dma_semaphore, #tpu.memory_space<semaphore_mem>>
    %1 = tpu.memref_squeeze %0 : memref<1x!tpu.dma_semaphore, #tpu.memory_space<semaphore_mem>> -> memref<!tpu.dma_semaphore, #tpu.memory_space<semaphore_mem>>
    tpu.enqueue_dma source(%arg11 : memref<512x512xbf16, #tpu.memory_space<any>>) target(%arg17 : memref<512x512xbf16, #tpu.memory_space<vmem>>) target_semaphore(%1 : memref<!tpu.dma_semaphore, #tpu.memory_space<semaphore_mem>>)
    %c1_i32 = arith.constant 1 : i32
    %2 = tpu.memref_slice %arg22[%c1_i32] : memref<5x!tpu.dma_semaphore, #tpu.memory_space<semaphore_mem>> -> memref<1x!tpu.dma_semaphore, #tpu.memory_space<semaphore_mem>>
    %3 = tpu.memref_squeeze %2 : memref<1x!tpu.dma_semaphore, #tpu.memory_space<semaphore_mem>> -> memref<!tpu.dma_semaphore, #tpu.memory_space<semaphore_mem>>
    tpu.enqueue_dma source(%arg12 : memref<512x256xbf16, #tpu.memory_space<any>>) target(%arg18 : memref<512x256xbf16, #tpu.memory_space<vmem>>) target_semaphore(%3 : memref<!tpu.dma_semaphore, #tpu.memory_space<semaphore_mem>>)
    %c2_i32 = arith.constant 2 : i32
    %4 = tpu.memref_slice %arg22[%c2_i32] : memref<5x!tpu.dma_semaphore, #tpu.memory_space<semaphore_mem>> -> memref<1x!tpu.dma_semaphore, #tpu.memory_space<semaphore_mem>>
    %5 = tpu.memref_squeeze %4 : memref<1x!tpu.dma_semaphore, #tpu.memory_space<semaphore_mem>> -> memref<!tpu.dma_semaphore, #tpu.memory_space<semaphore_mem>>
    tpu.enqueue_dma source(%arg13 : memref<256x512xbf16, #tpu.memory_space<any>>) target(%arg19 : memref<256x512xbf16, #tpu.memory_space<vmem>>) target_semaphore(%5 : memref<!tpu.dma_semaphore, #tpu.memory_space<semaphore_mem>>)
    %c3_i32 = arith.constant 3 : i32
    %6 = tpu.memref_slice %arg22[%c3_i32] : memref<5x!tpu.dma_semaphore, #tpu.memory_space<semaphore_mem>> -> memref<1x!tpu.dma_semaphore, #tpu.memory_space<semaphore_mem>>
    %7 = tpu.memref_squeeze %6 : memref<1x!tpu.dma_semaphore, #tpu.memory_space<semaphore_mem>> -> memref<!tpu.dma_semaphore, #tpu.memory_space<semaphore_mem>>
    tpu.enqueue_dma source(%arg14 : memref<128x512xbf16, #tpu.memory_space<any>>) target(%arg20 : memref<128x512xbf16, #tpu.memory_space<vmem>>) target_semaphore(%7 : memref<!tpu.dma_semaphore, #tpu.memory_space<semaphore_mem>>)
    %c4_i32 = arith.constant 4 : i32
    %8 = tpu.memref_slice %arg22[%c4_i32] : memref<5x!tpu.dma_semaphore, #tpu.memory_space<semaphore_mem>> -> memref<1x!tpu.dma_semaphore, #tpu.memory_space<semaphore_mem>>
    %9 = tpu.memref_squeeze %8 : memref<1x!tpu.dma_semaphore, #tpu.memory_space<semaphore_mem>> -> memref<!tpu.dma_semaphore, #tpu.memory_space<semaphore_mem>>
    tpu.enqueue_dma source(%arg15 : memref<512x512xbf16, #tpu.memory_space<any>>) target(%arg21 : memref<512x512xbf16, #tpu.memory_space<vmem>>) target_semaphore(%9 : memref<!tpu.dma_semaphore, #tpu.memory_space<semaphore_mem>>)
    %c0 = arith.constant 0 : index
    %c0_0 = arith.constant 0 : index
    %10 = vector.load %arg0[%c0, %c0_0] : memref<80x8xf32, #tpu.memory_space<vmem>>, vector<80x8xf32>
    %c0_1 = arith.constant 0 : index
    %c0_2 = arith.constant 0 : index
    %11 = vector.load %arg3[%c0_1, %c0_2] : memref<8x64xf32, #tpu.memory_space<vmem>>, vector<8x64xf32>
    %cst = arith.constant dense<0.000000e+00> : vector<80x64xf32>
    %12 = tpu.matmul %10, %11, %cst {dimension_numbers = #tpu.dot_dimension_numbers<[1], [0], [0], [1], [0, 0, 1, 1], [], []>} : vector<80x8xf32>, vector<8x64xf32>, vector<80x64xf32> -> vector<80x64xf32>
    %c0_3 = arith.constant 0 : index
    %c0_4 = arith.constant 0 : index
    %13 = vector.load %arg2[%c0_3, %c0_4] : memref<1x3968xf32, #tpu.memory_space<vmem>>, vector<1x64xf32>
    %14 = vector.broadcast %13 : vector<1x64xf32> to vector<80x64xf32>
    %15 = arith.addf %12, %14 : vector<80x64xf32>
    %cst_5 = arith.constant 0.000000e+00 : f32
    %16 = vector.broadcast %cst_5 : f32 to vector<80x64xf32>
    %17 = arith.maximumf %15, %16 : vector<80x64xf32>
    %c0_6 = arith.constant 0 : index
    %c0_7 = arith.constant 0 : index
    %18 = vector.load %arg4[%c0_6, %c0_7] : memref<64x16xf32, #tpu.memory_space<vmem>>, vector<64x16xf32>
    %cst_8 = arith.constant dense<0.000000e+00> : vector<80x16xf32>
    %19 = tpu.matmul %17, %18, %cst_8 {dimension_numbers = #tpu.dot_dimension_numbers<[1], [0], [0], [1], [0, 0, 1, 1], [], []>} : vector<80x64xf32>, vector<64x16xf32>, vector<80x16xf32> -> vector<80x16xf32>
    %c0_9 = arith.constant 0 : index
    %c128 = arith.constant 128 : index
    %20 = vector.load %arg2[%c0_9, %c128] : memref<1x3968xf32, #tpu.memory_space<vmem>>, vector<1x16xf32>
    %21 = vector.broadcast %20 : vector<1x16xf32> to vector<80x16xf32>
    %22 = arith.addf %19, %21 : vector<80x16xf32>
    %23 = vector.extract_strided_slice %22 {offsets = [0, 0], sizes = [16, 16], strides = [1, 1]} : vector<80x16xf32> to vector<16x16xf32>
    %24 = vector.extract_strided_slice %22 {offsets = [16, 0], sizes = [16, 16], strides = [1, 1]} : vector<80x16xf32> to vector<16x16xf32>
    %25 = arith.subf %24, %23 : vector<16x16xf32>
    %26 = vector.extract_strided_slice %22 {offsets = [32, 0], sizes = [16, 16], strides = [1, 1]} : vector<80x16xf32> to vector<16x16xf32>
    %27 = arith.subf %26, %23 : vector<16x16xf32>
    %28 = vector.extract_strided_slice %22 {offsets = [48, 0], sizes = [16, 16], strides = [1, 1]} : vector<80x16xf32> to vector<16x16xf32>
    %29 = arith.subf %28, %23 : vector<16x16xf32>
    %30 = vector.extract_strided_slice %22 {offsets = [64, 0], sizes = [16, 16], strides = [1, 1]} : vector<80x16xf32> to vector<16x16xf32>
    %31 = arith.subf %30, %23 : vector<16x16xf32>
    %32 = tpu.concatenate %25, %27, %29, %31 in 0 : vector<16x16xf32>, vector<16x16xf32>, vector<16x16xf32>, vector<16x16xf32> -> vector<64x16xf32>
    %c0_10 = arith.constant 0 : index
    %c0_11 = arith.constant 0 : index
    %33 = vector.load %arg5[%c0_10, %c0_11] : memref<16x128xf32, #tpu.memory_space<vmem>>, vector<16x128xf32>
    %cst_12 = arith.constant dense<0.000000e+00> : vector<64x128xf32>
    %34 = tpu.matmul %32, %33, %cst_12 {dimension_numbers = #tpu.dot_dimension_numbers<[1], [0], [0], [1], [0, 0, 1, 1], [], []>} : vector<64x16xf32>, vector<16x128xf32>, vector<64x128xf32> -> vector<64x128xf32>
    %c0_13 = arith.constant 0 : index
    %c256 = arith.constant 256 : index
    %35 = vector.load %arg2[%c0_13, %c256] : memref<1x3968xf32, #tpu.memory_space<vmem>>, vector<1x128xf32>
    %36 = vector.broadcast %35 : vector<1x128xf32> to vector<64x128xf32>
    %37 = arith.addf %34, %36 : vector<64x128xf32>
    %cst_14 = arith.constant 0.000000e+00 : f32
    %38 = vector.broadcast %cst_14 : f32 to vector<64x128xf32>
    %39 = arith.maximumf %37, %38 : vector<64x128xf32>
    %40 = arith.truncf %39 : vector<64x128xf32> to vector<64x128xbf16>
    %c0_15 = arith.constant 0 : index
    %c0_16 = arith.constant 0 : index
    %41 = vector.load %arg6[%c0_15, %c0_16] : memref<128x256xbf16, #tpu.memory_space<vmem>>, vector<128x256xbf16>
    %cst_17 = arith.constant dense<0.000000e+00> : vector<64x256xf32>
    %42 = tpu.matmul %40, %41, %cst_17 {dimension_numbers = #tpu.dot_dimension_numbers<[1], [0], [0], [1], [0, 0, 1, 1], [], []>} : vector<64x128xbf16>, vector<128x256xbf16>, vector<64x256xf32> -> vector<64x256xf32>
    %c0_18 = arith.constant 0 : index
    %c384 = arith.constant 384 : index
    %43 = vector.load %arg2[%c0_18, %c384] : memref<1x3968xf32, #tpu.memory_space<vmem>>, vector<1x256xf32>
    %44 = vector.broadcast %43 : vector<1x256xf32> to vector<64x256xf32>
    %45 = arith.addf %42, %44 : vector<64x256xf32>
    %cst_19 = arith.constant 0.000000e+00 : f32
    %46 = vector.broadcast %cst_19 : f32 to vector<64x256xf32>
    %47 = arith.maximumf %45, %46 : vector<64x256xf32>
    %48 = arith.truncf %47 : vector<64x256xf32> to vector<64x256xbf16>
    %c0_20 = arith.constant 0 : index
    %c0_21 = arith.constant 0 : index
    %49 = vector.load %arg7[%c0_20, %c0_21] : memref<256x128xbf16, #tpu.memory_space<vmem>>, vector<256x128xbf16>
    %cst_22 = arith.constant dense<0.000000e+00> : vector<64x128xf32>
    %50 = tpu.matmul %48, %49, %cst_22 {dimension_numbers = #tpu.dot_dimension_numbers<[1], [0], [0], [1], [0, 0, 1, 1], [], []>} : vector<64x256xbf16>, vector<256x128xbf16>, vector<64x128xf32> -> vector<64x128xf32>
    %c0_23 = arith.constant 0 : index
    %c640 = arith.constant 640 : index
    %51 = vector.load %arg2[%c0_23, %c640] : memref<1x3968xf32, #tpu.memory_space<vmem>>, vector<1x128xf32>
    %52 = vector.broadcast %51 : vector<1x128xf32> to vector<64x128xf32>
    %53 = arith.addf %50, %52 : vector<64x128xf32>
    %54 = vector.extract_strided_slice %10 {offsets = [0, 0], sizes = [16, 8], strides = [1, 1]} : vector<80x8xf32> to vector<16x8xf32>
    %c0_24 = arith.constant 0 : index
    %c0_25 = arith.constant 0 : index
    %55 = vector.load %arg8[%c0_24, %c0_25] : memref<8x128xf32, #tpu.memory_space<vmem>>, vector<8x128xf32>
    %cst_26 = arith.constant dense<0.000000e+00> : vector<16x128xf32>
    %56 = tpu.matmul %54, %55, %cst_26 {dimension_numbers = #tpu.dot_dimension_numbers<[1], [0], [0], [1], [0, 0, 1, 1], [], []>} : vector<16x8xf32>, vector<8x128xf32>, vector<16x128xf32> -> vector<16x128xf32>
    %c0_27 = arith.constant 0 : index
    %c2560 = arith.constant 2560 : index
    %57 = vector.load %arg2[%c0_27, %c2560] : memref<1x3968xf32, #tpu.memory_space<vmem>>, vector<1x128xf32>
    %58 = vector.broadcast %57 : vector<1x128xf32> to vector<16x128xf32>
    %59 = arith.addf %56, %58 : vector<16x128xf32>
    %cst_28 = arith.constant 0.000000e+00 : f32
    %60 = vector.broadcast %cst_28 : f32 to vector<16x128xf32>
    %61 = arith.maximumf %59, %60 : vector<16x128xf32>
    %c0_29 = arith.constant 0 : index
    %c0_30 = arith.constant 0 : index
    %62 = vector.load %arg9[%c0_29, %c0_30] : memref<128x128xf32, #tpu.memory_space<vmem>>, vector<128x128xf32>
    %cst_31 = arith.constant dense<0.000000e+00> : vector<16x128xf32>
    %63 = tpu.matmul %61, %62, %cst_31 {dimension_numbers = #tpu.dot_dimension_numbers<[1], [0], [0], [1], [0, 0, 1, 1], [], []>} : vector<16x128xf32>, vector<128x128xf32>, vector<16x128xf32> -> vector<16x128xf32>
    %c0_32 = arith.constant 0 : index
    %c2688 = arith.constant 2688 : index
    %64 = vector.load %arg2[%c0_32, %c2688] : memref<1x3968xf32, #tpu.memory_space<vmem>>, vector<1x128xf32>
    %65 = vector.broadcast %64 : vector<1x128xf32> to vector<16x128xf32>
    %66 = arith.addf %63, %65 : vector<16x128xf32>
    %c0_i32_33 = arith.constant 0 : i32
    %67 = tpu.memref_slice %arg22[%c0_i32_33] : memref<5x!tpu.dma_semaphore, #tpu.memory_space<semaphore_mem>> -> memref<1x!tpu.dma_semaphore, #tpu.memory_space<semaphore_mem>>
    %68 = tpu.memref_squeeze %67 : memref<1x!tpu.dma_semaphore, #tpu.memory_space<semaphore_mem>> -> memref<!tpu.dma_semaphore, #tpu.memory_space<semaphore_mem>>
    tpu.wait_dma2 semaphore(%68 : memref<!tpu.dma_semaphore, #tpu.memory_space<semaphore_mem>>) src(%arg11 : memref<512x512xbf16, #tpu.memory_space<any>>) dst(%arg17 : memref<512x512xbf16, #tpu.memory_space<vmem>>)
    %69 = arith.truncf %53 : vector<64x128xf32> to vector<64x128xbf16>
    %70 = vector.extract_strided_slice %69 {offsets = [0, 0], sizes = [16, 128], strides = [1, 1]} : vector<64x128xbf16> to vector<16x128xbf16>
    %c0_34 = arith.constant 0 : index
    %c0_35 = arith.constant 0 : index
    %71 = vector.load %arg17[%c0_34, %c0_35] : memref<512x512xbf16, #tpu.memory_space<vmem>>, vector<128x512xbf16>
    %cst_36 = arith.constant dense<0.000000e+00> : vector<16x512xf32>
    %72 = tpu.matmul %70, %71, %cst_36 {dimension_numbers = #tpu.dot_dimension_numbers<[1], [0], [0], [1], [0, 0, 1, 1], [], []>} : vector<16x128xbf16>, vector<128x512xbf16>, vector<16x512xf32> -> vector<16x512xf32>
    %73 = vector.extract_strided_slice %69 {offsets = [16, 0], sizes = [16, 128], strides = [1, 1]} : vector<64x128xbf16> to vector<16x128xbf16>
    %c128_37 = arith.constant 128 : index
    %c0_38 = arith.constant 0 : index
    %74 = vector.load %arg17[%c128_37, %c0_38] : memref<512x512xbf16, #tpu.memory_space<vmem>>, vector<128x512xbf16>
    %cst_39 = arith.constant dense<0.000000e+00> : vector<16x512xf32>
    %75 = tpu.matmul %73, %74, %cst_39 {dimension_numbers = #tpu.dot_dimension_numbers<[1], [0], [0], [1], [0, 0, 1, 1], [], []>} : vector<16x128xbf16>, vector<128x512xbf16>, vector<16x512xf32> -> vector<16x512xf32>
    %76 = arith.addf %72, %75 : vector<16x512xf32>
    %77 = vector.extract_strided_slice %69 {offsets = [32, 0], sizes = [16, 128], strides = [1, 1]} : vector<64x128xbf16> to vector<16x128xbf16>
    %c256_40 = arith.constant 256 : index
    %c0_41 = arith.constant 0 : index
    %78 = vector.load %arg17[%c256_40, %c0_41] : memref<512x512xbf16, #tpu.memory_space<vmem>>, vector<128x512xbf16>
    %cst_42 = arith.constant dense<0.000000e+00> : vector<16x512xf32>
    %79 = tpu.matmul %77, %78, %cst_42 {dimension_numbers = #tpu.dot_dimension_numbers<[1], [0], [0], [1], [0, 0, 1, 1], [], []>} : vector<16x128xbf16>, vector<128x512xbf16>, vector<16x512xf32> -> vector<16x512xf32>
    %80 = arith.addf %76, %79 : vector<16x512xf32>
    %81 = vector.extract_strided_slice %69 {offsets = [48, 0], sizes = [16, 128], strides = [1, 1]} : vector<64x128xbf16> to vector<16x128xbf16>
    %c384_43 = arith.constant 384 : index
    %c0_44 = arith.constant 0 : index
    %82 = vector.load %arg17[%c384_43, %c0_44] : memref<512x512xbf16, #tpu.memory_space<vmem>>, vector<128x512xbf16>
    %cst_45 = arith.constant dense<0.000000e+00> : vector<16x512xf32>
    %83 = tpu.matmul %81, %82, %cst_45 {dimension_numbers = #tpu.dot_dimension_numbers<[1], [0], [0], [1], [0, 0, 1, 1], [], []>} : vector<16x128xbf16>, vector<128x512xbf16>, vector<16x512xf32> -> vector<16x512xf32>
    %84 = arith.addf %80, %83 : vector<16x512xf32>
    %c0_46 = arith.constant 0 : index
    %c768 = arith.constant 768 : index
    %85 = vector.load %arg2[%c0_46, %c768] : memref<1x3968xf32, #tpu.memory_space<vmem>>, vector<1x512xf32>
    %86 = vector.broadcast %85 : vector<1x512xf32> to vector<16x512xf32>
    %87 = arith.addf %84, %86 : vector<16x512xf32>
    %cst_47 = arith.constant dense<0.000000e+00> : vector<16xf32>
    %88 = vector.multi_reduction <add>, %87, %cst_47 [1] : vector<16x512xf32> to vector<16xf32>
    %89 = vector.shape_cast %88 : vector<16xf32> to vector<16x1xf32>
    %cst_48 = arith.constant 5.120000e+02 : f32
    %90 = vector.broadcast %cst_48 : f32 to vector<16x1xf32>
    %91 = arith.divf %89, %90 : vector<16x1xf32>
    %92 = vector.broadcast %91 : vector<16x1xf32> to vector<16x512xf32>
    %93 = arith.subf %87, %92 : vector<16x512xf32>
    %94 = vector.broadcast %91 : vector<16x1xf32> to vector<16x512xf32>
    %95 = arith.subf %87, %94 : vector<16x512xf32>
    %96 = arith.mulf %93, %95 : vector<16x512xf32>
    %cst_49 = arith.constant dense<0.000000e+00> : vector<16xf32>
    %97 = vector.multi_reduction <add>, %96, %cst_49 [1] : vector<16x512xf32> to vector<16xf32>
    %98 = vector.shape_cast %97 : vector<16xf32> to vector<16x1xf32>
    %cst_50 = arith.constant 5.120000e+02 : f32
    %99 = vector.broadcast %cst_50 : f32 to vector<16x1xf32>
    %100 = arith.divf %98, %99 : vector<16x1xf32>
    %101 = vector.broadcast %91 : vector<16x1xf32> to vector<16x512xf32>
    %102 = arith.subf %87, %101 : vector<16x512xf32>
    %cst_51 = arith.constant 9.99999974E-6 : f32
    %103 = vector.broadcast %cst_51 : f32 to vector<16x1xf32>
    %104 = arith.addf %100, %103 : vector<16x1xf32>
    %105 = math.rsqrt %104 : vector<16x1xf32>
    %106 = vector.broadcast %105 : vector<16x1xf32> to vector<16x512xf32>
    %107 = arith.mulf %102, %106 : vector<16x512xf32>
    %c0_52 = arith.constant 0 : index
    %c1280 = arith.constant 1280 : index
    %108 = vector.load %arg2[%c0_52, %c1280] : memref<1x3968xf32, #tpu.memory_space<vmem>>, vector<1x512xf32>
    %109 = vector.broadcast %108 : vector<1x512xf32> to vector<16x512xf32>
    %110 = arith.mulf %107, %109 : vector<16x512xf32>
    %c0_53 = arith.constant 0 : index
    %c1792 = arith.constant 1792 : index
    %111 = vector.load %arg2[%c0_53, %c1792] : memref<1x3968xf32, #tpu.memory_space<vmem>>, vector<1x512xf32>
    %112 = vector.broadcast %111 : vector<1x512xf32> to vector<16x512xf32>
    %113 = arith.addf %110, %112 : vector<16x512xf32>
    %cst_54 = arith.constant 0.000000e+00 : f32
    %114 = vector.broadcast %cst_54 : f32 to vector<16x512xf32>
    %115 = arith.maximumf %113, %114 : vector<16x512xf32>
    %c1_i32_55 = arith.constant 1 : i32
    %116 = tpu.memref_slice %arg22[%c1_i32_55] : memref<5x!tpu.dma_semaphore, #tpu.memory_space<semaphore_mem>> -> memref<1x!tpu.dma_semaphore, #tpu.memory_space<semaphore_mem>>
    %117 = tpu.memref_squeeze %116 : memref<1x!tpu.dma_semaphore, #tpu.memory_space<semaphore_mem>> -> memref<!tpu.dma_semaphore, #tpu.memory_space<semaphore_mem>>
    tpu.wait_dma2 semaphore(%117 : memref<!tpu.dma_semaphore, #tpu.memory_space<semaphore_mem>>) src(%arg12 : memref<512x256xbf16, #tpu.memory_space<any>>) dst(%arg18 : memref<512x256xbf16, #tpu.memory_space<vmem>>)
    %118 = arith.truncf %115 : vector<16x512xf32> to vector<16x512xbf16>
    %c0_56 = arith.constant 0 : index
    %c0_57 = arith.constant 0 : index
    %119 = vector.load %arg18[%c0_56, %c0_57] : memref<512x256xbf16, #tpu.memory_space<vmem>>, vector<512x256xbf16>
    %cst_58 = arith.constant dense<0.000000e+00> : vector<16x256xf32>
    %120 = tpu.matmul %118, %119, %cst_58 {dimension_numbers = #tpu.dot_dimension_numbers<[1], [0], [0], [1], [0, 0, 1, 1], [], []>} : vector<16x512xbf16>, vector<512x256xbf16>, vector<16x256xf32> -> vector<16x256xf32>
    %c0_59 = arith.constant 0 : index
    %c2304 = arith.constant 2304 : index
    %121 = vector.load %arg2[%c0_59, %c2304] : memref<1x3968xf32, #tpu.memory_space<vmem>>, vector<1x256xf32>
    %122 = vector.broadcast %121 : vector<1x256xf32> to vector<16x256xf32>
    %123 = arith.addf %120, %122 : vector<16x256xf32>
    %c2_i32_60 = arith.constant 2 : i32
    %124 = tpu.memref_slice %arg22[%c2_i32_60] : memref<5x!tpu.dma_semaphore, #tpu.memory_space<semaphore_mem>> -> memref<1x!tpu.dma_semaphore, #tpu.memory_space<semaphore_mem>>
    %125 = tpu.memref_squeeze %124 : memref<1x!tpu.dma_semaphore, #tpu.memory_space<semaphore_mem>> -> memref<!tpu.dma_semaphore, #tpu.memory_space<semaphore_mem>>
    tpu.wait_dma2 semaphore(%125 : memref<!tpu.dma_semaphore, #tpu.memory_space<semaphore_mem>>) src(%arg13 : memref<256x512xbf16, #tpu.memory_space<any>>) dst(%arg19 : memref<256x512xbf16, #tpu.memory_space<vmem>>)
    %126 = arith.truncf %123 : vector<16x256xf32> to vector<16x256xbf16>
    %c0_61 = arith.constant 0 : index
    %c0_62 = arith.constant 0 : index
    %127 = vector.load %arg19[%c0_61, %c0_62] : memref<256x512xbf16, #tpu.memory_space<vmem>>, vector<256x512xbf16>
    %cst_63 = arith.constant dense<0.000000e+00> : vector<16x512xf32>
    %128 = tpu.matmul %126, %127, %cst_63 {dimension_numbers = #tpu.dot_dimension_numbers<[1], [0], [0], [1], [0, 0, 1, 1], [], []>} : vector<16x256xbf16>, vector<256x512xbf16>, vector<16x512xf32> -> vector<16x512xf32>
    %c3_i32_64 = arith.constant 3 : i32
    %129 = tpu.memref_slice %arg22[%c3_i32_64] : memref<5x!tpu.dma_semaphore, #tpu.memory_space<semaphore_mem>> -> memref<1x!tpu.dma_semaphore, #tpu.memory_space<semaphore_mem>>
    %130 = tpu.memref_squeeze %129 : memref<1x!tpu.dma_semaphore, #tpu.memory_space<semaphore_mem>> -> memref<!tpu.dma_semaphore, #tpu.memory_space<semaphore_mem>>
    tpu.wait_dma2 semaphore(%130 : memref<!tpu.dma_semaphore, #tpu.memory_space<semaphore_mem>>) src(%arg14 : memref<128x512xbf16, #tpu.memory_space<any>>) dst(%arg20 : memref<128x512xbf16, #tpu.memory_space<vmem>>)
    %131 = arith.truncf %66 : vector<16x128xf32> to vector<16x128xbf16>
    %c0_65 = arith.constant 0 : index
    %c0_66 = arith.constant 0 : index
    %132 = vector.load %arg20[%c0_65, %c0_66] : memref<128x512xbf16, #tpu.memory_space<vmem>>, vector<128x512xbf16>
    %cst_67 = arith.constant dense<0.000000e+00> : vector<16x512xf32>
    %133 = tpu.matmul %131, %132, %cst_67 {dimension_numbers = #tpu.dot_dimension_numbers<[1], [0], [0], [1], [0, 0, 1, 1], [], []>} : vector<16x128xbf16>, vector<128x512xbf16>, vector<16x512xf32> -> vector<16x512xf32>
    %c0_68 = arith.constant 0 : index
    %c0_69 = arith.constant 0 : index
    %134 = vector.load %arg1[%c0_68, %c0_69] : memref<16x16xf32, #tpu.memory_space<vmem>>, vector<16x16xf32>
    %cst_70 = arith.constant dense<0.000000e+00> : vector<16x512xf32>
    %135 = tpu.matmul %134, %128, %cst_70 {dimension_numbers = #tpu.dot_dimension_numbers<[1], [0], [0], [1], [0, 0, 1, 1], [], []>} : vector<16x16xf32>, vector<16x512xf32>, vector<16x512xf32> -> vector<16x512xf32>
    %c0_71 = arith.constant 0 : index
    %c2816 = arith.constant 2816 : index
    %136 = vector.load %arg2[%c0_71, %c2816] : memref<1x3968xf32, #tpu.memory_space<vmem>>, vector<1x512xf32>
    %137 = arith.addf %128, %133 : vector<16x512xf32>
    %138 = vector.broadcast %136 : vector<1x512xf32> to vector<16x512xf32>
    %139 = arith.addf %137, %138 : vector<16x512xf32>
    %cst_72 = arith.constant 0.000000e+00 : f32
    %140 = vector.broadcast %cst_72 : f32 to vector<16x512xf32>
    %141 = arith.maximumf %139, %140 : vector<16x512xf32>
    %142 = arith.addf %135, %133 : vector<16x512xf32>
    %143 = vector.broadcast %136 : vector<1x512xf32> to vector<16x512xf32>
    %144 = arith.addf %142, %143 : vector<16x512xf32>
    %cst_73 = arith.constant 0.000000e+00 : f32
    %145 = vector.broadcast %cst_73 : f32 to vector<16x512xf32>
    %146 = arith.maximumf %144, %145 : vector<16x512xf32>
    %c4_i32_74 = arith.constant 4 : i32
    %147 = tpu.memref_slice %arg22[%c4_i32_74] : memref<5x!tpu.dma_semaphore, #tpu.memory_space<semaphore_mem>> -> memref<1x!tpu.dma_semaphore, #tpu.memory_space<semaphore_mem>>
    %148 = tpu.memref_squeeze %147 : memref<1x!tpu.dma_semaphore, #tpu.memory_space<semaphore_mem>> -> memref<!tpu.dma_semaphore, #tpu.memory_space<semaphore_mem>>
    tpu.wait_dma2 semaphore(%148 : memref<!tpu.dma_semaphore, #tpu.memory_space<semaphore_mem>>) src(%arg15 : memref<512x512xbf16, #tpu.memory_space<any>>) dst(%arg21 : memref<512x512xbf16, #tpu.memory_space<vmem>>)
    %149 = tpu.concatenate %141, %146 in 0 : vector<16x512xf32>, vector<16x512xf32> -> vector<32x512xf32>
    %150 = arith.truncf %149 : vector<32x512xf32> to vector<32x512xbf16>
    %c0_75 = arith.constant 0 : index
    %c0_76 = arith.constant 0 : index
    %151 = vector.load %arg21[%c0_75, %c0_76] : memref<512x512xbf16, #tpu.memory_space<vmem>>, vector<512x512xbf16>
    %cst_77 = arith.constant dense<0.000000e+00> : vector<32x512xf32>
    %152 = tpu.matmul %150, %151, %cst_77 {dimension_numbers = #tpu.dot_dimension_numbers<[1], [0], [0], [1], [0, 0, 1, 1], [], []>} : vector<32x512xbf16>, vector<512x512xbf16>, vector<32x512xf32> -> vector<32x512xf32>
    %c0_78 = arith.constant 0 : index
    %c3328 = arith.constant 3328 : index
    %153 = vector.load %arg2[%c0_78, %c3328] : memref<1x3968xf32, #tpu.memory_space<vmem>>, vector<1x512xf32>
    %154 = vector.broadcast %153 : vector<1x512xf32> to vector<32x512xf32>
    %155 = arith.addf %152, %154 : vector<32x512xf32>
    %cst_79 = arith.constant 0.000000e+00 : f32
    %156 = vector.broadcast %cst_79 : f32 to vector<32x512xf32>
    %157 = arith.maximumf %155, %156 : vector<32x512xf32>
    %c0_80 = arith.constant 0 : index
    %c0_81 = arith.constant 0 : index
    %158 = vector.load %arg10[%c0_80, %c0_81] : memref<1x512xf32, #tpu.memory_space<vmem>>, vector<1x512xf32>
    %159 = vector.broadcast %158 : vector<1x512xf32> to vector<32x512xf32>
    %160 = arith.mulf %157, %159 : vector<32x512xf32>
    %cst_82 = arith.constant dense<0.000000e+00> : vector<32xf32>
    %161 = vector.multi_reduction <add>, %160, %cst_82 [1] : vector<32x512xf32> to vector<32xf32>
    %162 = vector.shape_cast %161 : vector<32xf32> to vector<32x1xf32>
    %c0_83 = arith.constant 0 : index
    %c3840 = arith.constant 3840 : index
    %163 = vector.load %arg2[%c0_83, %c3840] : memref<1x3968xf32, #tpu.memory_space<vmem>>, vector<1x1xf32>
    %164 = vector.broadcast %163 : vector<1x1xf32> to vector<32x1xf32>
    %165 = arith.addf %162, %164 : vector<32x1xf32>
    %166 = vector.extract_strided_slice %165 {offsets = [0, 0], sizes = [16, 1], strides = [1, 1]} : vector<32x1xf32> to vector<16x1xf32>
    %167 = vector.extract_strided_slice %165 {offsets = [16, 0], sizes = [16, 1], strides = [1, 1]} : vector<32x1xf32> to vector<16x1xf32>
    %168 = tpu.iota {dimensions = array<i32: 0>} : vector<16x1xi32>
    %c10_i32 = arith.constant 10 : i32
    %169 = vector.broadcast %c10_i32 : i32 to vector<16x1xi32>
    %170 = arith.cmpi slt, %168, %169 : vector<16x1xi32>
    %cst_84 = arith.constant 0.000000e+00 : f32
    %171 = vector.broadcast %cst_84 : f32 to vector<16x1xf32>
    %172 = arith.select %170, %166, %171 : vector<16x1xi1>, vector<16x1xf32>
    %173 = vector.shape_cast %172 : vector<16x1xf32> to vector<1x16x1xf32>
    %cst_85 = arith.constant dense<0.000000e+00> : vector<1xf32>
    %174 = vector.multi_reduction <add>, %173, %cst_85 [1, 2] : vector<1x16x1xf32> to vector<1xf32>
    %175 = vector.shape_cast %174 : vector<1xf32> to vector<1x1x1xf32>
    %176 = vector.extract %175[0, 0, 0] : f32 from vector<1x1x1xf32>
    %cst_86 = arith.constant 1.000000e+01 : f32
    %177 = arith.divf %176, %cst_86 : f32
    %cst_87 = arith.constant -1.000000e+30 : f32
    %178 = vector.broadcast %cst_87 : f32 to vector<16x1xf32>
    %179 = arith.select %170, %167, %178 : vector<16x1xi1>, vector<16x1xf32>
    %180 = vector.shape_cast %179 : vector<16x1xf32> to vector<1x16x1xf32>
    %cst_88 = arith.constant dense<0xFF800000> : vector<1xf32>
    %181 = vector.multi_reduction <maximumf>, %180, %cst_88 [1, 2] : vector<1x16x1xf32> to vector<1xf32>
    %182 = vector.shape_cast %181 : vector<1xf32> to vector<1x1x1xf32>
    %183 = vector.extract %182[0, 0, 0] : f32 from vector<1x1x1xf32>
    %184 = vector.broadcast %183 : f32 to vector<16x1xf32>
    %185 = arith.subf %179, %184 : vector<16x1xf32>
    %186 = math.exp %185 : vector<16x1xf32>
    %187 = vector.shape_cast %186 : vector<16x1xf32> to vector<1x16x1xf32>
    %cst_89 = arith.constant dense<0.000000e+00> : vector<1xf32>
    %188 = vector.multi_reduction <add>, %187, %cst_89 [1, 2] : vector<1x16x1xf32> to vector<1xf32>
    %189 = vector.shape_cast %188 : vector<1xf32> to vector<1x1x1xf32>
    %190 = vector.extract %189[0, 0, 0] : f32 from vector<1x1x1xf32>
    %cst_90 = arith.constant 1.000000e+01 : f32
    %191 = arith.divf %190, %cst_90 : f32
    %192 = math.log %191 : f32
    %193 = arith.addf %183, %192 : f32
    %194 = arith.subf %177, %193 : f32
    %cst_91 = arith.constant 0.000000e+00 : f32
    %195 = arith.maximumf %194, %cst_91 : f32
    %196 = tpu.iota {dimensions = array<i32: 1>} : vector<1x128xi32>
    %c0_i32_92 = arith.constant 0 : i32
    %197 = vector.broadcast %c0_i32_92 : i32 to vector<1x128xi32>
    %198 = arith.cmpi eq, %196, %197 : vector<1x128xi32>
    %c1_i32_93 = arith.constant 1 : i32
    %199 = vector.broadcast %c1_i32_93 : i32 to vector<1x128xi32>
    %200 = arith.cmpi eq, %196, %199 : vector<1x128xi32>
    %c2_i32_94 = arith.constant 2 : i32
    %201 = vector.broadcast %c2_i32_94 : i32 to vector<1x128xi32>
    %202 = arith.cmpi eq, %196, %201 : vector<1x128xi32>
    %c3_i32_95 = arith.constant 3 : i32
    %203 = vector.broadcast %c3_i32_95 : i32 to vector<1x128xi32>
    %204 = arith.cmpi eq, %196, %203 : vector<1x128xi32>
    %cst_96 = arith.constant 0.000000e+00 : f32
    %205 = vector.broadcast %193 : f32 to vector<1x128xf32>
    %206 = vector.broadcast %cst_96 : f32 to vector<1x128xf32>
    %207 = arith.select %204, %205, %206 : vector<1x128xi1>, vector<1x128xf32>
    %208 = vector.broadcast %177 : f32 to vector<1x128xf32>
    %209 = arith.select %202, %208, %207 : vector<1x128xi1>, vector<1x128xf32>
    %210 = vector.broadcast %194 : f32 to vector<1x128xf32>
    %211 = arith.select %200, %210, %209 : vector<1x128xi1>, vector<1x128xf32>
    %212 = vector.broadcast %195 : f32 to vector<1x128xf32>
    %213 = arith.select %198, %212, %211 : vector<1x128xi1>, vector<1x128xf32>
    %c0_97 = arith.constant 0 : index
    %c0_98 = arith.constant 0 : index
    %214 = vector.load %arg16[%c0_97, %c0_98] : memref<1x128xf32, #tpu.memory_space<vmem>>, vector<1x128xf32>
    tpu.vector_store %arg16[%c0_97, %c0_98], %213 {strides = array<i32>} : memref<1x128xf32, #tpu.memory_space<vmem>>, vector<1x128xf32>,
    return
  }
}

</mosaic_0001>

<llo_original>
// kernel: forward.5
$region0: #{forward.5}
  #allocation0 [shape = 'u32[]', space=smem, size = 0x4, offset = 0x4, fixed_abs, tag = 'smem constant byte address 0x4 - core index']
  #allocation1 [shape = 'u32[144,128]{1,0:T(1,128)}', space=vmem, size = 0x12000, scoped, tag = 'internal scratch']
  #allocation2 [shape = 'bf16[512,512]{1,0:T(16,128)(2,1)}', space=vmem, size = 0x80000, scoped, tag = 'scratch operand']
  #allocation3 [shape = 'bf16[512,256]{1,0:T(16,128)(2,1)}', space=vmem, size = 0x40000, scoped, tag = 'scratch operand']
  #allocation4 [shape = 'bf16[256,512]{1,0:T(16,128)(2,1)}', space=vmem, size = 0x40000, scoped, tag = 'scratch operand']
  #allocation5 [shape = 'bf16[128,512]{1,0:T(16,128)(2,1)}', space=vmem, size = 0x20000, scoped, tag = 'scratch operand']
  #allocation6 [shape = 'bf16[512,512]{1,0:T(16,128)(2,1)}', space=vmem, size = 0x80000, scoped, tag = 'scratch operand']
  #allocation7 [shape = 's32[5]{0}', space=sflag, size = 0x14, scoped, tag = 'scratch operand']
  #allocation12 [shape = 's32[]', space=sflag, size = 0x4, offset = 0, fixed_abs, tag = 'sflag constant byte address 0x0 - dummy sync flag']
  #allocation13 [shape = 's32[]', space=sflag, size = 0x4, offset = 0, fixed_abs, tag = 'sflag constant byte address 0x0 - dummy sync flag']
  #allocation15 [shape = 's32[]', space=sflag, size = 0x4, offset = 0, fixed_abs, tag = 'sflag constant byte address 0x0 - dummy sync flag']
  #allocation17 [shape = 's32[]', space=sflag, size = 0x4, offset = 0, fixed_abs, tag = 'sflag constant byte address 0x0 - dummy sync flag']
  #allocation18 [shape = 's32[]', space=sflag, size = 0x4, offset = 0, fixed_abs, tag = 'sflag constant byte address 0x0 - dummy sync flag']
  %s0 = inlined_call_operand.vmem [shape: f32[80,8], index: 0, kind: input, shape index: {}]
  %s1 = inlined_call_operand.vmem [shape: f32[16,16], index: 1, kind: input, shape index: {}]
  %s2 = inlined_call_operand.vmem [shape: f32[1,3968], index: 2, kind: input, shape index: {}]
  %s3 = inlined_call_operand.vmem [shape: f32[8,64], index: 3, kind: input, shape index: {}]
  %s4 = inlined_call_operand.vmem [shape: f32[64,16], index: 4, kind: input, shape index: {}]
  %s5 = inlined_call_operand.vmem [shape: f32[16,128], index: 5, kind: input, shape index: {}]
  %s6 = inlined_call_operand.vmem [shape: bf16[128,256], index: 6, kind: input, shape index: {}]
  %s7 = inlined_call_operand.hbm [shape: bf16[256,128], index: 7, kind: input, shape index: {}]
  %s8 = inlined_call_operand.vmem [shape: f32[8,128], index: 8, kind: input, shape index: {}]
  %s9 = inlined_call_operand.hbm [shape: f32[128,128], index: 9, kind: input, shape index: {}]
  %s10 = inlined_call_operand.vmem [shape: f32[1,512], index: 10, kind: input, shape index: {}]
  %s11 = inlined_call_operand.vmem [shape: bf16[512,512], index: 11, kind: input, shape index: {}]
  %s12 = inlined_call_operand.hbm [shape: bf16[512,256], index: 12, kind: input, shape index: {}]
  %s13 = inlined_call_operand.hbm [shape: bf16[256,512], index: 13, kind: input, shape index: {}]
  %s14 = inlined_call_operand.vmem [shape: bf16[128,512], index: 14, kind: input, shape index: {}]
  %s15 = inlined_call_operand.hbm [shape: bf16[512,512], index: 15, kind: input, shape index: {}]
  %s16 = inlined_call_operand.vmem [shape: f32[1,128], index: 16, kind: output, shape index: {}]
  %s17 = sld [smem:[#allocation0]]
  $region136: #{forward.5} parent=0
    _
  %s19 = ssub.s32 1, %s17
  %s20 = scalar_select 0, %s19, %s17
  $region1: #{forward.5} parent=0
    #allocation8 [shape = 'u8[65536]{0}', space=vmem, size = 0x10000, scoped, tag = 'input window, operand 7, single buffered']
    #allocation9 [shape = 's32[1]{0}', space=sflag, size = 0x4, scoped, tag = 'scoped memory for forward.5']
    #allocation10 [shape = 'u8[65536]{0}', space=vmem, size = 0x10000, scoped, tag = 'input window, operand 9, single buffered']
    #allocation11 [shape = 's32[1]{0}', space=sflag, size = 0x4, scoped, tag = 'scoped memory for forward.5']
    #allocation14 [shape = 'u32[9]{0}', space=smem, size = 0x24, scoped, tag = 'DMA stride descriptor']
    #allocation16 [shape = 'u32[9]{0}', space=smem, size = 0x24, scoped, tag = 'DMA stride descriptor']
    #allocation19 [shape = 'u32[9]{0}', space=smem, size = 0x24, scoped, tag = 'DMA stride descriptor']
    %21 = vsyncpa [#allocation9], 0
    %22 = vsyncpa [#allocation11], 0
    // Predicated region
    $region2: #{forward.5} parent=1 // pred_check
      _
    $region3: #{forward.5} parent=1 // pred_check_branch
      %24 = sbr.rel (0) target = $region5
    $region4: #{forward.5} parent=1 // pred_region
      _
    $region5: #{forward.5} parent=1 // pred_fallthru
      _
    // Predicated region
    $region6: #{forward.5} parent=1 // pred_check
      _
    $region7: #{forward.5} parent=1 // pred_check_branch
      %26 = sbr.rel (0) target = $region9
    $region8: #{forward.5} parent=1 // pred_region
      _
    $region9: #{forward.5} parent=1 // pred_fallthru
      _
    // Predicated region
    $region10: #{forward.5} parent=1 // pred_check
      _
    $region11: #{forward.5} parent=1 // pred_check_branch
      %28 = sbr.rel (0) target = $region13
    $region12: #{forward.5} parent=1 // pred_region
      _
    $region13: #{forward.5} parent=1 // pred_fallthru
      _
    // Predicated region
    $region14: #{forward.5} parent=1 // pred_check
      _
    $region15: #{forward.5} parent=1 // pred_check_branch
      %30 = sbr.rel (0) target = $region17
    $region16: #{forward.5} parent=1 // pred_region
      _
    $region17: #{forward.5} parent=1 // pred_fallthru
      _
    // Predicated region
    $region18: #{forward.5} parent=1 // pred_check
      _
    $region19: #{forward.5} parent=1 // pred_check_branch
      %32 = sbr.rel (0) target = $region21
    $region20: #{forward.5} parent=1 // pred_region
      _
    $region21: #{forward.5} parent=1 // pred_fallthru
      _
    // Predicated region
    $region22: #{forward.5} parent=1 // pred_check
      _
    $region23: #{forward.5} parent=1 // pred_check_branch
      %34 = sbr.rel (0) target = $region25
    $region24: #{forward.5} parent=1 // pred_region
      _
    $region25: #{forward.5} parent=1 // pred_fallthru
      _
    // Predicated region
    $region26: #{forward.5} parent=1 // pred_check
      _
    $region27: #{forward.5} parent=1 // pred_check_branch
      %36 = sbr.rel (0) target = $region29
    $region28: #{forward.5} parent=1 // pred_region
      _
    $region29: #{forward.5} parent=1 // pred_fallthru
      _
    // Predicated region
    $region30: #{forward.5} parent=1 // pred_check
      _
    $region31: #{forward.5} parent=1 // pred_check_branch
      %38 = sbr.rel (0) target = $region33
    $region32: #{forward.5} parent=1 // pred_region
      %s40 = ssub.s32 2048, 2048
      %41 = vsyncadd [#allocation9], %s40
      %s42 = sshll.u32 [#allocation8], 4
      %s43 = int_to_ptr.vmem [resolvable:$true] %s42
      %48 = dma.hbm_to_vmem [thread:$0]  %s7, 2048, %s43, [#allocation9], 64, 64, 4
    $region33: #{forward.5} parent=1 // pred_fallthru
      _
    // Predicated region
    $region34: #{forward.5} parent=1 // pred_check
      _
    $region35: #{forward.5} parent=1 // pred_check_branch
      %50 = sbr.rel (0) target = $region37
    $region36: #{forward.5} parent=1 // pred_region
      _
    $region37: #{forward.5} parent=1 // pred_fallthru
      _
    // Predicated region
    $region38: #{forward.5} parent=1 // pred_check
      _
    $region39: #{forward.5} parent=1 // pred_check_branch
      %52 = sbr.rel (0) target = $region41
    $region40: #{forward.5} parent=1 // pred_region
      %s54 = ssub.s32 2048, 2048
      %55 = vsyncadd [#allocation11], %s54
      %s56 = sshll.u32 [#allocation10], 4
      %s57 = int_to_ptr.vmem [resolvable:$true] %s56
      %62 = dma.hbm_to_vmem [thread:$0]  %s9, 2048, %s57, [#allocation11], 128, 128, 8
    $region41: #{forward.5} parent=1 // pred_fallthru
      _
    // Predicated region
    $region42: #{forward.5} parent=1 // pred_check
      _
    $region43: #{forward.5} parent=1 // pred_check_branch
      %64 = sbr.rel (0) target = $region45
    $region44: #{forward.5} parent=1 // pred_region
      _
    $region45: #{forward.5} parent=1 // pred_fallthru
      _
    // Predicated region
    $region46: #{forward.5} parent=1 // pred_check
      _
    $region47: #{forward.5} parent=1 // pred_check_branch
      %66 = sbr.rel (0) target = $region49
    $region48: #{forward.5} parent=1 // pred_region
      %67 = dma.done [#allocation9], 2048
    $region49: #{forward.5} parent=1 // pred_fallthru
      _
    // Predicated region
    $region50: #{forward.5} parent=1 // pred_check
      _
    $region51: #{forward.5} parent=1 // pred_check_branch
      %69 = sbr.rel (0) target = $region53
    $region52: #{forward.5} parent=1 // pred_region
      %70 = dma.done [#allocation11], 2048
    $region53: #{forward.5} parent=1 // pred_fallthru
      _
    %p73 = scmp.lt.u32.totalorder 4, 8
    %p74 = pneg %p73
    // Predicated region
    $region54: #{forward.5} parent=1 // pred_check
      _
    $region55: #{forward.5} parent=1 // pred_check_branch
      %76 = sbr.rel (%p73) target = $region57
    $region56: #{forward.5} parent=1 // pred_region
      %s601 = sand.u32 4, 7
      %p602 = scmp.eq.s32.totalorder %s601, 0
      %p603 = pneg %p602
      // Predicated region
      $region69: #{forward.5} parent=56 // pred_check
        _
      $region70: #{forward.5} parent=56 // pred_check_branch
        %605 = sbr.rel (%p602) target = $region72
      $region71: #{forward.5} parent=56 // pred_region
        %s606 = sand.u32 4, 7
        %s607 = ssub.s32 4, %s606
        %s608 = scalar_lea.vmem %s11, %s607
        %s609 = ssub.s32 4, %s606
        %s610 = scalar_lea.vmem [#allocation2], %s609
        loop: start=0, step=1, limit=1
        $region73: #{forward.5} parent=71 // loop_pre_header
          _
        $region74: #{forward.5} parent=71 // loop_header
          %s612 = sphi 0, %s616
          %p613 = scmp.ge.s32.totalorder %s612, 1
          %s617 = sphi %s11, %s11
          %s618 = sphi [#allocation2], [#allocation2]
        $region75: #{forward.5} parent=71 // loop_header_branch
          %615 = sbr.rel (%p613) target = $region79
        $region76: #{forward.5} parent=71 // loop_body
          _
        $region77: #{forward.5} parent=71 // loop_footer
          %s616 = sadd.s32 1, %s612
        $region78: #{forward.5} parent=71 // loop_footer_branch
          %611 = sbr.rel target = $region74
        $region79: #{forward.5} parent=71 // loop_exit
          _
        %s619 = sshllo.u32 0, %s606
        loop: start=0, step=1, limit=1
        $region80: #{forward.5} parent=71 // loop_pre_header
          _
        $region81: #{forward.5} parent=71 // loop_header
          %s621 = sphi 0, %s625
          %p622 = scmp.ge.s32.totalorder %s621, 1
          %s626 = sphi %s608, %s608
          %s627 = sphi %s610, %s610
        $region82: #{forward.5} parent=71 // loop_header_branch
          %624 = sbr.rel (%p622) target = $region86
        $region83: #{forward.5} parent=71 // loop_body
          %v628 = vld [vmem:[%s626] sm:%s619]
          %629 = vst [vmem:[%s627] sm:%s619] %v628
          %v630 = vld [vmem:[%s626 + $0x10] sm:%s619]
          %631 = vst [vmem:[%s627 + $0x4] sm:%s619] %v630
          %v632 = vld [vmem:[%s626 + $0x4] sm:%s619]
          %633 = vst [vmem:[%s627 + $0x8] sm:%s619] %v632
          %v634 = vld [vmem:[%s626 + $0x14] sm:%s619]
          %635 = vst [vmem:[%s627 + $0xc] sm:%s619] %v634
          %v636 = vld [vmem:[%s626 + $0x8] sm:%s619]
          %637 = vst [vmem:[%s627 + $0x10] sm:%s619] %v636
          %v638 = vld [vmem:[%s626 + $0x18] sm:%s619]
          %639 = vst [vmem:[%s627 + $0x14] sm:%s619] %v638
          %v640 = vld [vmem:[%s626 + $0xc] sm:%s619]
          %641 = vst [vmem:[%s627 + $0x18] sm:%s619] %v640
          %v642 = vld [vmem:[%s626 + $0x1c] sm:%s619]
          %643 = vst [vmem:[%s627 + $0x1c] sm:%s619] %v642
          %v644 = vld [vmem:[%s626 + $0x20] sm:%s619]
          %645 = vst [vmem:[%s627 + $0x20] sm:%s619] %v644
          %v646 = vld [vmem:[%s626 + $0x30] sm:%s619]
          %647 = vst [vmem:[%s627 + $0x24] sm:%s619] %v646
          %v648 = vld [vmem:[%s626 + $0x24] sm:%s619]
          %649 = vst [vmem:[%s627 + $0x28] sm:%s619] %v648
          %v650 = vld [vmem:[%s626 + $0x34] sm:%s619]
          %651 = vst [vmem:[%s627 + $0x2c] sm:%s619] %v650
          %v652 = vld [vmem:[%s626 + $0x28] sm:%s619]
          %653 = vst [vmem:[%s627 + $0x30] sm:%s619] %v652
          %v654 = vld [vmem:[%s626 + $0x38] sm:%s619]
          %655 = vst [vmem:[%s627 + $0x34] sm:%s619] %v654
          %v656 = vld [vmem:[%s626 + $0x2c] sm:%s619]
          %657 = vst [vmem:[%s627 + $0x38] sm:%s619] %v656
          %v658 = vld [vmem:[%s626 + $0x3c] sm:%s619]
          %659 = vst [vmem:[%s627 + $0x3c] sm:%s619] %v658
          %v660 = vld [vmem:[%s626 + $0x40] sm:%s619]
          %661 = vst [vmem:[%s627 + $0x40] sm:%s619] %v660
          %v662 = vld [vmem:[%s626 + $0x50] sm:%s619]
          %663 = vst [vmem:[%s627 + $0x44] sm:%s619] %v662
          %v664 = vld [vmem:[%s626 + $0x44] sm:%s619]
          %665 = vst [vmem:[%s627 + $0x48] sm:%s619] %v664
          %v666 = vld [vmem:[%s626 + $0x54] sm:%s619]
          %667 = vst [vmem:[%s627 + $0x4c] sm:%s619] %v666
          %v668 = vld [vmem:[%s626 + $0x48] sm:%s619]
          %669 = vst [vmem:[%s627 + $0x50] sm:%s619] %v668
          %v670 = vld [vmem:[%s626 + $0x58] sm:%s619]
          %671 = vst [vmem:[%s627 + $0x54] sm:%s619] %v670
          %v672 = vld [vmem:[%s626 + $0x4c] sm:%s619]
          %673 = vst [vmem:[%s627 + $0x58] sm:%s619] %v672
          %v674 = vld [vmem:[%s626 + $0x5c] sm:%s619]
          %675 = vst [vmem:[%s627 + $0x5c] sm:%s619] %v674
          %v676 = vld [vmem:[%s626 + $0x60] sm:%s619]
          %677 = vst [vmem:[%s627 + $0x60] sm:%s619] %v676
          %v678 = vld [vmem:[%s626 + $0x70] sm:%s619]
          %679 = vst [vmem:[%s627 + $0x64] sm:%s619] %v678
          %v680 = vld [vmem:[%s626 + $0x64] sm:%s619]
          %681 = vst [vmem:[%s627 + $0x68] sm:%s619] %v680
          %v682 = vld [vmem:[%s626 + $0x74] sm:%s619]
          %683 = vst [vmem:[%s627 + $0x6c] sm:%s619] %v682
          %v684 = vld [vmem:[%s626 + $0x68] sm:%s619]
          %685 = vst [vmem:[%s627 + $0x70] sm:%s619] %v684
          %v686 = vld [vmem:[%s626 + $0x78] sm:%s619]
          %687 = vst [vmem:[%s627 + $0x74] sm:%s619] %v686
          %v688 = vld [vmem:[%s626 + $0x6c] sm:%s619]
          %689 = vst [vmem:[%s627 + $0x78] sm:%s619] %v688
          %v690 = vld [vmem:[%s626 + $0x7c] sm:%s619]
          %691 = vst [vmem:[%s627 + $0x7c] sm:%s619] %v690
          %v692 = vld [vmem:[%s626 + $0x80] sm:%s619]
          %693 = vst [vmem:[%s627 + $0x80] sm:%s619] %v692
          %v694 = vld [vmem:[%s626 + $0x90] sm:%s619]
          %695 = vst [vmem:[%s627 + $0x84] sm:%s619] %v694
          %v696 = vld [vmem:[%s626 + $0x84] sm:%s619]
          %697 = vst [vmem:[%s627 + $0x88] sm:%s619] %v696
          %v698 = vld [vmem:[%s626 + $0x94] sm:%s619]
          %699 = vst [vmem:[%s627 + $0x8c] sm:%s619] %v698
          %v700 = vld [vmem:[%s626 + $0x88] sm:%s619]
          %701 = vst [vmem:[%s627 + $0x90] sm:%s619] %v700
          %v702 = vld [vmem:[%s626 + $0x98] sm:%s619]
          %703 = vst [vmem:[%s627 + $0x94] sm:%s619] %v702
          %v704 = vld [vmem:[%s626 + $0x8c] sm:%s619]
          %705 = vst [vmem:[%s627 + $0x98] sm:%s619] %v704
          %v706 = vld [vmem:[%s626 + $0x9c] sm:%s619]
          %707 = vst [vmem:[%s627 + $0x9c] sm:%s619] %v706
          %v708 = vld [vmem:[%s626 + $0xa0] sm:%s619]
          %709 = vst [vmem:[%s627 + $0xa0] sm:%s619] %v708
          %v710 = vld [vmem:[%s626 + $0xb0] sm:%s619]
          %711 = vst [vmem:[%s627 + $0xa4] sm:%s619] %v710
          %v712 = vld [vmem:[%s626 + $0xa4] sm:%s619]
          %713 = vst [vmem:[%s627 + $0xa8] sm:%s619] %v712
          %v714 = vld [vmem:[%s626 + $0xb4] sm:%s619]
          %715 = vst [vmem:[%s627 + $0xac] sm:%s619] %v714
          %v716 = vld [vmem:[%s626 + $0xa8] sm:%s619]
          %717 = vst [vmem:[%s627 + $0xb0] sm:%s619] %v716
          %v718 = vld [vmem:[%s626 + $0xb8] sm:%s619]
          %719 = vst [vmem:[%s627 + $0xb4] sm:%s619] %v718
          %v720 = vld [vmem:[%s626 + $0xac] sm:%s619]
          %721 = vst [vmem:[%s627 + $0xb8] sm:%s619] %v720
          %v722 = vld [vmem:[%s626 + $0xbc] sm:%s619]
          %723 = vst [vmem:[%s627 + $0xbc] sm:%s619] %v722
          %v724 = vld [vmem:[%s626 + $0xc0] sm:%s619]
          %725 = vst [vmem:[%s627 + $0xc0] sm:%s619] %v724
          %v726 = vld [vmem:[%s626 + $0xd0] sm:%s619]
          %727 = vst [vmem:[%s627 + $0xc4] sm:%s619] %v726
          %v728 = vld [vmem:[%s626 + $0xc4] sm:%s619]
          %729 = vst [vmem:[%s627 + $0xc8] sm:%s619] %v728
          %v730 = vld [vmem:[%s626 + $0xd4] sm:%s619]
          %731 = vst [vmem:[%s627 + $0xcc] sm:%s619] %v730
          %v732 = vld [vmem:[%s626 + $0xc8] sm:%s619]
          %733 = vst [vmem:[%s627 + $0xd0] sm:%s619] %v732
          %v734 = vld [vmem:[%s626 + $0xd8] sm:%s619]
          %735 = vst [vmem:[%s627 + $0xd4] sm:%s619] %v734
          %v736 = vld [vmem:[%s626 + $0xcc] sm:%s619]
          %737 = vst [vmem:[%s627 + $0xd8] sm:%s619] %v736
          %v738 = vld [vmem:[%s626 + $0xdc] sm:%s619]
          %739 = vst [vmem:[%s627 + $0xdc] sm:%s619] %v738
          %v740 = vld [vmem:[%s626 + $0xe0] sm:%s619]
          %741 = vst [vmem:[%s627 + $0xe0] sm:%s619] %v740
          %v742 = vld [vmem:[%s626 + $0xf0] sm:%s619]
          %743 = vst [vmem:[%s627 + $0xe4] sm:%s619] %v742
          %v744 = vld [vmem:[%s626 + $0xe4] sm:%s619]
          %745 = vst [vmem:[%s627 + $0xe8] sm:%s619] %v744
          %v746 = vld [vmem:[%s626 + $0xf4] sm:%s619]
          %747 = vst [vmem:[%s627 + $0xec] sm:%s619] %v746
          %v748 = vld [vmem:[%s626 + $0xe8] sm:%s619]
          %749 = vst [vmem:[%s627 + $0xf0] sm:%s619] %v748
          %v750 = vld [vmem:[%s626 + $0xf8] sm:%s619]
          %751 = vst [vmem:[%s627 + $0xf4] sm:%s619] %v750
          %v752 = vld [vmem:[%s626 + $0xec] sm:%s619]
          %753 = vst [vmem:[%s627 + $0xf8] sm:%s619] %v752
          %v754 = vld [vmem:[%s626 + $0xfc] sm:%s619]
          %755 = vst [vmem:[%s627 + $0xfc] sm:%s619] %v754
          %v756 = vld [vmem:[%s626 + $0x100] sm:%s619]
          %757 = vst [vmem:[%s627 + $0x100] sm:%s619] %v756
          %v758 = vld [vmem:[%s626 + $0x110] sm:%s619]
          %759 = vst [vmem:[%s627 + $0x104] sm:%s619] %v758
          %v760 = vld [vmem:[%s626 + $0x104] sm:%s619]
          %761 = vst [vmem:[%s627 + $0x108] sm:%s619] %v760
          %v762 = vld [vmem:[%s626 + $0x114] sm:%s619]
          %763 = vst [vmem:[%s627 + $0x10c] sm:%s619] %v762
          %v764 = vld [vmem:[%s626 + $0x108] sm:%s619]
          %765 = vst [vmem:[%s627 + $0x110] sm:%s619] %v764
          %v766 = vld [vmem:[%s626 + $0x118] sm:%s619]
          %767 = vst [vmem:[%s627 + $0x114] sm:%s619] %v766
          %v768 = vld [vmem:[%s626 + $0x10c] sm:%s619]
          %769 = vst [vmem:[%s627 + $0x118] sm:%s619] %v768
          %v770 = vld [vmem:[%s626 + $0x11c] sm:%s619]
          %771 = vst [vmem:[%s627 + $0x11c] sm:%s619] %v770
          %v772 = vld [vmem:[%s626 + $0x120] sm:%s619]
          %773 = vst [vmem:[%s627 + $0x120] sm:%s619] %v772
          %v774 = vld [vmem:[%s626 + $0x130] sm:%s619]
          %775 = vst [vmem:[%s627 + $0x124] sm:%s619] %v774
          %v776 = vld [vmem:[%s626 + $0x124] sm:%s619]
          %777 = vst [vmem:[%s627 + $0x128] sm:%s619] %v776
          %v778 = vld [vmem:[%s626 + $0x134] sm:%s619]
          %779 = vst [vmem:[%s627 + $0x12c] sm:%s619] %v778
          %v780 = vld [vmem:[%s626 + $0x128] sm:%s619]
          %781 = vst [vmem:[%s627 + $0x130] sm:%s619] %v780
          %v782 = vld [vmem:[%s626 + $0x138] sm:%s619]
          %783 = vst [vmem:[%s627 + $0x134] sm:%s619] %v782
          %v784 = vld [vmem:[%s626 + $0x12c] sm:%s619]
          %785 = vst [vmem:[%s627 + $0x138] sm:%s619] %v784
          %v786 = vld [vmem:[%s626 + $0x13c] sm:%s619]
          %787 = vst [vmem:[%s627 + $0x13c] sm:%s619] %v786
          %v788 = vld [vmem:[%s626 + $0x140] sm:%s619]
          %789 = vst [vmem:[%s627 + $0x140] sm:%s619] %v788
          %v790 = vld [vmem:[%s626 + $0x150] sm:%s619]
          %791 = vst [vmem:[%s627 + $0x144] sm:%s619] %v790
          %v792 = vld [vmem:[%s626 + $0x144] sm:%s619]
          %793 = vst [vmem:[%s627 + $0x148] sm:%s619] %v792
          %v794 = vld [vmem:[%s626 + $0x154] sm:%s619]
          %795 = vst [vmem:[%s627 + $0x14c] sm:%s619] %v794
          %v796 = vld [vmem:[%s626 + $0x148] sm:%s619]
          %797 = vst [vmem:[%s627 + $0x150] sm:%s619] %v796
          %v798 = vld [vmem:[%s626 + $0x158] sm:%s619]
          %799 = vst [vmem:[%s627 + $0x154] sm:%s619] %v798
          %v800 = vld [vmem:[%s626 + $0x14c] sm:%s619]
          %801 = vst [vmem:[%s627 + $0x158] sm:%s619] %v800
          %v802 = vld [vmem:[%s626 + $0x15c] sm:%s619]
          %803 = vst [vmem:[%s627 + $0x15c] sm:%s619] %v802
          %v804 = vld [vmem:[%s626 + $0x160] sm:%s619]
          %805 = vst [vmem:[%s627 + $0x160] sm:%s619] %v804
          %v806 = vld [vmem:[%s626 + $0x170] sm:%s619]
          %807 = vst [vmem:[%s627 + $0x164] sm:%s619] %v806
          %v808 = vld [vmem:[%s626 + $0x164] sm:%s619]
          %809 = vst [vmem:[%s627 + $0x168] sm:%s619] %v808
          %v810 = vld [vmem:[%s626 + $0x174] sm:%s619]
          %811 = vst [vmem:[%s627 + $0x16c] sm:%s619] %v810
          %v812 = vld [vmem:[%s626 + $0x168] sm:%s619]
          %813 = vst [vmem:[%s627 + $0x170] sm:%s619] %v812
          %v814 = vld [vmem:[%s626 + $0x178] sm:%s619]
          %815 = vst [vmem:[%s627 + $0x174] sm:%s619] %v814
          %v816 = vld [vmem:[%s626 + $0x16c] sm:%s619]
          %817 = vst [vmem:[%s627 + $0x178] sm:%s619] %v816
          %v818 = vld [vmem:[%s626 + $0x17c] sm:%s619]
          %819 = vst [vmem:[%s627 + $0x17c] sm:%s619] %v818
          %v820 = vld [vmem:[%s626 + $0x180] sm:%s619]
          %821 = vst [vmem:[%s627 + $0x180] sm:%s619] %v820
          %v822 = vld [vmem:[%s626 + $0x190] sm:%s619]
          %823 = vst [vmem:[%s627 + $0x184] sm:%s619] %v822
          %v824 = vld [vmem:[%s626 + $0x184] sm:%s619]
          %825 = vst [vmem:[%s627 + $0x188] sm:%s619] %v824
          %v826 = vld [vmem:[%s626 + $0x194] sm:%s619]
          %827 = vst [vmem:[%s627 + $0x18c] sm:%s619] %v826
          %v828 = vld [vmem:[%s626 + $0x188] sm:%s619]
          %829 = vst [vmem:[%s627 + $0x190] sm:%s619] %v828
          %v830 = vld [vmem:[%s626 + $0x198] sm:%s619]
          %831 = vst [vmem:[%s627 + $0x194] sm:%s619] %v830
          %v832 = vld [vmem:[%s626 + $0x18c] sm:%s619]
          %833 = vst [vmem:[%s627 + $0x198] sm:%s619] %v832
          %v834 = vld [vmem:[%s626 + $0x19c] sm:%s619]
          %835 = vst [vmem:[%s627 + $0x19c] sm:%s619] %v834
          %v836 = vld [vmem:[%s626 + $0x1a0] sm:%s619]
          %837 = vst [vmem:[%s627 + $0x1a0] sm:%s619] %v836
          %v838 = vld [vmem:[%s626 + $0x1b0] sm:%s619]
          %839 = vst [vmem:[%s627 + $0x1a4] sm:%s619] %v838
          %v840 = vld [vmem:[%s626 + $0x1a4] sm:%s619]
          %841 = vst [vmem:[%s627 + $0x1a8] sm:%s619] %v840
          %v842 = vld [vmem:[%s626 + $0x1b4] sm:%s619]
          %843 = vst [vmem:[%s627 + $0x1ac] sm:%s619] %v842
          %v844 = vld [vmem:[%s626 + $0x1a8] sm:%s619]
          %845 = vst [vmem:[%s627 + $0x1b0] sm:%s619] %v844
          %v846 = vld [vmem:[%s626 + $0x1b8] sm:%s619]
          %847 = vst [vmem:[%s627 + $0x1b4] sm:%s619] %v846
          %v848 = vld [vmem:[%s626 + $0x1ac] sm:%s619]
          %849 = vst [vmem:[%s627 + $0x1b8] sm:%s619] %v848
          %v850 = vld [vmem:[%s626 + $0x1bc] sm:%s619]
          %851 = vst [vmem:[%s627 + $0x1bc] sm:%s619] %v850
          %v852 = vld [vmem:[%s626 + $0x1c0] sm:%s619]
          %853 = vst [vmem:[%s627 + $0x1c0] sm:%s619] %v852
          %v854 = vld [vmem:[%s626 + $0x1d0] sm:%s619]
          %855 = vst [vmem:[%s627 + $0x1c4] sm:%s619] %v854
          %v856 = vld [vmem:[%s626 + $0x1c4] sm:%s619]
          %857 = vst [vmem:[%s627 + $0x1c8] sm:%s619] %v856
          %v858 = vld [vmem:[%s626 + $0x1d4] sm:%s619]
          %859 = vst [vmem:[%s627 + $0x1cc] sm:%s619] %v858
          %v860 = vld [vmem:[%s626 + $0x1c8] sm:%s619]
          %861 = vst [vmem:[%s627 + $0x1d0] sm:%s619] %v860
          %v862 = vld [vmem:[%s626 + $0x1d8] sm:%s619]
          %863 = vst [vmem:[%s627 + $0x1d4] sm:%s619] %v862
          %v864 = vld [vmem:[%s626 + $0x1cc] sm:%s619]
          %865 = vst [vmem:[%s627 + $0x1d8] sm:%s619] %v864
          %v866 = vld [vmem:[%s626 + $0x1dc] sm:%s619]
          %867 = vst [vmem:[%s627 + $0x1dc] sm:%s619] %v866
          %v868 = vld [vmem:[%s626 + $0x1e0] sm:%s619]
          %869 = vst [vmem:[%s627 + $0x1e0] sm:%s619] %v868
          %v870 = vld [vmem:[%s626 + $0x1f0] sm:%s619]
          %871 = vst [vmem:[%s627 + $0x1e4] sm:%s619] %v870
          %v872 = vld [vmem:[%s626 + $0x1e4] sm:%s619]
          %873 = vst [vmem:[%s627 + $0x1e8] sm:%s619] %v872
          %v874 = vld [vmem:[%s626 + $0x1f4] sm:%s619]
          %875 = vst [vmem:[%s627 + $0x1ec] sm:%s619] %v874
          %v876 = vld [vmem:[%s626 + $0x1e8] sm:%s619]
          %877 = vst [vmem:[%s627 + $0x1f0] sm:%s619] %v876
          %v878 = vld [vmem:[%s626 + $0x1f8] sm:%s619]
          %879 = vst [vmem:[%s627 + $0x1f4] sm:%s619] %v878
          %v880 = vld [vmem:[%s626 + $0x1ec] sm:%s619]
          %881 = vst [vmem:[%s627 + $0x1f8] sm:%s619] %v880
          %v882 = vld [vmem:[%s626 + $0x1fc] sm:%s619]
          %883 = vst [vmem:[%s627 + $0x1fc] sm:%s619] %v882
          %v884 = vld [vmem:[%s626 + $0x200] sm:%s619]
          %885 = vst [vmem:[%s627 + $0x200] sm:%s619] %v884
          %v886 = vld [vmem:[%s626 + $0x210] sm:%s619]
          %887 = vst [vmem:[%s627 + $0x204] sm:%s619] %v886
          %v888 = vld [vmem:[%s626 + $0x204] sm:%s619]
          %889 = vst [vmem:[%s627 + $0x208] sm:%s619] %v888
          %v890 = vld [vmem:[%s626 + $0x214] sm:%s619]
          %891 = vst [vmem:[%s627 + $0x20c] sm:%s619] %v890
          %v892 = vld [vmem:[%s626 + $0x208] sm:%s619]
          %893 = vst [vmem:[%s627 + $0x210] sm:%s619] %v892
          %v894 = vld [vmem:[%s626 + $0x218] sm:%s619]
          %895 = vst [vmem:[%s627 + $0x214] sm:%s619] %v894
          %v896 = vld [vmem:[%s626 + $0x20c] sm:%s619]
          %897 = vst [vmem:[%s627 + $0x218] sm:%s619] %v896
          %v898 = vld [vmem:[%s626 + $0x21c] sm:%s619]
          %899 = vst [vmem:[%s627 + $0x21c] sm:%s619] %v898
          %v900 = vld [vmem:[%s626 + $0x220] sm:%s619]
          %901 = vst [vmem:[%s627 + $0x220] sm:%s619] %v900
          %v902 = vld [vmem:[%s626 + $0x230] sm:%s619]
          %903 = vst [vmem:[%s627 + $0x224] sm:%s619] %v902
          %v904 = vld [vmem:[%s626 + $0x224] sm:%s619]
          %905 = vst [vmem:[%s627 + $0x228] sm:%s619] %v904
          %v906 = vld [vmem:[%s626 + $0x234] sm:%s619]
          %907 = vst [vmem:[%s627 + $0x22c] sm:%s619] %v906
          %v908 = vld [vmem:[%s626 + $0x228] sm:%s619]
          %909 = vst [vmem:[%s627 + $0x230] sm:%s619] %v908
          %v910 = vld [vmem:[%s626 + $0x238] sm:%s619]
          %911 = vst [vmem:[%s627 + $0x234] sm:%s619] %v910
          %v912 = vld [vmem:[%s626 + $0x22c] sm:%s619]
          %913 = vst [vmem:[%s627 + $0x238] sm:%s619] %v912
          %v914 = vld [vmem:[%s626 + $0x23c] sm:%s619]
          %915 = vst [vmem:[%s627 + $0x23c] sm:%s619] %v914
          %v916 = vld [vmem:[%s626 + $0x240] sm:%s619]
          %917 = vst [vmem:[%s627 + $0x240] sm:%s619] %v916
          %v918 = vld [vmem:[%s626 + $0x250] sm:%s619]
          %919 = vst [vmem:[%s627 + $0x244] sm:%s619] %v918
          %v920 = vld [vmem:[%s626 + $0x244] sm:%s619]
          %921 = vst [vmem:[%s627 + $0x248] sm:%s619] %v920
          %v922 = vld [vmem:[%s626 + $0x254] sm:%s619]
          %923 = vst [vmem:[%s627 + $0x24c] sm:%s619] %v922
          %v924 = vld [vmem:[%s626 + $0x248] sm:%s619]
          %925 = vst [vmem:[%s627 + $0x250] sm:%s619] %v924
          %v926 = vld [vmem:[%s626 + $0x258] sm:%s619]
          %927 = vst [vmem:[%s627 + $0x254] sm:%s619] %v926
          %v928 = vld [vmem:[%s626 + $0x24c] sm:%s619]
          %929 = vst [vmem:[%s627 + $0x258] sm:%s619] %v928
          %v930 = vld [vmem:[%s626 + $0x25c] sm:%s619]
          %931 = vst [vmem:[%s627 + $0x25c] sm:%s619] %v930
          %v932 = vld [vmem:[%s626 + $0x260] sm:%s619]
          %933 = vst [vmem:[%s627 + $0x260] sm:%s619] %v932
          %v934 = vld [vmem:[%s626 + $0x270] sm:%s619]
          %935 = vst [vmem:[%s627 + $0x264] sm:%s619] %v934
          %v936 = vld [vmem:[%s626 + $0x264] sm:%s619]
          %937 = vst [vmem:[%s627 + $0x268] sm:%s619] %v936
          %v938 = vld [vmem:[%s626 + $0x274] sm:%s619]
          %939 = vst [vmem:[%s627 + $0x26c] sm:%s619] %v938
          %v940 = vld [vmem:[%s626 + $0x268] sm:%s619]
          %941 = vst [vmem:[%s627 + $0x270] sm:%s619] %v940
          %v942 = vld [vmem:[%s626 + $0x278] sm:%s619]
          %943 = vst [vmem:[%s627 + $0x274] sm:%s619] %v942
          %v944 = vld [vmem:[%s626 + $0x26c] sm:%s619]
          %945 = vst [vmem:[%s627 + $0x278] sm:%s619] %v944
          %v946 = vld [vmem:[%s626 + $0x27c] sm:%s619]
          %947 = vst [vmem:[%s627 + $0x27c] sm:%s619] %v946
          %v948 = vld [vmem:[%s626 + $0x280] sm:%s619]
          %949 = vst [vmem:[%s627 + $0x280] sm:%s619] %v948
          %v950 = vld [vmem:[%s626 + $0x290] sm:%s619]
          %951 = vst [vmem:[%s627 + $0x284] sm:%s619] %v950
          %v952 = vld [vmem:[%s626 + $0x284] sm:%s619]
          %953 = vst [vmem:[%s627 + $0x288] sm:%s619] %v952
          %v954 = vld [vmem:[%s626 + $0x294] sm:%s619]
          %955 = vst [vmem:[%s627 + $0x28c] sm:%s619] %v954
          %v956 = vld [vmem:[%s626 + $0x288] sm:%s619]
          %957 = vst [vmem:[%s627 + $0x290] sm:%s619] %v956
          %v958 = vld [vmem:[%s626 + $0x298] sm:%s619]
          %959 = vst [vmem:[%s627 + $0x294] sm:%s619] %v958
          %v960 = vld [vmem:[%s626 + $0x28c] sm:%s619]
          %961 = vst [vmem:[%s627 + $0x298] sm:%s619] %v960
          %v962 = vld [vmem:[%s626 + $0x29c] sm:%s619]
          %963 = vst [vmem:[%s627 + $0x29c] sm:%s619] %v962
          %v964 = vld [vmem:[%s626 + $0x2a0] sm:%s619]
          %965 = vst [vmem:[%s627 + $0x2a0] sm:%s619] %v964
          %v966 = vld [vmem:[%s626 + $0x2b0] sm:%s619]
          %967 = vst [vmem:[%s627 + $0x2a4] sm:%s619] %v966
          %v968 = vld [vmem:[%s626 + $0x2a4] sm:%s619]
          %969 = vst [vmem:[%s627 + $0x2a8] sm:%s619] %v968
          %v970 = vld [vmem:[%s626 + $0x2b4] sm:%s619]
          %971 = vst [vmem:[%s627 + $0x2ac] sm:%s619] %v970
          %v972 = vld [vmem:[%s626 + $0x2a8] sm:%s619]
          %973 = vst [vmem:[%s627 + $0x2b0] sm:%s619] %v972
          %v974 = vld [vmem:[%s626 + $0x2b8] sm:%s619]
          %975 = vst [vmem:[%s627 + $0x2b4] sm:%s619] %v974
          %v976 = vld [vmem:[%s626 + $0x2ac] sm:%s619]
          %977 = vst [vmem:[%s627 + $0x2b8] sm:%s619] %v976
          %v978 = vld [vmem:[%s626 + $0x2bc] sm:%s619]
          %979 = vst [vmem:[%s627 + $0x2bc] sm:%s619] %v978
          %v980 = vld [vmem:[%s626 + $0x2c0] sm:%s619]
          %981 = vst [vmem:[%s627 + $0x2c0] sm:%s619] %v980
          %v982 = vld [vmem:[%s626 + $0x2d0] sm:%s619]
          %983 = vst [vmem:[%s627 + $0x2c4] sm:%s619] %v982
          %v984 = vld [vmem:[%s626 + $0x2c4] sm:%s619]
          %985 = vst [vmem:[%s627 + $0x2c8] sm:%s619] %v984
          %v986 = vld [vmem:[%s626 + $0x2d4] sm:%s619]
          %987 = vst [vmem:[%s627 + $0x2cc] sm:%s619] %v986
          %v988 = vld [vmem:[%s626 + $0x2c8] sm:%s619]
          %989 = vst [vmem:[%s627 + $0x2d0] sm:%s619] %v988
          %v990 = vld [vmem:[%s626 + $0x2d8] sm:%s619]
          %991 = vst [vmem:[%s627 + $0x2d4] sm:%s619] %v990
          %v992 = vld [vmem:[%s626 + $0x2cc] sm:%s619]
          %993 = vst [vmem:[%s627 + $0x2d8] sm:%s619] %v992
          %v994 = vld [vmem:[%s626 + $0x2dc] sm:%s619]
          %995 = vst [vmem:[%s627 + $0x2dc] sm:%s619] %v994
          %v996 = vld [vmem:[%s626 + $0x2e0] sm:%s619]
          %997 = vst [vmem:[%s627 + $0x2e0] sm:%s619] %v996
          %v998 = vld [vmem:[%s626 + $0x2f0] sm:%s619]
          %999 = vst [vmem:[%s627 + $0x2e4] sm:%s619] %v998
          %v1000 = vld [vmem:[%s626 + $0x2e4] sm:%s619]
          %1001 = vst [vmem:[%s627 + $0x2e8] sm:%s619] %v1000
          %v1002 = vld [vmem:[%s626 + $0x2f4] sm:%s619]
          %1003 = vst [vmem:[%s627 + $0x2ec] sm:%s619] %v1002
          %v1004 = vld [vmem:[%s626 + $0x2e8] sm:%s619]
          %1005 = vst [vmem:[%s627 + $0x2f0] sm:%s619] %v1004
          %v1006 = vld [vmem:[%s626 + $0x2f8] sm:%s619]
          %1007 = vst [vmem:[%s627 + $0x2f4] sm:%s619] %v1006
          %v1008 = vld [vmem:[%s626 + $0x2ec] sm:%s619]
          %1009 = vst [vmem:[%s627 + $0x2f8] sm:%s619] %v1008
          %v1010 = vld [vmem:[%s626 + $0x2fc] sm:%s619]
          %1011 = vst [vmem:[%s627 + $0x2fc] sm:%s619] %v1010
          %v1012 = vld [vmem:[%s626 + $0x300] sm:%s619]
          %1013 = vst [vmem:[%s627 + $0x300] sm:%s619] %v1012
          %v1014 = vld [vmem:[%s626 + $0x310] sm:%s619]
          %1015 = vst [vmem:[%s627 + $0x304] sm:%s619] %v1014
          %v1016 = vld [vmem:[%s626 + $0x304] sm:%s619]
          %1017 = vst [vmem:[%s627 + $0x308] sm:%s619] %v1016
          %v1018 = vld [vmem:[%s626 + $0x314] sm:%s619]
          %1019 = vst [vmem:[%s627 + $0x30c] sm:%s619] %v1018
          %v1020 = vld [vmem:[%s626 + $0x308] sm:%s619]
          %1021 = vst [vmem:[%s627 + $0x310] sm:%s619] %v1020
          %v1022 = vld [vmem:[%s626 + $0x318] sm:%s619]
          %1023 = vst [vmem:[%s627 + $0x314] sm:%s619] %v1022
          %v1024 = vld [vmem:[%s626 + $0x30c] sm:%s619]
          %1025 = vst [vmem:[%s627 + $0x318] sm:%s619] %v1024
          %v1026 = vld [vmem:[%s626 + $0x31c] sm:%s619]
          %1027 = vst [vmem:[%s627 + $0x31c] sm:%s619] %v1026
          %v1028 = vld [vmem:[%s626 + $0x320] sm:%s619]
          %1029 = vst [vmem:[%s627 + $0x320] sm:%s619] %v1028
          %v1030 = vld [vmem:[%s626 + $0x330] sm:%s619]
          %1031 = vst [vmem:[%s627 + $0x324] sm:%s619] %v1030
          %v1032 = vld [vmem:[%s626 + $0x324] sm:%s619]
          %1033 = vst [vmem:[%s627 + $0x328] sm:%s619] %v1032
          %v1034 = vld [vmem:[%s626 + $0x334] sm:%s619]
          %1035 = vst [vmem:[%s627 + $0x32c] sm:%s619] %v1034
          %v1036 = vld [vmem:[%s626 + $0x328] sm:%s619]
          %1037 = vst [vmem:[%s627 + $0x330] sm:%s619] %v1036
          %v1038 = vld [vmem:[%s626 + $0x338] sm:%s619]
          %1039 = vst [vmem:[%s627 + $0x334] sm:%s619] %v1038
          %v1040 = vld [vmem:[%s626 + $0x32c] sm:%s619]
          %1041 = vst [vmem:[%s627 + $0x338] sm:%s619] %v1040
          %v1042 = vld [vmem:[%s626 + $0x33c] sm:%s619]
          %1043 = vst [vmem:[%s627 + $0x33c] sm:%s619] %v1042
          %v1044 = vld [vmem:[%s626 + $0x340] sm:%s619]
          %1045 = vst [vmem:[%s627 + $0x340] sm:%s619] %v1044
          %v1046 = vld [vmem:[%s626 + $0x350] sm:%s619]
          %1047 = vst [vmem:[%s627 + $0x344] sm:%s619] %v1046
          %v1048 = vld [vmem:[%s626 + $0x344] sm:%s619]
          %1049 = vst [vmem:[%s627 + $0x348] sm:%s619] %v1048
          %v1050 = vld [vmem:[%s626 + $0x354] sm:%s619]
          %1051 = vst [vmem:[%s627 + $0x34c] sm:%s619] %v1050
          %v1052 = vld [vmem:[%s626 + $0x348] sm:%s619]
          %1053 = vst [vmem:[%s627 + $0x350] sm:%s619] %v1052
          %v1054 = vld [vmem:[%s626 + $0x358] sm:%s619]
          %1055 = vst [vmem:[%s627 + $0x354] sm:%s619] %v1054
          %v1056 = vld [vmem:[%s626 + $0x34c] sm:%s619]
          %1057 = vst [vmem:[%s627 + $0x358] sm:%s619] %v1056
          %v1058 = vld [vmem:[%s626 + $0x35c] sm:%s619]
          %1059 = vst [vmem:[%s627 + $0x35c] sm:%s619] %v1058
          %v1060 = vld [vmem:[%s626 + $0x360] sm:%s619]
          %1061 = vst [vmem:[%s627 + $0x360] sm:%s619] %v1060
          %v1062 = vld [vmem:[%s626 + $0x370] sm:%s619]
          %1063 = vst [vmem:[%s627 + $0x364] sm:%s619] %v1062
          %v1064 = vld [vmem:[%s626 + $0x364] sm:%s619]
          %1065 = vst [vmem:[%s627 + $0x368] sm:%s619] %v1064
          %v1066 = vld [vmem:[%s626 + $0x374] sm:%s619]
          %1067 = vst [vmem:[%s627 + $0x36c] sm:%s619] %v1066
          %v1068 = vld [vmem:[%s626 + $0x368] sm:%s619]
          %1069 = vst [vmem:[%s627 + $0x370] sm:%s619] %v1068
          %v1070 = vld [vmem:[%s626 + $0x378] sm:%s619]
          %1071 = vst [vmem:[%s627 + $0x374] sm:%s619] %v1070
          %v1072 = vld [vmem:[%s626 + $0x36c] sm:%s619]
          %1073 = vst [vmem:[%s627 + $0x378] sm:%s619] %v1072
          %v1074 = vld [vmem:[%s626 + $0x37c] sm:%s619]
          %1075 = vst [vmem:[%s627 + $0x37c] sm:%s619] %v1074
          %v1076 = vld [vmem:[%s626 + $0x380] sm:%s619]
          %1077 = vst [vmem:[%s627 + $0x380] sm:%s619] %v1076
          %v1078 = vld [vmem:[%s626 + $0x390] sm:%s619]
          %1079 = vst [vmem:[%s627 + $0x384] sm:%s619] %v1078
          %v1080 = vld [vmem:[%s626 + $0x384] sm:%s619]
          %1081 = vst [vmem:[%s627 + $0x388] sm:%s619] %v1080
          %v1082 = vld [vmem:[%s626 + $0x394] sm:%s619]
          %1083 = vst [vmem:[%s627 + $0x38c] sm:%s619] %v1082
          %v1084 = vld [vmem:[%s626 + $0x388] sm:%s619]
          %1085 = vst [vmem:[%s627 + $0x390] sm:%s619] %v1084
          %v1086 = vld [vmem:[%s626 + $0x398] sm:%s619]
          %1087 = vst [vmem:[%s627 + $0x394] sm:%s619] %v1086
          %v1088 = vld [vmem:[%s626 + $0x38c] sm:%s619]
          %1089 = vst [vmem:[%s627 + $0x398] sm:%s619] %v1088
          %v1090 = vld [vmem:[%s626 + $0x39c] sm:%s619]
          %1091 = vst [vmem:[%s627 + $0x39c] sm:%s619] %v1090
          %v1092 = vld [vmem:[%s626 + $0x3a0] sm:%s619]
          %1093 = vst [vmem:[%s627 + $0x3a0] sm:%s619] %v1092
          %v1094 = vld [vmem:[%s626 + $0x3b0] sm:%s619]
          %1095 = vst [vmem:[%s627 + $0x3a4] sm:%s619] %v1094
          %v1096 = vld [vmem:[%s626 + $0x3a4] sm:%s619]
          %1097 = vst [vmem:[%s627 + $0x3a8] sm:%s619] %v1096
          %v1098 = vld [vmem:[%s626 + $0x3b4] sm:%s619]
          %1099 = vst [vmem:[%s627 + $0x3ac] sm:%s619] %v1098
          %v1100 = vld [vmem:[%s626 + $0x3a8] sm:%s619]
          %1101 = vst [vmem:[%s627 + $0x3b0] sm:%s619] %v1100
          %v1102 = vld [vmem:[%s626 + $0x3b8] sm:%s619]
          %1103 = vst [vmem:[%s627 + $0x3b4] sm:%s619] %v1102
          %v1104 = vld [vmem:[%s626 + $0x3ac] sm:%s619]
          %1105 = vst [vmem:[%s627 + $0x3b8] sm:%s619] %v1104
          %v1106 = vld [vmem:[%s626 + $0x3bc] sm:%s619]
          %1107 = vst [vmem:[%s627 + $0x3bc] sm:%s619] %v1106
          %v1108 = vld [vmem:[%s626 + $0x3c0] sm:%s619]
          %1109 = vst [vmem:[%s627 + $0x3c0] sm:%s619] %v1108
          %v1110 = vld [vmem:[%s626 + $0x3d0] sm:%s619]
          %1111 = vst [vmem:[%s627 + $0x3c4] sm:%s619] %v1110
          %v1112 = vld [vmem:[%s626 + $0x3c4] sm:%s619]
          %1113 = vst [vmem:[%s627 + $0x3c8] sm:%s619] %v1112
          %v1114 = vld [vmem:[%s626 + $0x3d4] sm:%s619]
          %1115 = vst [vmem:[%s627 + $0x3cc] sm:%s619] %v1114
          %v1116 = vld [vmem:[%s626 + $0x3c8] sm:%s619]
          %1117 = vst [vmem:[%s627 + $0x3d0] sm:%s619] %v1116
          %v1118 = vld [vmem:[%s626 + $0x3d8] sm:%s619]
          %1119 = vst [vmem:[%s627 + $0x3d4] sm:%s619] %v1118
          %v1120 = vld [vmem:[%s626 + $0x3cc] sm:%s619]
          %1121 = vst [vmem:[%s627 + $0x3d8] sm:%s619] %v1120
          %v1122 = vld [vmem:[%s626 + $0x3dc] sm:%s619]
          %1123 = vst [vmem:[%s627 + $0x3dc] sm:%s619] %v1122
          %v1124 = vld [vmem:[%s626 + $0x3e0] sm:%s619]
          %1125 = vst [vmem:[%s627 + $0x3e0] sm:%s619] %v1124
          %v1126 = vld [vmem:[%s626 + $0x3f0] sm:%s619]
          %1127 = vst [vmem:[%s627 + $0x3e4] sm:%s619] %v1126
          %v1128 = vld [vmem:[%s626 + $0x3e4] sm:%s619]
          %1129 = vst [vmem:[%s627 + $0x3e8] sm:%s619] %v1128
          %v1130 = vld [vmem:[%s626 + $0x3f4] sm:%s619]
          %1131 = vst [vmem:[%s627 + $0x3ec] sm:%s619] %v1130
          %v1132 = vld [vmem:[%s626 + $0x3e8] sm:%s619]
          %1133 = vst [vmem:[%s627 + $0x3f0] sm:%s619] %v1132
          %v1134 = vld [vmem:[%s626 + $0x3f8] sm:%s619]
          %1135 = vst [vmem:[%s627 + $0x3f4] sm:%s619] %v1134
          %v1136 = vld [vmem:[%s626 + $0x3ec] sm:%s619]
          %1137 = vst [vmem:[%s627 + $0x3f8] sm:%s619] %v1136
          %v1138 = vld [vmem:[%s626 + $0x3fc] sm:%s619]
          %1139 = vst [vmem:[%s627 + $0x3fc] sm:%s619] %v1138
        $region84: #{forward.5} parent=71 // loop_footer
          %s625 = sadd.s32 1, %s621
        $region85: #{forward.5} parent=71 // loop_footer_branch
          %620 = sbr.rel target = $region81
        $region86: #{forward.5} parent=71 // loop_exit
          _
      $region72: #{forward.5} parent=56 // pred_fallthru
        _
    $region57: #{forward.5} parent=1 // pred_fallthru
      _
    // Predicated region
    $region58: #{forward.5} parent=1 // pred_check
      %p77 = pneg %p73
    $region59: #{forward.5} parent=1 // pred_check_branch
      %79 = sbr.rel (%p77) target = $region61
    $region60: #{forward.5} parent=1 // pred_region
      %s80 = sshllo.u32 0, 4
      loop: start=0, step=1, limit=1
      $region62: #{forward.5} parent=60 // loop_pre_header
        _
      $region63: #{forward.5} parent=60 // loop_header
        %s82 = sphi 0, %s86
        %p83 = scmp.ge.s32.totalorder %s82, 1
        %s87 = sphi %s11, %s11
        %s88 = sphi [#allocation2], [#allocation2]
      $region64: #{forward.5} parent=60 // loop_header_branch
        %85 = sbr.rel (%p83) target = $region68
      $region65: #{forward.5} parent=60 // loop_body
        %v89 = vld [vmem:[%s87] sm:%s80]
        %90 = vst [vmem:[%s88] sm:%s80] %v89
        %v91 = vld [vmem:[%s87 + $0x10] sm:%s80]
        %92 = vst [vmem:[%s88 + $0x4] sm:%s80] %v91
        %v93 = vld [vmem:[%s87 + $0x4] sm:%s80]
        %94 = vst [vmem:[%s88 + $0x8] sm:%s80] %v93
        %v95 = vld [vmem:[%s87 + $0x14] sm:%s80]
        %96 = vst [vmem:[%s88 + $0xc] sm:%s80] %v95
        %v97 = vld [vmem:[%s87 + $0x8] sm:%s80]
        %98 = vst [vmem:[%s88 + $0x10] sm:%s80] %v97
        %v99 = vld [vmem:[%s87 + $0x18] sm:%s80]
        %100 = vst [vmem:[%s88 + $0x14] sm:%s80] %v99
        %v101 = vld [vmem:[%s87 + $0xc] sm:%s80]
        %102 = vst [vmem:[%s88 + $0x18] sm:%s80] %v101
        %v103 = vld [vmem:[%s87 + $0x1c] sm:%s80]
        %104 = vst [vmem:[%s88 + $0x1c] sm:%s80] %v103
        %v105 = vld [vmem:[%s87 + $0x20] sm:%s80]
        %106 = vst [vmem:[%s88 + $0x20] sm:%s80] %v105
        %v107 = vld [vmem:[%s87 + $0x30] sm:%s80]
        %108 = vst [vmem:[%s88 + $0x24] sm:%s80] %v107
        %v109 = vld [vmem:[%s87 + $0x24] sm:%s80]
        %110 = vst [vmem:[%s88 + $0x28] sm:%s80] %v109
        %v111 = vld [vmem:[%s87 + $0x34] sm:%s80]
        %112 = vst [vmem:[%s88 + $0x2c] sm:%s80] %v111
        %v113 = vld [vmem:[%s87 + $0x28] sm:%s80]
        %114 = vst [vmem:[%s88 + $0x30] sm:%s80] %v113
        %v115 = vld [vmem:[%s87 + $0x38] sm:%s80]
        %116 = vst [vmem:[%s88 + $0x34] sm:%s80] %v115
        %v117 = vld [vmem:[%s87 + $0x2c] sm:%s80]
        %118 = vst [vmem:[%s88 + $0x38] sm:%s80] %v117
        %v119 = vld [vmem:[%s87 + $0x3c] sm:%s80]
        %120 = vst [vmem:[%s88 + $0x3c] sm:%s80] %v119
        %v121 = vld [vmem:[%s87 + $0x40] sm:%s80]
        %122 = vst [vmem:[%s88 + $0x40] sm:%s80] %v121
        %v123 = vld [vmem:[%s87 + $0x50] sm:%s80]
        %124 = vst [vmem:[%s88 + $0x44] sm:%s80] %v123
        %v125 = vld [vmem:[%s87 + $0x44] sm:%s80]
        %126 = vst [vmem:[%s88 + $0x48] sm:%s80] %v125
        %v127 = vld [vmem:[%s87 + $0x54] sm:%s80]
        %128 = vst [vmem:[%s88 + $0x4c] sm:%s80] %v127
        %v129 = vld [vmem:[%s87 + $0x48] sm:%s80]
        %130 = vst [vmem:[%s88 + $0x50] sm:%s80] %v129
        %v131 = vld [vmem:[%s87 + $0x58] sm:%s80]
        %132 = vst [vmem:[%s88 + $0x54] sm:%s80] %v131
        %v133 = vld [vmem:[%s87 + $0x4c] sm:%s80]
        %134 = vst [vmem:[%s88 + $0x58] sm:%s80] %v133
        %v135 = vld [vmem:[%s87 + $0x5c] sm:%s80]
        %136 = vst [vmem:[%s88 + $0x5c] sm:%s80] %v135
        %v137 = vld [vmem:[%s87 + $0x60] sm:%s80]
        %138 = vst [vmem:[%s88 + $0x60] sm:%s80] %v137
        %v139 = vld [vmem:[%s87 + $0x70] sm:%s80]
        %140 = vst [vmem:[%s88 + $0x64] sm:%s80] %v139
        %v141 = vld [vmem:[%s87 + $0x64] sm:%s80]
        %142 = vst [vmem:[%s88 + $0x68] sm:%s80] %v141
        %v143 = vld [vmem:[%s87 + $0x74] sm:%s80]
        %144 = vst [vmem:[%s88 + $0x6c] sm:%s80] %v143
        %v145 = vld [vmem:[%s87 + $0x68] sm:%s80]
        %146 = vst [vmem:[%s88 + $0x70] sm:%s80] %v145
        %v147 = vld [vmem:[%s87 + $0x78] sm:%s80]
        %148 = vst [vmem:[%s88 + $0x74] sm:%s80] %v147
        %v149 = vld [vmem:[%s87 + $0x6c] sm:%s80]
        %150 = vst [vmem:[%s88 + $0x78] sm:%s80] %v149
        %v151 = vld [vmem:[%s87 + $0x7c] sm:%s80]
        %152 = vst [vmem:[%s88 + $0x7c] sm:%s80] %v151
        %v153 = vld [vmem:[%s87 + $0x80] sm:%s80]
        %154 = vst [vmem:[%s88 + $0x80] sm:%s80] %v153
        %v155 = vld [vmem:[%s87 + $0x90] sm:%s80]
        %156 = vst [vmem:[%s88 + $0x84] sm:%s80] %v155
        %v157 = vld [vmem:[%s87 + $0x84] sm:%s80]
        %158 = vst [vmem:[%s88 + $0x88] sm:%s80] %v157
        %v159 = vld [vmem:[%s87 + $0x94] sm:%s80]
        %160 = vst [vmem:[%s88 + $0x8c] sm:%s80] %v159
        %v161 = vld [vmem:[%s87 + $0x88] sm:%s80]
        %162 = vst [vmem:[%s88 + $0x90] sm:%s80] %v161
        %v163 = vld [vmem:[%s87 + $0x98] sm:%s80]
        %164 = vst [vmem:[%s88 + $0x94] sm:%s80] %v163
        %v165 = vld [vmem:[%s87 + $0x8c] sm:%s80]
        %166 = vst [vmem:[%s88 + $0x98] sm:%s80] %v165
        %v167 = vld [vmem:[%s87 + $0x9c] sm:%s80]
        %168 = vst [vmem:[%s88 + $0x9c] sm:%s80] %v167
        %v169 = vld [vmem:[%s87 + $0xa0] sm:%s80]
        %170 = vst [vmem:[%s88 + $0xa0] sm:%s80] %v169
        %v171 = vld [vmem:[%s87 + $0xb0] sm:%s80]
        %172 = vst [vmem:[%s88 + $0xa4] sm:%s80] %v171
        %v173 = vld [vmem:[%s87 + $0xa4] sm:%s80]
        %174 = vst [vmem:[%s88 + $0xa8] sm:%s80] %v173
        %v175 = vld [vmem:[%s87 + $0xb4] sm:%s80]
        %176 = vst [vmem:[%s88 + $0xac] sm:%s80] %v175
        %v177 = vld [vmem:[%s87 + $0xa8] sm:%s80]
        %178 = vst [vmem:[%s88 + $0xb0] sm:%s80] %v177
        %v179 = vld [vmem:[%s87 + $0xb8] sm:%s80]
        %180 = vst [vmem:[%s88 + $0xb4] sm:%s80] %v179
        %v181 = vld [vmem:[%s87 + $0xac] sm:%s80]
        %182 = vst [vmem:[%s88 + $0xb8] sm:%s80] %v181
        %v183 = vld [vmem:[%s87 + $0xbc] sm:%s80]
        %184 = vst [vmem:[%s88 + $0xbc] sm:%s80] %v183
        %v185 = vld [vmem:[%s87 + $0xc0] sm:%s80]
        %186 = vst [vmem:[%s88 + $0xc0] sm:%s80] %v185
        %v187 = vld [vmem:[%s87 + $0xd0] sm:%s80]
        %188 = vst [vmem:[%s88 + $0xc4] sm:%s80] %v187
        %v189 = vld [vmem:[%s87 + $0xc4] sm:%s80]
        %190 = vst [vmem:[%s88 + $0xc8] sm:%s80] %v189
        %v191 = vld [vmem:[%s87 + $0xd4] sm:%s80]
        %192 = vst [vmem:[%s88 + $0xcc] sm:%s80] %v191
        %v193 = vld [vmem:[%s87 + $0xc8] sm:%s80]
        %194 = vst [vmem:[%s88 + $0xd0] sm:%s80] %v193
        %v195 = vld [vmem:[%s87 + $0xd8] sm:%s80]
        %196 = vst [vmem:[%s88 + $0xd4] sm:%s80] %v195
        %v197 = vld [vmem:[%s87 + $0xcc] sm:%s80]
        %198 = vst [vmem:[%s88 + $0xd8] sm:%s80] %v197
        %v199 = vld [vmem:[%s87 + $0xdc] sm:%s80]
        %200 = vst [vmem:[%s88 + $0xdc] sm:%s80] %v199
        %v201 = vld [vmem:[%s87 + $0xe0] sm:%s80]
        %202 = vst [vmem:[%s88 + $0xe0] sm:%s80] %v201
        %v203 = vld [vmem:[%s87 + $0xf0] sm:%s80]
        %204 = vst [vmem:[%s88 + $0xe4] sm:%s80] %v203
        %v205 = vld [vmem:[%s87 + $0xe4] sm:%s80]
        %206 = vst [vmem:[%s88 + $0xe8] sm:%s80] %v205
        %v207 = vld [vmem:[%s87 + $0xf4] sm:%s80]
        %208 = vst [vmem:[%s88 + $0xec] sm:%s80] %v207
        %v209 = vld [vmem:[%s87 + $0xe8] sm:%s80]
        %210 = vst [vmem:[%s88 + $0xf0] sm:%s80] %v209
        %v211 = vld [vmem:[%s87 + $0xf8] sm:%s80]
        %212 = vst [vmem:[%s88 + $0xf4] sm:%s80] %v211
        %v213 = vld [vmem:[%s87 + $0xec] sm:%s80]
        %214 = vst [vmem:[%s88 + $0xf8] sm:%s80] %v213
        %v215 = vld [vmem:[%s87 + $0xfc] sm:%s80]
        %216 = vst [vmem:[%s88 + $0xfc] sm:%s80] %v215
        %v217 = vld [vmem:[%s87 + $0x100] sm:%s80]
        %218 = vst [vmem:[%s88 + $0x100] sm:%s80] %v217
        %v219 = vld [vmem:[%s87 + $0x110] sm:%s80]
        %220 = vst [vmem:[%s88 + $0x104] sm:%s80] %v219
        %v221 = vld [vmem:[%s87 + $0x104] sm:%s80]
        %222 = vst [vmem:[%s88 + $0x108] sm:%s80] %v221
        %v223 = vld [vmem:[%s87 + $0x114] sm:%s80]
        %224 = vst [vmem:[%s88 + $0x10c] sm:%s80] %v223
        %v225 = vld [vmem:[%s87 + $0x108] sm:%s80]
        %226 = vst [vmem:[%s88 + $0x110] sm:%s80] %v225
        %v227 = vld [vmem:[%s87 + $0x118] sm:%s80]
        %228 = vst [vmem:[%s88 + $0x114] sm:%s80] %v227
        %v229 = vld [vmem:[%s87 + $0x10c] sm:%s80]
        %230 = vst [vmem:[%s88 + $0x118] sm:%s80] %v229
        %v231 = vld [vmem:[%s87 + $0x11c] sm:%s80]
        %232 = vst [vmem:[%s88 + $0x11c] sm:%s80] %v231
        %v233 = vld [vmem:[%s87 + $0x120] sm:%s80]
        %234 = vst [vmem:[%s88 + $0x120] sm:%s80] %v233
        %v235 = vld [vmem:[%s87 + $0x130] sm:%s80]
        %236 = vst [vmem:[%s88 + $0x124] sm:%s80] %v235
        %v237 = vld [vmem:[%s87 + $0x124] sm:%s80]
        %238 = vst [vmem:[%s88 + $0x128] sm:%s80] %v237
        %v239 = vld [vmem:[%s87 + $0x134] sm:%s80]
        %240 = vst [vmem:[%s88 + $0x12c] sm:%s80] %v239
        %v241 = vld [vmem:[%s87 + $0x128] sm:%s80]
        %242 = vst [vmem:[%s88 + $0x130] sm:%s80] %v241
        %v243 = vld [vmem:[%s87 + $0x138] sm:%s80]
        %244 = vst [vmem:[%s88 + $0x134] sm:%s80] %v243
        %v245 = vld [vmem:[%s87 + $0x12c] sm:%s80]
        %246 = vst [vmem:[%s88 + $0x138] sm:%s80] %v245
        %v247 = vld [vmem:[%s87 + $0x13c] sm:%s80]
        %248 = vst [vmem:[%s88 + $0x13c] sm:%s80] %v247
        %v249 = vld [vmem:[%s87 + $0x140] sm:%s80]
        %250 = vst [vmem:[%s88 + $0x140] sm:%s80] %v249
        %v251 = vld [vmem:[%s87 + $0x150] sm:%s80]
        %252 = vst [vmem:[%s88 + $0x144] sm:%s80] %v251
        %v253 = vld [vmem:[%s87 + $0x144] sm:%s80]
        %254 = vst [vmem:[%s88 + $0x148] sm:%s80] %v253
        %v255 = vld [vmem:[%s87 + $0x154] sm:%s80]
        %256 = vst [vmem:[%s88 + $0x14c] sm:%s80] %v255
        %v257 = vld [vmem:[%s87 + $0x148] sm:%s80]
        %258 = vst [vmem:[%s88 + $0x150] sm:%s80] %v257
        %v259 = vld [vmem:[%s87 + $0x158] sm:%s80]
        %260 = vst [vmem:[%s88 + $0x154] sm:%s80] %v259
        %v261 = vld [vmem:[%s87 + $0x14c] sm:%s80]
        %262 = vst [vmem:[%s88 + $0x158] sm:%s80] %v261
        %v263 = vld [vmem:[%s87 + $0x15c] sm:%s80]
        %264 = vst [vmem:[%s88 + $0x15c] sm:%s80] %v263
        %v265 = vld [vmem:[%s87 + $0x160] sm:%s80]
        %266 = vst [vmem:[%s88 + $0x160] sm:%s80] %v265
        %v267 = vld [vmem:[%s87 + $0x170] sm:%s80]
        %268 = vst [vmem:[%s88 + $0x164] sm:%s80] %v267
        %v269 = vld [vmem:[%s87 + $0x164] sm:%s80]
        %270 = vst [vmem:[%s88 + $0x168] sm:%s80] %v269
        %v271 = vld [vmem:[%s87 + $0x174] sm:%s80]
        %272 = vst [vmem:[%s88 + $0x16c] sm:%s80] %v271
        %v273 = vld [vmem:[%s87 + $0x168] sm:%s80]
        %274 = vst [vmem:[%s88 + $0x170] sm:%s80] %v273
        %v275 = vld [vmem:[%s87 + $0x178] sm:%s80]
        %276 = vst [vmem:[%s88 + $0x174] sm:%s80] %v275
        %v277 = vld [vmem:[%s87 + $0x16c] sm:%s80]
        %278 = vst [vmem:[%s88 + $0x178] sm:%s80] %v277
        %v279 = vld [vmem:[%s87 + $0x17c] sm:%s80]
        %280 = vst [vmem:[%s88 + $0x17c] sm:%s80] %v279
        %v281 = vld [vmem:[%s87 + $0x180] sm:%s80]
        %282 = vst [vmem:[%s88 + $0x180] sm:%s80] %v281
        %v283 = vld [vmem:[%s87 + $0x190] sm:%s80]
        %284 = vst [vmem:[%s88 + $0x184] sm:%s80] %v283
        %v285 = vld [vmem:[%s87 + $0x184] sm:%s80]
        %286 = vst [vmem:[%s88 + $0x188] sm:%s80] %v285
        %v287 = vld [vmem:[%s87 + $0x194] sm:%s80]
        %288 = vst [vmem:[%s88 + $0x18c] sm:%s80] %v287
        %v289 = vld [vmem:[%s87 + $0x188] sm:%s80]
        %290 = vst [vmem:[%s88 + $0x190] sm:%s80] %v289
        %v291 = vld [vmem:[%s87 + $0x198] sm:%s80]
        %292 = vst [vmem:[%s88 + $0x194] sm:%s80] %v291
        %v293 = vld [vmem:[%s87 + $0x18c] sm:%s80]
        %294 = vst [vmem:[%s88 + $0x198] sm:%s80] %v293
        %v295 = vld [vmem:[%s87 + $0x19c] sm:%s80]
        %296 = vst [vmem:[%s88 + $0x19c] sm:%s80] %v295
        %v297 = vld [vmem:[%s87 + $0x1a0] sm:%s80]
        %298 = vst [vmem:[%s88 + $0x1a0] sm:%s80] %v297
        %v299 = vld [vmem:[%s87 + $0x1b0] sm:%s80]
        %300 = vst [vmem:[%s88 + $0x1a4] sm:%s80] %v299
        %v301 = vld [vmem:[%s87 + $0x1a4] sm:%s80]
        %302 = vst [vmem:[%s88 + $0x1a8] sm:%s80] %v301
        %v303 = vld [vmem:[%s87 + $0x1b4] sm:%s80]
        %304 = vst [vmem:[%s88 + $0x1ac] sm:%s80] %v303
        %v305 = vld [vmem:[%s87 + $0x1a8] sm:%s80]
        %306 = vst [vmem:[%s88 + $0x1b0] sm:%s80] %v305
        %v307 = vld [vmem:[%s87 + $0x1b8] sm:%s80]
        %308 = vst [vmem:[%s88 + $0x1b4] sm:%s80] %v307
        %v309 = vld [vmem:[%s87 + $0x1ac] sm:%s80]
        %310 = vst [vmem:[%s88 + $0x1b8] sm:%s80] %v309
        %v311 = vld [vmem:[%s87 + $0x1bc] sm:%s80]
        %312 = vst [vmem:[%s88 + $0x1bc] sm:%s80] %v311
        %v313 = vld [vmem:[%s87 + $0x1c0] sm:%s80]
        %314 = vst [vmem:[%s88 + $0x1c0] sm:%s80] %v313
        %v315 = vld [vmem:[%s87 + $0x1d0] sm:%s80]
        %316 = vst [vmem:[%s88 + $0x1c4] sm:%s80] %v315
        %v317 = vld [vmem:[%s87 + $0x1c4] sm:%s80]
        %318 = vst [vmem:[%s88 + $0x1c8] sm:%s80] %v317
        %v319 = vld [vmem:[%s87 + $0x1d4] sm:%s80]
        %320 = vst [vmem:[%s88 + $0x1cc] sm:%s80] %v319
        %v321 = vld [vmem:[%s87 + $0x1c8] sm:%s80]
        %322 = vst [vmem:[%s88 + $0x1d0] sm:%s80] %v321
        %v323 = vld [vmem:[%s87 + $0x1d8] sm:%s80]
        %324 = vst [vmem:[%s88 + $0x1d4] sm:%s80] %v323
        %v325 = vld [vmem:[%s87 + $0x1cc] sm:%s80]
        %326 = vst [vmem:[%s88 + $0x1d8] sm:%s80] %v325
        %v327 = vld [vmem:[%s87 + $0x1dc] sm:%s80]
        %328 = vst [vmem:[%s88 + $0x1dc] sm:%s80] %v327
        %v329 = vld [vmem:[%s87 + $0x1e0] sm:%s80]
        %330 = vst [vmem:[%s88 + $0x1e0] sm:%s80] %v329
        %v331 = vld [vmem:[%s87 + $0x1f0] sm:%s80]
        %332 = vst [vmem:[%s88 + $0x1e4] sm:%s80] %v331
        %v333 = vld [vmem:[%s87 + $0x1e4] sm:%s80]
        %334 = vst [vmem:[%s88 + $0x1e8] sm:%s80] %v333
        %v335 = vld [vmem:[%s87 + $0x1f4] sm:%s80]
        %336 = vst [vmem:[%s88 + $0x1ec] sm:%s80] %v335
        %v337 = vld [vmem:[%s87 + $0x1e8] sm:%s80]
        %338 = vst [vmem:[%s88 + $0x1f0] sm:%s80] %v337
        %v339 = vld [vmem:[%s87 + $0x1f8] sm:%s80]
        %340 = vst [vmem:[%s88 + $0x1f4] sm:%s80] %v339
        %v341 = vld [vmem:[%s87 + $0x1ec] sm:%s80]
        %342 = vst [vmem:[%s88 + $0x1f8] sm:%s80] %v341
        %v343 = vld [vmem:[%s87 + $0x1fc] sm:%s80]
        %344 = vst [vmem:[%s88 + $0x1fc] sm:%s80] %v343
        %v345 = vld [vmem:[%s87 + $0x200] sm:%s80]
        %346 = vst [vmem:[%s88 + $0x200] sm:%s80] %v345
        %v347 = vld [vmem:[%s87 + $0x210] sm:%s80]
        %348 = vst [vmem:[%s88 + $0x204] sm:%s80] %v347
        %v349 = vld [vmem:[%s87 + $0x204] sm:%s80]
        %350 = vst [vmem:[%s88 + $0x208] sm:%s80] %v349
        %v351 = vld [vmem:[%s87 + $0x214] sm:%s80]
        %352 = vst [vmem:[%s88 + $0x20c] sm:%s80] %v351
        %v353 = vld [vmem:[%s87 + $0x208] sm:%s80]
        %354 = vst [vmem:[%s88 + $0x210] sm:%s80] %v353
        %v355 = vld [vmem:[%s87 + $0x218] sm:%s80]
        %356 = vst [vmem:[%s88 + $0x214] sm:%s80] %v355
        %v357 = vld [vmem:[%s87 + $0x20c] sm:%s80]
        %358 = vst [vmem:[%s88 + $0x218] sm:%s80] %v357
        %v359 = vld [vmem:[%s87 + $0x21c] sm:%s80]
        %360 = vst [vmem:[%s88 + $0x21c] sm:%s80] %v359
        %v361 = vld [vmem:[%s87 + $0x220] sm:%s80]
        %362 = vst [vmem:[%s88 + $0x220] sm:%s80] %v361
        %v363 = vld [vmem:[%s87 + $0x230] sm:%s80]
        %364 = vst [vmem:[%s88 + $0x224] sm:%s80] %v363
        %v365 = vld [vmem:[%s87 + $0x224] sm:%s80]
        %366 = vst [vmem:[%s88 + $0x228] sm:%s80] %v365
        %v367 = vld [vmem:[%s87 + $0x234] sm:%s80]
        %368 = vst [vmem:[%s88 + $0x22c] sm:%s80] %v367
        %v369 = vld [vmem:[%s87 + $0x228] sm:%s80]
        %370 = vst [vmem:[%s88 + $0x230] sm:%s80] %v369
        %v371 = vld [vmem:[%s87 + $0x238] sm:%s80]
        %372 = vst [vmem:[%s88 + $0x234] sm:%s80] %v371
        %v373 = vld [vmem:[%s87 + $0x22c] sm:%s80]
        %374 = vst [vmem:[%s88 + $0x238] sm:%s80] %v373
        %v375 = vld [vmem:[%s87 + $0x23c] sm:%s80]
        %376 = vst [vmem:[%s88 + $0x23c] sm:%s80] %v375
        %v377 = vld [vmem:[%s87 + $0x240] sm:%s80]
        %378 = vst [vmem:[%s88 + $0x240] sm:%s80] %v377
        %v379 = vld [vmem:[%s87 + $0x250] sm:%s80]
        %380 = vst [vmem:[%s88 + $0x244] sm:%s80] %v379
        %v381 = vld [vmem:[%s87 + $0x244] sm:%s80]
        %382 = vst [vmem:[%s88 + $0x248] sm:%s80] %v381
        %v383 = vld [vmem:[%s87 + $0x254] sm:%s80]
        %384 = vst [vmem:[%s88 + $0x24c] sm:%s80] %v383
        %v385 = vld [vmem:[%s87 + $0x248] sm:%s80]
        %386 = vst [vmem:[%s88 + $0x250] sm:%s80] %v385
        %v387 = vld [vmem:[%s87 + $0x258] sm:%s80]
        %388 = vst [vmem:[%s88 + $0x254] sm:%s80] %v387
        %v389 = vld [vmem:[%s87 + $0x24c] sm:%s80]
        %390 = vst [vmem:[%s88 + $0x258] sm:%s80] %v389
        %v391 = vld [vmem:[%s87 + $0x25c] sm:%s80]
        %392 = vst [vmem:[%s88 + $0x25c] sm:%s80] %v391
        %v393 = vld [vmem:[%s87 + $0x260] sm:%s80]
        %394 = vst [vmem:[%s88 + $0x260] sm:%s80] %v393
        %v395 = vld [vmem:[%s87 + $0x270] sm:%s80]
        %396 = vst [vmem:[%s88 + $0x264] sm:%s80] %v395
        %v397 = vld [vmem:[%s87 + $0x264] sm:%s80]
        %398 = vst [vmem:[%s88 + $0x268] sm:%s80] %v397
        %v399 = vld [vmem:[%s87 + $0x274] sm:%s80]
        %400 = vst [vmem:[%s88 + $0x26c] sm:%s80] %v399
        %v401 = vld [vmem:[%s87 + $0x268] sm:%s80]
        %402 = vst [vmem:[%s88 + $0x270] sm:%s80] %v401
        %v403 = vld [vmem:[%s87 + $0x278] sm:%s80]
        %404 = vst [vmem:[%s88 + $0x274] sm:%s80] %v403
        %v405 = vld [vmem:[%s87 + $0x26c] sm:%s80]
        %406 = vst [vmem:[%s88 + $0x278] sm:%s80] %v405
        %v407 = vld [vmem:[%s87 + $0x27c] sm:%s80]
        %408 = vst [vmem:[%s88 + $0x27c] sm:%s80] %v407
        %v409 = vld [vmem:[%s87 + $0x280] sm:%s80]
        %410 = vst [vmem:[%s88 + $0x280] sm:%s80] %v409
        %v411 = vld [vmem:[%s87 + $0x290] sm:%s80]
        %412 = vst [vmem:[%s88 + $0x284] sm:%s80] %v411
        %v413 = vld [vmem:[%s87 + $0x284] sm:%s80]
        %414 = vst [vmem:[%s88 + $0x288] sm:%s80] %v413
        %v415 = vld [vmem:[%s87 + $0x294] sm:%s80]
        %416 = vst [vmem:[%s88 + $0x28c] sm:%s80] %v415
        %v417 = vld [vmem:[%s87 + $0x288] sm:%s80]
        %418 = vst [vmem:[%s88 + $0x290] sm:%s80] %v417
        %v419 = vld [vmem:[%s87 + $0x298] sm:%s80]
        %420 = vst [vmem:[%s88 + $0x294] sm:%s80] %v419
        %v421 = vld [vmem:[%s87 + $0x28c] sm:%s80]
        %422 = vst [vmem:[%s88 + $0x298] sm:%s80] %v421
        %v423 = vld [vmem:[%s87 + $0x29c] sm:%s80]
        %424 = vst [vmem:[%s88 + $0x29c] sm:%s80] %v423
        %v425 = vld [vmem:[%s87 + $0x2a0] sm:%s80]
        %426 = vst [vmem:[%s88 + $0x2a0] sm:%s80] %v425
        %v427 = vld [vmem:[%s87 + $0x2b0] sm:%s80]
        %428 = vst [vmem:[%s88 + $0x2a4] sm:%s80] %v427
        %v429 = vld [vmem:[%s87 + $0x2a4] sm:%s80]
        %430 = vst [vmem:[%s88 + $0x2a8] sm:%s80] %v429
        %v431 = vld [vmem:[%s87 + $0x2b4] sm:%s80]
        %432 = vst [vmem:[%s88 + $0x2ac] sm:%s80] %v431
        %v433 = vld [vmem:[%s87 + $0x2a8] sm:%s80]
        %434 = vst [vmem:[%s88 + $0x2b0] sm:%s80] %v433
        %v435 = vld [vmem:[%s87 + $0x2b8] sm:%s80]
        %436 = vst [vmem:[%s88 + $0x2b4] sm:%s80] %v435
        %v437 = vld [vmem:[%s87 + $0x2ac] sm:%s80]
        %438 = vst [vmem:[%s88 + $0x2b8] sm:%s80] %v437
        %v439 = vld [vmem:[%s87 + $0x2bc] sm:%s80]
        %440 = vst [vmem:[%s88 + $0x2bc] sm:%s80] %v439
        %v441 = vld [vmem:[%s87 + $0x2c0] sm:%s80]
        %442 = vst [vmem:[%s88 + $0x2c0] sm:%s80] %v441
        %v443 = vld [vmem:[%s87 + $0x2d0] sm:%s80]
        %444 = vst [vmem:[%s88 + $0x2c4] sm:%s80] %v443
        %v445 = vld [vmem:[%s87 + $0x2c4] sm:%s80]
        %446 = vst [vmem:[%s88 + $0x2c8] sm:%s80] %v445
        %v447 = vld [vmem:[%s87 + $0x2d4] sm:%s80]
        %448 = vst [vmem:[%s88 + $0x2cc] sm:%s80] %v447
        %v449 = vld [vmem:[%s87 + $0x2c8] sm:%s80]
        %450 = vst [vmem:[%s88 + $0x2d0] sm:%s80] %v449
        %v451 = vld [vmem:[%s87 + $0x2d8] sm:%s80]
        %452 = vst [vmem:[%s88 + $0x2d4] sm:%s80] %v451
        %v453 = vld [vmem:[%s87 + $0x2cc] sm:%s80]
        %454 = vst [vmem:[%s88 + $0x2d8] sm:%s80] %v453
        %v455 = vld [vmem:[%s87 + $0x2dc] sm:%s80]
        %456 = vst [vmem:[%s88 + $0x2dc] sm:%s80] %v455
        %v457 = vld [vmem:[%s87 + $0x2e0] sm:%s80]
        %458 = vst [vmem:[%s88 + $0x2e0] sm:%s80] %v457
        %v459 = vld [vmem:[%s87 + $0x2f0] sm:%s80]
        %460 = vst [vmem:[%s88 + $0x2e4] sm:%s80] %v459
        %v461 = vld [vmem:[%s87 + $0x2e4] sm:%s80]
        %462 = vst [vmem:[%s88 + $0x2e8] sm:%s80] %v461
        %v463 = vld [vmem:[%s87 + $0x2f4] sm:%s80]
        %464 = vst [vmem:[%s88 + $0x2ec] sm:%s80] %v463
        %v465 = vld [vmem:[%s87 + $0x2e8] sm:%s80]
        %466 = vst [vmem:[%s88 + $0x2f0] sm:%s80] %v465
        %v467 = vld [vmem:[%s87 + $0x2f8] sm:%s80]
        %468 = vst [vmem:[%s88 + $0x2f4] sm:%s80] %v467
        %v469 = vld [vmem:[%s87 + $0x2ec] sm:%s80]
        %470 = vst [vmem:[%s88 + $0x2f8] sm:%s80] %v469
        %v471 = vld [vmem:[%s87 + $0x2fc] sm:%s80]
        %472 = vst [vmem:[%s88 + $0x2fc] sm:%s80] %v471
        %v473 = vld [vmem:[%s87 + $0x300] sm:%s80]
        %474 = vst [vmem:[%s88 + $0x300] sm:%s80] %v473
        %v475 = vld [vmem:[%s87 + $0x310] sm:%s80]
        %476 = vst [vmem:[%s88 + $0x304] sm:%s80] %v475
        %v477 = vld [vmem:[%s87 + $0x304] sm:%s80]
        %478 = vst [vmem:[%s88 + $0x308] sm:%s80] %v477
        %v479 = vld [vmem:[%s87 + $0x314] sm:%s80]
        %480 = vst [vmem:[%s88 + $0x30c] sm:%s80] %v479
        %v481 = vld [vmem:[%s87 + $0x308] sm:%s80]
        %482 = vst [vmem:[%s88 + $0x310] sm:%s80] %v481
        %v483 = vld [vmem:[%s87 + $0x318] sm:%s80]
        %484 = vst [vmem:[%s88 + $0x314] sm:%s80] %v483
        %v485 = vld [vmem:[%s87 + $0x30c] sm:%s80]
        %486 = vst [vmem:[%s88 + $0x318] sm:%s80] %v485
        %v487 = vld [vmem:[%s87 + $0x31c] sm:%s80]
        %488 = vst [vmem:[%s88 + $0x31c] sm:%s80] %v487
        %v489 = vld [vmem:[%s87 + $0x320] sm:%s80]
        %490 = vst [vmem:[%s88 + $0x320] sm:%s80] %v489
        %v491 = vld [vmem:[%s87 + $0x330] sm:%s80]
        %492 = vst [vmem:[%s88 + $0x324] sm:%s80] %v491
        %v493 = vld [vmem:[%s87 + $0x324] sm:%s80]
        %494 = vst [vmem:[%s88 + $0x328] sm:%s80] %v493
        %v495 = vld [vmem:[%s87 + $0x334] sm:%s80]
        %496 = vst [vmem:[%s88 + $0x32c] sm:%s80] %v495
        %v497 = vld [vmem:[%s87 + $0x328] sm:%s80]
        %498 = vst [vmem:[%s88 + $0x330] sm:%s80] %v497
        %v499 = vld [vmem:[%s87 + $0x338] sm:%s80]
        %500 = vst [vmem:[%s88 + $0x334] sm:%s80] %v499
        %v501 = vld [vmem:[%s87 + $0x32c] sm:%s80]
        %502 = vst [vmem:[%s88 + $0x338] sm:%s80] %v501
        %v503 = vld [vmem:[%s87 + $0x33c] sm:%s80]
        %504 = vst [vmem:[%s88 + $0x33c] sm:%s80] %v503
        %v505 = vld [vmem:[%s87 + $0x340] sm:%s80]
        %506 = vst [vmem:[%s88 + $0x340] sm:%s80] %v505
        %v507 = vld [vmem:[%s87 + $0x350] sm:%s80]
        %508 = vst [vmem:[%s88 + $0x344] sm:%s80] %v507
        %v509 = vld [vmem:[%s87 + $0x344] sm:%s80]
        %510 = vst [vmem:[%s88 + $0x348] sm:%s80] %v509
        %v511 = vld [vmem:[%s87 + $0x354] sm:%s80]
        %512 = vst [vmem:[%s88 + $0x34c] sm:%s80] %v511
        %v513 = vld [vmem:[%s87 + $0x348] sm:%s80]
        %514 = vst [vmem:[%s88 + $0x350] sm:%s80] %v513
        %v515 = vld [vmem:[%s87 + $0x358] sm:%s80]
        %516 = vst [vmem:[%s88 + $0x354] sm:%s80] %v515
        %v517 = vld [vmem:[%s87 + $0x34c] sm:%s80]
        %518 = vst [vmem:[%s88 + $0x358] sm:%s80] %v517
        %v519 = vld [vmem:[%s87 + $0x35c] sm:%s80]
        %520 = vst [vmem:[%s88 + $0x35c] sm:%s80] %v519
        %v521 = vld [vmem:[%s87 + $0x360] sm:%s80]
        %522 = vst [vmem:[%s88 + $0x360] sm:%s80] %v521
        %v523 = vld [vmem:[%s87 + $0x370] sm:%s80]
        %524 = vst [vmem:[%s88 + $0x364] sm:%s80] %v523
        %v525 = vld [vmem:[%s87 + $0x364] sm:%s80]
        %526 = vst [vmem:[%s88 + $0x368] sm:%s80] %v525
        %v527 = vld [vmem:[%s87 + $0x374] sm:%s80]
        %528 = vst [vmem:[%s88 + $0x36c] sm:%s80] %v527
        %v529 = vld [vmem:[%s87 + $0x368] sm:%s80]
        %530 = vst [vmem:[%s88 + $0x370] sm:%s80] %v529
        %v531 = vld [vmem:[%s87 + $0x378] sm:%s80]
        %532 = vst [vmem:[%s88 + $0x374] sm:%s80] %v531
        %v533 = vld [vmem:[%s87 + $0x36c] sm:%s80]
        %534 = vst [vmem:[%s88 + $0x378] sm:%s80] %v533
        %v535 = vld [vmem:[%s87 + $0x37c] sm:%s80]
        %536 = vst [vmem:[%s88 + $0x37c] sm:%s80] %v535
        %v537 = vld [vmem:[%s87 + $0x380] sm:%s80]
        %538 = vst [vmem:[%s88 + $0x380] sm:%s80] %v537
        %v539 = vld [vmem:[%s87 + $0x390] sm:%s80]
        %540 = vst [vmem:[%s88 + $0x384] sm:%s80] %v539
        %v541 = vld [vmem:[%s87 + $0x384] sm:%s80]
        %542 = vst [vmem:[%s88 + $0x388] sm:%s80] %v541
        %v543 = vld [vmem:[%s87 + $0x394] sm:%s80]
        %544 = vst [vmem:[%s88 + $0x38c] sm:%s80] %v543
        %v545 = vld [vmem:[%s87 + $0x388] sm:%s80]
        %546 = vst [vmem:[%s88 + $0x390] sm:%s80] %v545
        %v547 = vld [vmem:[%s87 + $0x398] sm:%s80]
        %548 = vst [vmem:[%s88 + $0x394] sm:%s80] %v547
        %v549 = vld [vmem:[%s87 + $0x38c] sm:%s80]
        %550 = vst [vmem:[%s88 + $0x398] sm:%s80] %v549
        %v551 = vld [vmem:[%s87 + $0x39c] sm:%s80]
        %552 = vst [vmem:[%s88 + $0x39c] sm:%s80] %v551
        %v553 = vld [vmem:[%s87 + $0x3a0] sm:%s80]
        %554 = vst [vmem:[%s88 + $0x3a0] sm:%s80] %v553
        %v555 = vld [vmem:[%s87 + $0x3b0] sm:%s80]
        %556 = vst [vmem:[%s88 + $0x3a4] sm:%s80] %v555
        %v557 = vld [vmem:[%s87 + $0x3a4] sm:%s80]
        %558 = vst [vmem:[%s88 + $0x3a8] sm:%s80] %v557
        %v559 = vld [vmem:[%s87 + $0x3b4] sm:%s80]
        %560 = vst [vmem:[%s88 + $0x3ac] sm:%s80] %v559
        %v561 = vld [vmem:[%s87 + $0x3a8] sm:%s80]
        %562 = vst [vmem:[%s88 + $0x3b0] sm:%s80] %v561
        %v563 = vld [vmem:[%s87 + $0x3b8] sm:%s80]
        %564 = vst [vmem:[%s88 + $0x3b4] sm:%s80] %v563
        %v565 = vld [vmem:[%s87 + $0x3ac] sm:%s80]
        %566 = vst [vmem:[%s88 + $0x3b8] sm:%s80] %v565
        %v567 = vld [vmem:[%s87 + $0x3bc] sm:%s80]
        %568 = vst [vmem:[%s88 + $0x3bc] sm:%s80] %v567
        %v569 = vld [vmem:[%s87 + $0x3c0] sm:%s80]
        %570 = vst [vmem:[%s88 + $0x3c0] sm:%s80] %v569
        %v571 = vld [vmem:[%s87 + $0x3d0] sm:%s80]
        %572 = vst [vmem:[%s88 + $0x3c4] sm:%s80] %v571
        %v573 = vld [vmem:[%s87 + $0x3c4] sm:%s80]
        %574 = vst [vmem:[%s88 + $0x3c8] sm:%s80] %v573
        %v575 = vld [vmem:[%s87 + $0x3d4] sm:%s80]
        %576 = vst [vmem:[%s88 + $0x3cc] sm:%s80] %v575
        %v577 = vld [vmem:[%s87 + $0x3c8] sm:%s80]
        %578 = vst [vmem:[%s88 + $0x3d0] sm:%s80] %v577
        %v579 = vld [vmem:[%s87 + $0x3d8] sm:%s80]
        %580 = vst [vmem:[%s88 + $0x3d4] sm:%s80] %v579
        %v581 = vld [vmem:[%s87 + $0x3cc] sm:%s80]
        %582 = vst [vmem:[%s88 + $0x3d8] sm:%s80] %v581
        %v583 = vld [vmem:[%s87 + $0x3dc] sm:%s80]
        %584 = vst [vmem:[%s88 + $0x3dc] sm:%s80] %v583
        %v585 = vld [vmem:[%s87 + $0x3e0] sm:%s80]
        %586 = vst [vmem:[%s88 + $0x3e0] sm:%s80] %v585
        %v587 = vld [vmem:[%s87 + $0x3f0] sm:%s80]
        %588 = vst [vmem:[%s88 + $0x3e4] sm:%s80] %v587
        %v589 = vld [vmem:[%s87 + $0x3e4] sm:%s80]
        %590 = vst [vmem:[%s88 + $0x3e8] sm:%s80] %v589
        %v591 = vld [vmem:[%s87 + $0x3f4] sm:%s80]
        %592 = vst [vmem:[%s88 + $0x3ec] sm:%s80] %v591
        %v593 = vld [vmem:[%s87 + $0x3e8] sm:%s80]
        %594 = vst [vmem:[%s88 + $0x3f0] sm:%s80] %v593
        %v595 = vld [vmem:[%s87 + $0x3f8] sm:%s80]
        %596 = vst [vmem:[%s88 + $0x3f4] sm:%s80] %v595
        %v597 = vld [vmem:[%s87 + $0x3ec] sm:%s80]
        %598 = vst [vmem:[%s88 + $0x3f8] sm:%s80] %v597
        %v599 = vld [vmem:[%s87 + $0x3fc] sm:%s80]
        %600 = vst [vmem:[%s88 + $0x3fc] sm:%s80] %v599
      $region66: #{forward.5} parent=60 // loop_footer
        %s86 = sadd.s32 1, %s82
      $region67: #{forward.5} parent=60 // loop_footer_branch
        %81 = sbr.rel target = $region63
      $region68: #{forward.5} parent=60 // loop_exit
        _
    $region61: #{forward.5} parent=1 // pred_fallthru
      _
    // Predicated region
    $region87: #{forward.5} parent=1 // pred_check
      _
    $region88: #{forward.5} parent=1 // pred_check_branch
      %1142 = sbr.rel (0) target = $region90
    $region89: #{forward.5} parent=1 // pred_region
      %1143 = vsyncadd [#allocation7], 16384
    $region90: #{forward.5} parent=1 // pred_fallthru
      _
    %s1144 = scalar_lea.sflag [#allocation7], 1
    %s1146 = sshll.u32 1, 14
    %s1147 = sxor.u32 4294967295, %s1146
    %s1149 = sld [smem:[#allocation0]]
    %s1150 = sadd.s32 2, %s1149
    %s1152 = sshll.u32 7, 26
    %s1153 = sxor.u32 4294967295, %s1152
    %s1154 = sand.u32 0, %s1153
    %s1155 = sshll.u32 %s1150, 26
    %s1156 = sor.u32 %s1154, %s1155
    %s1157 = sshll.u32 [#allocation3], 4
    %s1158 = int_to_ptr.vmem [resolvable:$true] %s1157
    %1161 = sst [smem:[#allocation14]] 256
    %s1162 = scalar_lea.smem [#allocation14], 1
    %1163 = sst [smem:[%s1162]] 256
    %s1164 = scalar_lea.smem [#allocation14], 2
    %1165 = sst [smem:[%s1164]] 2
    %s1166 = scalar_lea.smem [#allocation14], 3
    %1167 = sst [smem:[%s1166]] 64
    %s1168 = scalar_lea.smem [#allocation14], 4
    %1169 = sst [smem:[%s1168]] 128
    %s1170 = scalar_lea.smem [#allocation14], 5
    %1171 = sst [smem:[%s1170]] 2
    %s1172 = scalar_lea.smem [#allocation14], 6
    %1173 = sst [smem:[%s1172]] 128
    %s1174 = scalar_lea.smem [#allocation14], 7
    %1175 = sst [smem:[%s1174]] 64
    %s1176 = scalar_lea.smem [#allocation14], 8
    %1177 = sst [smem:[%s1176]] 4
    %1179 = dma.general %s12, 8192, %s1158, %s1144, [#allocation13], [#allocation14], %s1156, 0
    %s1180 = scalar_lea.sflag [#allocation7], 2
    %s1182 = sshll.u32 1, 14
    %s1183 = sxor.u32 4294967295, %s1182
    %s1185 = sadd.s32 2, %s1149
    %s1187 = sshll.u32 7, 26
    %s1188 = sxor.u32 4294967295, %s1187
    %s1189 = sand.u32 0, %s1188
    %s1190 = sshll.u32 %s1185, 26
    %s1191 = sor.u32 %s1189, %s1190
    %s1192 = sshll.u32 [#allocation4], 4
    %s1193 = int_to_ptr.vmem [resolvable:$true] %s1192
    %1196 = sst [smem:[#allocation16]] 512
    %s1197 = scalar_lea.smem [#allocation16], 1
    %1198 = sst [smem:[%s1197]] 512
    %s1199 = scalar_lea.smem [#allocation16], 2
    %1200 = sst [smem:[%s1199]] 4
    %s1201 = scalar_lea.smem [#allocation16], 3
    %1202 = sst [smem:[%s1201]] 64
    %s1203 = scalar_lea.smem [#allocation16], 4
    %1204 = sst [smem:[%s1203]] 128
    %s1205 = scalar_lea.smem [#allocation16], 5
    %1206 = sst [smem:[%s1205]] 2
    %s1207 = scalar_lea.smem [#allocation16], 6
    %1208 = sst [smem:[%s1207]] 256
    %s1209 = scalar_lea.smem [#allocation16], 7
    %1210 = sst [smem:[%s1209]] 64
    %s1211 = scalar_lea.smem [#allocation16], 8
    %1212 = sst [smem:[%s1211]] 4
    %1214 = dma.general %s13, 8192, %s1193, %s1180, [#allocation15], [#allocation16], %s1191, 0
    %s1215 = scalar_lea.sflag [#allocation7], 3
    %p1217 = scmp.lt.u32.totalorder 4, 8
    %p1218 = pneg %p1217
    // Predicated region
    $region91: #{forward.5} parent=1 // pred_check
      _
    $region92: #{forward.5} parent=1 // pred_check_branch
      %1220 = sbr.rel (%p1217) target = $region94
    $region93: #{forward.5} parent=1 // pred_region
      %s1361 = sand.u32 4, 7
      %p1362 = scmp.eq.s32.totalorder %s1361, 0
      %p1363 = pneg %p1362
      // Predicated region
      $region106: #{forward.5} parent=93 // pred_check
        _
      $region107: #{forward.5} parent=93 // pred_check_branch
        %1365 = sbr.rel (%p1362) target = $region109
      $region108: #{forward.5} parent=93 // pred_region
        %s1366 = sand.u32 4, 7
        %s1367 = ssub.s32 4, %s1366
        %s1368 = scalar_lea.vmem %s14, %s1367
        %s1369 = ssub.s32 4, %s1366
        %s1370 = scalar_lea.vmem [#allocation5], %s1369
        loop: start=0, step=1, limit=1
        $region110: #{forward.5} parent=108 // loop_pre_header
          _
        $region111: #{forward.5} parent=108 // loop_header
          %s1372 = sphi 0, %s1376
          %p1373 = scmp.ge.s32.totalorder %s1372, 1
          %s1377 = sphi %s14, %s14
          %s1378 = sphi [#allocation5], [#allocation5]
        $region112: #{forward.5} parent=108 // loop_header_branch
          %1375 = sbr.rel (%p1373) target = $region116
        $region113: #{forward.5} parent=108 // loop_body
          _
        $region114: #{forward.5} parent=108 // loop_footer
          %s1376 = sadd.s32 1, %s1372
        $region115: #{forward.5} parent=108 // loop_footer_branch
          %1371 = sbr.rel target = $region111
        $region116: #{forward.5} parent=108 // loop_exit
          _
        %s1379 = sshllo.u32 0, %s1366
        loop: start=0, step=1, limit=1
        $region117: #{forward.5} parent=108 // loop_pre_header
          _
        $region118: #{forward.5} parent=108 // loop_header
          %s1381 = sphi 0, %s1385
          %p1382 = scmp.ge.s32.totalorder %s1381, 1
          %s1386 = sphi %s1368, %s1368
          %s1387 = sphi %s1370, %s1370
        $region119: #{forward.5} parent=108 // loop_header_branch
          %1384 = sbr.rel (%p1382) target = $region123
        $region120: #{forward.5} parent=108 // loop_body
          %v1388 = vld [vmem:[%s1386] sm:%s1379]
          %1389 = vst [vmem:[%s1387] sm:%s1379] %v1388
          %v1390 = vld [vmem:[%s1386 + $0x10] sm:%s1379]
          %1391 = vst [vmem:[%s1387 + $0x4] sm:%s1379] %v1390
          %v1392 = vld [vmem:[%s1386 + $0x4] sm:%s1379]
          %1393 = vst [vmem:[%s1387 + $0x8] sm:%s1379] %v1392
          %v1394 = vld [vmem:[%s1386 + $0x14] sm:%s1379]
          %1395 = vst [vmem:[%s1387 + $0xc] sm:%s1379] %v1394
          %v1396 = vld [vmem:[%s1386 + $0x8] sm:%s1379]
          %1397 = vst [vmem:[%s1387 + $0x10] sm:%s1379] %v1396
          %v1398 = vld [vmem:[%s1386 + $0x18] sm:%s1379]
          %1399 = vst [vmem:[%s1387 + $0x14] sm:%s1379] %v1398
          %v1400 = vld [vmem:[%s1386 + $0xc] sm:%s1379]
          %1401 = vst [vmem:[%s1387 + $0x18] sm:%s1379] %v1400
          %v1402 = vld [vmem:[%s1386 + $0x1c] sm:%s1379]
          %1403 = vst [vmem:[%s1387 + $0x1c] sm:%s1379] %v1402
          %v1404 = vld [vmem:[%s1386 + $0x20] sm:%s1379]
          %1405 = vst [vmem:[%s1387 + $0x20] sm:%s1379] %v1404
          %v1406 = vld [vmem:[%s1386 + $0x30] sm:%s1379]
          %1407 = vst [vmem:[%s1387 + $0x24] sm:%s1379] %v1406
          %v1408 = vld [vmem:[%s1386 + $0x24] sm:%s1379]
          %1409 = vst [vmem:[%s1387 + $0x28] sm:%s1379] %v1408
          %v1410 = vld [vmem:[%s1386 + $0x34] sm:%s1379]
          %1411 = vst [vmem:[%s1387 + $0x2c] sm:%s1379] %v1410
          %v1412 = vld [vmem:[%s1386 + $0x28] sm:%s1379]
          %1413 = vst [vmem:[%s1387 + $0x30] sm:%s1379] %v1412
          %v1414 = vld [vmem:[%s1386 + $0x38] sm:%s1379]
          %1415 = vst [vmem:[%s1387 + $0x34] sm:%s1379] %v1414
          %v1416 = vld [vmem:[%s1386 + $0x2c] sm:%s1379]
          %1417 = vst [vmem:[%s1387 + $0x38] sm:%s1379] %v1416
          %v1418 = vld [vmem:[%s1386 + $0x3c] sm:%s1379]
          %1419 = vst [vmem:[%s1387 + $0x3c] sm:%s1379] %v1418
          %v1420 = vld [vmem:[%s1386 + $0x40] sm:%s1379]
          %1421 = vst [vmem:[%s1387 + $0x40] sm:%s1379] %v1420
          %v1422 = vld [vmem:[%s1386 + $0x50] sm:%s1379]
          %1423 = vst [vmem:[%s1387 + $0x44] sm:%s1379] %v1422
          %v1424 = vld [vmem:[%s1386 + $0x44] sm:%s1379]
          %1425 = vst [vmem:[%s1387 + $0x48] sm:%s1379] %v1424
          %v1426 = vld [vmem:[%s1386 + $0x54] sm:%s1379]
          %1427 = vst [vmem:[%s1387 + $0x4c] sm:%s1379] %v1426
          %v1428 = vld [vmem:[%s1386 + $0x48] sm:%s1379]
          %1429 = vst [vmem:[%s1387 + $0x50] sm:%s1379] %v1428
          %v1430 = vld [vmem:[%s1386 + $0x58] sm:%s1379]
          %1431 = vst [vmem:[%s1387 + $0x54] sm:%s1379] %v1430
          %v1432 = vld [vmem:[%s1386 + $0x4c] sm:%s1379]
          %1433 = vst [vmem:[%s1387 + $0x58] sm:%s1379] %v1432
          %v1434 = vld [vmem:[%s1386 + $0x5c] sm:%s1379]
          %1435 = vst [vmem:[%s1387 + $0x5c] sm:%s1379] %v1434
          %v1436 = vld [vmem:[%s1386 + $0x60] sm:%s1379]
          %1437 = vst [vmem:[%s1387 + $0x60] sm:%s1379] %v1436
          %v1438 = vld [vmem:[%s1386 + $0x70] sm:%s1379]
          %1439 = vst [vmem:[%s1387 + $0x64] sm:%s1379] %v1438
          %v1440 = vld [vmem:[%s1386 + $0x64] sm:%s1379]
          %1441 = vst [vmem:[%s1387 + $0x68] sm:%s1379] %v1440
          %v1442 = vld [vmem:[%s1386 + $0x74] sm:%s1379]
          %1443 = vst [vmem:[%s1387 + $0x6c] sm:%s1379] %v1442
          %v1444 = vld [vmem:[%s1386 + $0x68] sm:%s1379]
          %1445 = vst [vmem:[%s1387 + $0x70] sm:%s1379] %v1444
          %v1446 = vld [vmem:[%s1386 + $0x78] sm:%s1379]
          %1447 = vst [vmem:[%s1387 + $0x74] sm:%s1379] %v1446
          %v1448 = vld [vmem:[%s1386 + $0x6c] sm:%s1379]
          %1449 = vst [vmem:[%s1387 + $0x78] sm:%s1379] %v1448
          %v1450 = vld [vmem:[%s1386 + $0x7c] sm:%s1379]
          %1451 = vst [vmem:[%s1387 + $0x7c] sm:%s1379] %v1450
          %v1452 = vld [vmem:[%s1386 + $0x80] sm:%s1379]
          %1453 = vst [vmem:[%s1387 + $0x80] sm:%s1379] %v1452
          %v1454 = vld [vmem:[%s1386 + $0x90] sm:%s1379]
          %1455 = vst [vmem:[%s1387 + $0x84] sm:%s1379] %v1454
          %v1456 = vld [vmem:[%s1386 + $0x84] sm:%s1379]
          %1457 = vst [vmem:[%s1387 + $0x88] sm:%s1379] %v1456
          %v1458 = vld [vmem:[%s1386 + $0x94] sm:%s1379]
          %1459 = vst [vmem:[%s1387 + $0x8c] sm:%s1379] %v1458
          %v1460 = vld [vmem:[%s1386 + $0x88] sm:%s1379]
          %1461 = vst [vmem:[%s1387 + $0x90] sm:%s1379] %v1460
          %v1462 = vld [vmem:[%s1386 + $0x98] sm:%s1379]
          %1463 = vst [vmem:[%s1387 + $0x94] sm:%s1379] %v1462
          %v1464 = vld [vmem:[%s1386 + $0x8c] sm:%s1379]
          %1465 = vst [vmem:[%s1387 + $0x98] sm:%s1379] %v1464
          %v1466 = vld [vmem:[%s1386 + $0x9c] sm:%s1379]
          %1467 = vst [vmem:[%s1387 + $0x9c] sm:%s1379] %v1466
          %v1468 = vld [vmem:[%s1386 + $0xa0] sm:%s1379]
          %1469 = vst [vmem:[%s1387 + $0xa0] sm:%s1379] %v1468
          %v1470 = vld [vmem:[%s1386 + $0xb0] sm:%s1379]
          %1471 = vst [vmem:[%s1387 + $0xa4] sm:%s1379] %v1470
          %v1472 = vld [vmem:[%s1386 + $0xa4] sm:%s1379]
          %1473 = vst [vmem:[%s1387 + $0xa8] sm:%s1379] %v1472
          %v1474 = vld [vmem:[%s1386 + $0xb4] sm:%s1379]
          %1475 = vst [vmem:[%s1387 + $0xac] sm:%s1379] %v1474
          %v1476 = vld [vmem:[%s1386 + $0xa8] sm:%s1379]
          %1477 = vst [vmem:[%s1387 + $0xb0] sm:%s1379] %v1476
          %v1478 = vld [vmem:[%s1386 + $0xb8] sm:%s1379]
          %1479 = vst [vmem:[%s1387 + $0xb4] sm:%s1379] %v1478
          %v1480 = vld [vmem:[%s1386 + $0xac] sm:%s1379]
          %1481 = vst [vmem:[%s1387 + $0xb8] sm:%s1379] %v1480
          %v1482 = vld [vmem:[%s1386 + $0xbc] sm:%s1379]
          %1483 = vst [vmem:[%s1387 + $0xbc] sm:%s1379] %v1482
          %v1484 = vld [vmem:[%s1386 + $0xc0] sm:%s1379]
          %1485 = vst [vmem:[%s1387 + $0xc0] sm:%s1379] %v1484
          %v1486 = vld [vmem:[%s1386 + $0xd0] sm:%s1379]
          %1487 = vst [vmem:[%s1387 + $0xc4] sm:%s1379] %v1486
          %v1488 = vld [vmem:[%s1386 + $0xc4] sm:%s1379]
          %1489 = vst [vmem:[%s1387 + $0xc8] sm:%s1379] %v1488
          %v1490 = vld [vmem:[%s1386 + $0xd4] sm:%s1379]
          %1491 = vst [vmem:[%s1387 + $0xcc] sm:%s1379] %v1490
          %v1492 = vld [vmem:[%s1386 + $0xc8] sm:%s1379]
          %1493 = vst [vmem:[%s1387 + $0xd0] sm:%s1379] %v1492
          %v1494 = vld [vmem:[%s1386 + $0xd8] sm:%s1379]
          %1495 = vst [vmem:[%s1387 + $0xd4] sm:%s1379] %v1494
          %v1496 = vld [vmem:[%s1386 + $0xcc] sm:%s1379]
          %1497 = vst [vmem:[%s1387 + $0xd8] sm:%s1379] %v1496
          %v1498 = vld [vmem:[%s1386 + $0xdc] sm:%s1379]
          %1499 = vst [vmem:[%s1387 + $0xdc] sm:%s1379] %v1498
          %v1500 = vld [vmem:[%s1386 + $0xe0] sm:%s1379]
          %1501 = vst [vmem:[%s1387 + $0xe0] sm:%s1379] %v1500
          %v1502 = vld [vmem:[%s1386 + $0xf0] sm:%s1379]
          %1503 = vst [vmem:[%s1387 + $0xe4] sm:%s1379] %v1502
          %v1504 = vld [vmem:[%s1386 + $0xe4] sm:%s1379]
          %1505 = vst [vmem:[%s1387 + $0xe8] sm:%s1379] %v1504
          %v1506 = vld [vmem:[%s1386 + $0xf4] sm:%s1379]
          %1507 = vst [vmem:[%s1387 + $0xec] sm:%s1379] %v1506
          %v1508 = vld [vmem:[%s1386 + $0xe8] sm:%s1379]
          %1509 = vst [vmem:[%s1387 + $0xf0] sm:%s1379] %v1508
          %v1510 = vld [vmem:[%s1386 + $0xf8] sm:%s1379]
          %1511 = vst [vmem:[%s1387 + $0xf4] sm:%s1379] %v1510
          %v1512 = vld [vmem:[%s1386 + $0xec] sm:%s1379]
          %1513 = vst [vmem:[%s1387 + $0xf8] sm:%s1379] %v1512
          %v1514 = vld [vmem:[%s1386 + $0xfc] sm:%s1379]
          %1515 = vst [vmem:[%s1387 + $0xfc] sm:%s1379] %v1514
        $region121: #{forward.5} parent=108 // loop_footer
          %s1385 = sadd.s32 1, %s1381
        $region122: #{forward.5} parent=108 // loop_footer_branch
          %1380 = sbr.rel target = $region118
        $region123: #{forward.5} parent=108 // loop_exit
          _
      $region109: #{forward.5} parent=93 // pred_fallthru
        _
    $region94: #{forward.5} parent=1 // pred_fallthru
      _
    // Predicated region
    $region95: #{forward.5} parent=1 // pred_check
      %p1221 = pneg %p1217
    $region96: #{forward.5} parent=1 // pred_check_branch
      %1223 = sbr.rel (%p1221) target = $region98
    $region97: #{forward.5} parent=1 // pred_region
      %s1224 = sshllo.u32 0, 4
      loop: start=0, step=1, limit=1
      $region99: #{forward.5} parent=97 // loop_pre_header
        _
      $region100: #{forward.5} parent=97 // loop_header
        %s1226 = sphi 0, %s1230
        %p1227 = scmp.ge.s32.totalorder %s1226, 1
        %s1231 = sphi %s14, %s14
        %s1232 = sphi [#allocation5], [#allocation5]
      $region101: #{forward.5} parent=97 // loop_header_branch
        %1229 = sbr.rel (%p1227) target = $region105
      $region102: #{forward.5} parent=97 // loop_body
        %v1233 = vld [vmem:[%s1231] sm:%s1224]
        %1234 = vst [vmem:[%s1232] sm:%s1224] %v1233
        %v1235 = vld [vmem:[%s1231 + $0x10] sm:%s1224]
        %1236 = vst [vmem:[%s1232 + $0x4] sm:%s1224] %v1235
        %v1237 = vld [vmem:[%s1231 + $0x4] sm:%s1224]
        %1238 = vst [vmem:[%s1232 + $0x8] sm:%s1224] %v1237
        %v1239 = vld [vmem:[%s1231 + $0x14] sm:%s1224]
        %1240 = vst [vmem:[%s1232 + $0xc] sm:%s1224] %v1239
        %v1241 = vld [vmem:[%s1231 + $0x8] sm:%s1224]
        %1242 = vst [vmem:[%s1232 + $0x10] sm:%s1224] %v1241
        %v1243 = vld [vmem:[%s1231 + $0x18] sm:%s1224]
        %1244 = vst [vmem:[%s1232 + $0x14] sm:%s1224] %v1243
        %v1245 = vld [vmem:[%s1231 + $0xc] sm:%s1224]
        %1246 = vst [vmem:[%s1232 + $0x18] sm:%s1224] %v1245
        %v1247 = vld [vmem:[%s1231 + $0x1c] sm:%s1224]
        %1248 = vst [vmem:[%s1232 + $0x1c] sm:%s1224] %v1247
        %v1249 = vld [vmem:[%s1231 + $0x20] sm:%s1224]
        %1250 = vst [vmem:[%s1232 + $0x20] sm:%s1224] %v1249
        %v1251 = vld [vmem:[%s1231 + $0x30] sm:%s1224]
        %1252 = vst [vmem:[%s1232 + $0x24] sm:%s1224] %v1251
        %v1253 = vld [vmem:[%s1231 + $0x24] sm:%s1224]
        %1254 = vst [vmem:[%s1232 + $0x28] sm:%s1224] %v1253
        %v1255 = vld [vmem:[%s1231 + $0x34] sm:%s1224]
        %1256 = vst [vmem:[%s1232 + $0x2c] sm:%s1224] %v1255
        %v1257 = vld [vmem:[%s1231 + $0x28] sm:%s1224]
        %1258 = vst [vmem:[%s1232 + $0x30] sm:%s1224] %v1257
        %v1259 = vld [vmem:[%s1231 + $0x38] sm:%s1224]
        %1260 = vst [vmem:[%s1232 + $0x34] sm:%s1224] %v1259
        %v1261 = vld [vmem:[%s1231 + $0x2c] sm:%s1224]
        %1262 = vst [vmem:[%s1232 + $0x38] sm:%s1224] %v1261
        %v1263 = vld [vmem:[%s1231 + $0x3c] sm:%s1224]
        %1264 = vst [vmem:[%s1232 + $0x3c] sm:%s1224] %v1263
        %v1265 = vld [vmem:[%s1231 + $0x40] sm:%s1224]
        %1266 = vst [vmem:[%s1232 + $0x40] sm:%s1224] %v1265
        %v1267 = vld [vmem:[%s1231 + $0x50] sm:%s1224]
        %1268 = vst [vmem:[%s1232 + $0x44] sm:%s1224] %v1267
        %v1269 = vld [vmem:[%s1231 + $0x44] sm:%s1224]
        %1270 = vst [vmem:[%s1232 + $0x48] sm:%s1224] %v1269
        %v1271 = vld [vmem:[%s1231 + $0x54] sm:%s1224]
        %1272 = vst [vmem:[%s1232 + $0x4c] sm:%s1224] %v1271
        %v1273 = vld [vmem:[%s1231 + $0x48] sm:%s1224]
        %1274 = vst [vmem:[%s1232 + $0x50] sm:%s1224] %v1273
        %v1275 = vld [vmem:[%s1231 + $0x58] sm:%s1224]
        %1276 = vst [vmem:[%s1232 + $0x54] sm:%s1224] %v1275
        %v1277 = vld [vmem:[%s1231 + $0x4c] sm:%s1224]
        %1278 = vst [vmem:[%s1232 + $0x58] sm:%s1224] %v1277
        %v1279 = vld [vmem:[%s1231 + $0x5c] sm:%s1224]
        %1280 = vst [vmem:[%s1232 + $0x5c] sm:%s1224] %v1279
        %v1281 = vld [vmem:[%s1231 + $0x60] sm:%s1224]
        %1282 = vst [vmem:[%s1232 + $0x60] sm:%s1224] %v1281
        %v1283 = vld [vmem:[%s1231 + $0x70] sm:%s1224]
        %1284 = vst [vmem:[%s1232 + $0x64] sm:%s1224] %v1283
        %v1285 = vld [vmem:[%s1231 + $0x64] sm:%s1224]
        %1286 = vst [vmem:[%s1232 + $0x68] sm:%s1224] %v1285
        %v1287 = vld [vmem:[%s1231 + $0x74] sm:%s1224]
        %1288 = vst [vmem:[%s1232 + $0x6c] sm:%s1224] %v1287
        %v1289 = vld [vmem:[%s1231 + $0x68] sm:%s1224]
        %1290 = vst [vmem:[%s1232 + $0x70] sm:%s1224] %v1289
        %v1291 = vld [vmem:[%s1231 + $0x78] sm:%s1224]
        %1292 = vst [vmem:[%s1232 + $0x74] sm:%s1224] %v1291
        %v1293 = vld [vmem:[%s1231 + $0x6c] sm:%s1224]
        %1294 = vst [vmem:[%s1232 + $0x78] sm:%s1224] %v1293
        %v1295 = vld [vmem:[%s1231 + $0x7c] sm:%s1224]
        %1296 = vst [vmem:[%s1232 + $0x7c] sm:%s1224] %v1295
        %v1297 = vld [vmem:[%s1231 + $0x80] sm:%s1224]
        %1298 = vst [vmem:[%s1232 + $0x80] sm:%s1224] %v1297
        %v1299 = vld [vmem:[%s1231 + $0x90] sm:%s1224]
        %1300 = vst [vmem:[%s1232 + $0x84] sm:%s1224] %v1299
        %v1301 = vld [vmem:[%s1231 + $0x84] sm:%s1224]
        %1302 = vst [vmem:[%s1232 + $0x88] sm:%s1224] %v1301
        %v1303 = vld [vmem:[%s1231 + $0x94] sm:%s1224]
        %1304 = vst [vmem:[%s1232 + $0x8c] sm:%s1224] %v1303
        %v1305 = vld [vmem:[%s1231 + $0x88] sm:%s1224]
        %1306 = vst [vmem:[%s1232 + $0x90] sm:%s1224] %v1305
        %v1307 = vld [vmem:[%s1231 + $0x98] sm:%s1224]
        %1308 = vst [vmem:[%s1232 + $0x94] sm:%s1224] %v1307
        %v1309 = vld [vmem:[%s1231 + $0x8c] sm:%s1224]
        %1310 = vst [vmem:[%s1232 + $0x98] sm:%s1224] %v1309
        %v1311 = vld [vmem:[%s1231 + $0x9c] sm:%s1224]
        %1312 = vst [vmem:[%s1232 + $0x9c] sm:%s1224] %v1311
        %v1313 = vld [vmem:[%s1231 + $0xa0] sm:%s1224]
        %1314 = vst [vmem:[%s1232 + $0xa0] sm:%s1224] %v1313
        %v1315 = vld [vmem:[%s1231 + $0xb0] sm:%s1224]
        %1316 = vst [vmem:[%s1232 + $0xa4] sm:%s1224] %v1315
        %v1317 = vld [vmem:[%s1231 + $0xa4] sm:%s1224]
        %1318 = vst [vmem:[%s1232 + $0xa8] sm:%s1224] %v1317
        %v1319 = vld [vmem:[%s1231 + $0xb4] sm:%s1224]
        %1320 = vst [vmem:[%s1232 + $0xac] sm:%s1224] %v1319
        %v1321 = vld [vmem:[%s1231 + $0xa8] sm:%s1224]
        %1322 = vst [vmem:[%s1232 + $0xb0] sm:%s1224] %v1321
        %v1323 = vld [vmem:[%s1231 + $0xb8] sm:%s1224]
        %1324 = vst [vmem:[%s1232 + $0xb4] sm:%s1224] %v1323
        %v1325 = vld [vmem:[%s1231 + $0xac] sm:%s1224]
        %1326 = vst [vmem:[%s1232 + $0xb8] sm:%s1224] %v1325
        %v1327 = vld [vmem:[%s1231 + $0xbc] sm:%s1224]
        %1328 = vst [vmem:[%s1232 + $0xbc] sm:%s1224] %v1327
        %v1329 = vld [vmem:[%s1231 + $0xc0] sm:%s1224]
        %1330 = vst [vmem:[%s1232 + $0xc0] sm:%s1224] %v1329
        %v1331 = vld [vmem:[%s1231 + $0xd0] sm:%s1224]
        %1332 = vst [vmem:[%s1232 + $0xc4] sm:%s1224] %v1331
        %v1333 = vld [vmem:[%s1231 + $0xc4] sm:%s1224]
        %1334 = vst [vmem:[%s1232 + $0xc8] sm:%s1224] %v1333
        %v1335 = vld [vmem:[%s1231 + $0xd4] sm:%s1224]
        %1336 = vst [vmem:[%s1232 + $0xcc] sm:%s1224] %v1335
        %v1337 = vld [vmem:[%s1231 + $0xc8] sm:%s1224]
        %1338 = vst [vmem:[%s1232 + $0xd0] sm:%s1224] %v1337
        %v1339 = vld [vmem:[%s1231 + $0xd8] sm:%s1224]
        %1340 = vst [vmem:[%s1232 + $0xd4] sm:%s1224] %v1339
        %v1341 = vld [vmem:[%s1231 + $0xcc] sm:%s1224]
        %1342 = vst [vmem:[%s1232 + $0xd8] sm:%s1224] %v1341
        %v1343 = vld [vmem:[%s1231 + $0xdc] sm:%s1224]
        %1344 = vst [vmem:[%s1232 + $0xdc] sm:%s1224] %v1343
        %v1345 = vld [vmem:[%s1231 + $0xe0] sm:%s1224]
        %1346 = vst [vmem:[%s1232 + $0xe0] sm:%s1224] %v1345
        %v1347 = vld [vmem:[%s1231 + $0xf0] sm:%s1224]
        %1348 = vst [vmem:[%s1232 + $0xe4] sm:%s1224] %v1347
        %v1349 = vld [vmem:[%s1231 + $0xe4] sm:%s1224]
        %1350 = vst [vmem:[%s1232 + $0xe8] sm:%s1224] %v1349
        %v1351 = vld [vmem:[%s1231 + $0xf4] sm:%s1224]
        %1352 = vst [vmem:[%s1232 + $0xec] sm:%s1224] %v1351
        %v1353 = vld [vmem:[%s1231 + $0xe8] sm:%s1224]
        %1354 = vst [vmem:[%s1232 + $0xf0] sm:%s1224] %v1353
        %v1355 = vld [vmem:[%s1231 + $0xf8] sm:%s1224]
        %1356 = vst [vmem:[%s1232 + $0xf4] sm:%s1224] %v1355
        %v1357 = vld [vmem:[%s1231 + $0xec] sm:%s1224]
        %1358 = vst [vmem:[%s1232 + $0xf8] sm:%s1224] %v1357
        %v1359 = vld [vmem:[%s1231 + $0xfc] sm:%s1224]
        %1360 = vst [vmem:[%s1232 + $0xfc] sm:%s1224] %v1359
      $region103: #{forward.5} parent=97 // loop_footer
        %s1230 = sadd.s32 1, %s1226
      $region104: #{forward.5} parent=97 // loop_footer_branch
        %1225 = sbr.rel target = $region100
      $region105: #{forward.5} parent=97 // loop_exit
        _
    $region98: #{forward.5} parent=1 // pred_fallthru
      _
    // Predicated region
    $region124: #{forward.5} parent=1 // pred_check
      _
    $region125: #{forward.5} parent=1 // pred_check_branch
      %1518 = sbr.rel (0) target = $region127
    $region126: #{forward.5} parent=1 // pred_region
      %1519 = vsyncadd %s1215, 4096
    $region127: #{forward.5} parent=1 // pred_fallthru
      _
    %s1520 = scalar_lea.sflag [#allocation7], 4
    %s1522 = sshll.u32 1, 14
    %s1523 = sxor.u32 4294967295, %s1522
    %s1525 = sadd.s32 2, %s1149
    %s1527 = sshll.u32 7, 26
    %s1528 = sxor.u32 4294967295, %s1527
    %s1529 = sand.u32 0, %s1528
    %s1530 = sshll.u32 %s1525, 26
    %s1531 = sor.u32 %s1529, %s1530
    %s1532 = sshll.u32 [#allocation6], 4
    %s1533 = int_to_ptr.vmem [resolvable:$true] %s1532
    %1536 = sst [smem:[#allocation19]] 512
    %s1537 = scalar_lea.smem [#allocation19], 1
    %1538 = sst [smem:[%s1537]] 512
    %s1539 = scalar_lea.smem [#allocation19], 2
    %1540 = sst [smem:[%s1539]] 4
    %s1541 = scalar_lea.smem [#allocation19], 3
    %1542 = sst [smem:[%s1541]] 64
    %s1543 = scalar_lea.smem [#allocation19], 4
    %1544 = sst [smem:[%s1543]] 128
    %s1545 = scalar_lea.smem [#allocation19], 5
    %1546 = sst [smem:[%s1545]] 2
    %s1547 = scalar_lea.smem [#allocation19], 6
    %1548 = sst [smem:[%s1547]] 256
    %s1549 = scalar_lea.smem [#allocation19], 7
    %1550 = sst [smem:[%s1549]] 64
    %s1551 = scalar_lea.smem [#allocation19], 8
    %1552 = sst [smem:[%s1551]] 4
    %1554 = dma.general %s15, 16384, %s1533, %s1520, [#allocation18], [#allocation19], %s1531, 0
    %v1555 = vld [vmem:[%s0] sm:$0xff]
    %v1556 = vld [vmem:[%s0 + $0x8] sm:$0xff]
    %v1557 = vld [vmem:[%s0 + $0x10] sm:$0xff]
    %v1558 = vld [vmem:[%s0 + $0x18] sm:$0xff]
    %v1559 = vld [vmem:[%s0 + $0x20] sm:$0xff]
    %v1560 = vld [vmem:[%s0 + $0x28] sm:$0xff]
    %v1561 = vld [vmem:[%s0 + $0x30] sm:$0xff]
    %v1562 = vld [vmem:[%s0 + $0x38] sm:$0xff]
    %v1563 = vld [vmem:[%s0 + $0x40] sm:$0xff]
    %v1564 = vld [vmem:[%s0 + $0x48] sm:$0xff]
    %v1565 = vld [vmem:[%s3] sm:$0xff]
    %v1566 = vld [vmem:[%s2] sm:$0x1]
    %v1568 = vlaneseq
    %v1569 = vshrl.u32 %v1568, 7
    %v1570 = vsub.s32 0, %v1569
    %v1571 = vrot.slane %v1566, %v1570
    %vm1573 = vcmask 64512
    %v1575 = vsel %vm1573, %v1555, 0
    %v1578 = vsel %vm1573, %v1556, 0
    %v1581 = vsel %vm1573, %v1557, 0
    %v1584 = vsel %vm1573, %v1558, 0
    %v1587 = vsel %vm1573, %v1559, 0
    %v1590 = vsel %vm1573, %v1560, 0
    %v1593 = vsel %vm1573, %v1561, 0
    %v1596 = vsel %vm1573, %v1562, 0
    %v1599 = vsel %vm1573, %v1563, 0
    %v1602 = vsel %vm1573, %v1564, 0
    %1604 = vmatprep.subr.mxu0 0.0
    %1605 = vmatpush1.msra.mxu0 %v1565
    %1606 = vmatprep.subr.mxu0 0.0
    %1607 = vmatpush1.msra.mxu0 0.0
    %1608 = vmatprep.subr.mxu0 0.0
    %1609 = vmatpush1.msra.mxu0 0.0
    %1610 = vmatprep.subr.mxu0 0.0
    %1611 = vmatpush1.msra.mxu0 0.0
    %1612 = vmatprep.subr.mxu0 0.0
    %1613 = vmatpush1.msra.mxu0 0.0
    %1614 = vmatprep.subr.mxu0 0.0
    %1615 = vmatpush1.msra.mxu0 0.0
    %1616 = vmatprep.subr.mxu0 0.0
    %1617 = vmatpush1.msra.mxu0 0.0
    %1618 = vmatprep.subr.mxu0 0.0
    %1619 = vmatpush1.msra.mxu0 0.0
    %1620 = vmatprep.subr.mxu0 0.0
    %1621 = vmatpush1.msra.mxu0 0.0
    %1622 = vmatprep.subr.mxu0 0.0
    %1623 = vmatpush1.msra.mxu0 0.0
    %1624 = vmatprep.subr.mxu0 0.0
    %1625 = vmatpush1.msra.mxu0 0.0
    %1626 = vmatprep.subr.mxu0 0.0
    %1627 = vmatpush1.msra.mxu0 0.0
    %1628 = vmatprep.subr.mxu0 0.0
    %1629 = vmatpush1.msra.mxu0 0.0
    %1630 = vmatprep.subr.mxu0 0.0
    %1631 = vmatpush1.msra.mxu0 0.0
    %1632 = vmatprep.subr.mxu0 0.0
    %1633 = vmatpush1.msra.mxu0 0.0
    %1634 = vmatprep.subr.mxu0 0.0
    %1635 = vmatpush1.msra.mxu0 0.0
    %1636 = vmatprep.subr.mxu0 0.0
    %1637 = vmatpush1.msra.mxu0 0.0
    %1638 = vmatprep.subr.mxu0 0.0
    %1639 = vmatpush1.msra.mxu0 0.0
    %1640 = vmatprep.subr.mxu0 0.0
    %1641 = vmatpush1.msra.mxu0 0.0
    %1642 = vmatprep.subr.mxu0 0.0
    %1643 = vmatpush1.msra.mxu0 0.0
    %1644 = vmatprep.subr.mxu0 0.0
    %1645 = vmatpush1.msra.mxu0 0.0
    %1646 = vmatprep.subr.mxu0 0.0
    %1647 = vmatpush1.msra.mxu0 0.0
    %1648 = vmatprep.subr.mxu0 0.0
    %1649 = vmatpush1.msra.mxu0 0.0
    %1650 = vmatprep.subr.mxu0 0.0
    %1651 = vmatpush1.msra.mxu0 0.0
    %1652 = vmatprep.subr.mxu0 0.0
    %1653 = vmatpush1.msra.mxu0 0.0
    %1654 = vmatprep.subr.mxu0 0.0
    %1655 = vmatpush1.msra.mxu0 0.0
    %1656 = vmatprep.subr.mxu0 0.0
    %1657 = vmatpush1.msra.mxu0 0.0
    %1658 = vmatprep.subr.mxu0 0.0
    %1659 = vmatpush1.msra.mxu0 0.0
    %1660 = vmatprep.subr.mxu0 0.0
    %1661 = vmatpush1.msra.mxu0 0.0
    %1662 = vmatprep.subr.mxu0 0.0
    %1663 = vmatpush1.msra.mxu0 0.0
    %1664 = vmatprep.subr.mxu0 0.0
    %1665 = vmatpush1.msra.mxu0 0.0
    %1666 = vmatprep.subr.mxu0 0.0
    %1667 = vmatpush1.msra.mxu0 0.0
    %1668 = vmatprep.mubr.f32.mxu0 0.0
    %1669 = vmatmul.mubr.f32.gmra.mrb[0].mxu0 %v1575
    %v1670 = vpop.f32.mrb[0].mxu0
    %v1671 = vadd.f32 %v1571, %v1670
    %v1672 = vpop.f32.mrb[0].mxu0
    %1673 = vmatprep.mubr.f32.mxu0 0.0
    %1674 = vmatmul.mubr.f32.gmra.mrb[0].mxu0 %v1578
    %v1675 = vpop.f32.mrb[0].mxu0
    %v1676 = vadd.f32 %v1571, %v1675
    %v1677 = vpop.f32.mrb[0].mxu0
    %1678 = vmatprep.mubr.f32.mxu0 0.0
    %1679 = vmatmul.mubr.f32.gmra.mrb[0].mxu0 %v1581
    %v1680 = vpop.f32.mrb[0].mxu0
    %v1681 = vadd.f32 %v1571, %v1680
    %v1682 = vpop.f32.mrb[0].mxu0
    %1683 = vmatprep.mubr.f32.mxu0 0.0
    %1684 = vmatmul.mubr.f32.gmra.mrb[0].mxu0 %v1584
    %v1685 = vpop.f32.mrb[0].mxu0
    %v1686 = vadd.f32 %v1571, %v1685
    %v1687 = vpop.f32.mrb[0].mxu0
    %1688 = vmatprep.mubr.f32.mxu0 0.0
    %1689 = vmatmul.mubr.f32.gmra.mrb[0].mxu0 %v1587
    %v1690 = vpop.f32.mrb[0].mxu0
    %v1691 = vadd.f32 %v1571, %v1690
    %v1692 = vpop.f32.mrb[0].mxu0
    %1693 = vmatprep.mubr.f32.mxu0 0.0
    %1694 = vmatmul.mubr.f32.gmra.mrb[0].mxu0 %v1590
    %v1695 = vpop.f32.mrb[0].mxu0
    %v1696 = vadd.f32 %v1571, %v1695
    %v1697 = vpop.f32.mrb[0].mxu0
    %1698 = vmatprep.mubr.f32.mxu0 0.0
    %1699 = vmatmul.mubr.f32.gmra.mrb[0].mxu0 %v1593
    %v1700 = vpop.f32.mrb[0].mxu0
    %v1701 = vadd.f32 %v1571, %v1700
    %v1702 = vpop.f32.mrb[0].mxu0
    %1703 = vmatprep.mubr.f32.mxu0 0.0
    %1704 = vmatmul.mubr.f32.gmra.mrb[0].mxu0 %v1596
    %v1705 = vpop.f32.mrb[0].mxu0
    %v1706 = vadd.f32 %v1571, %v1705
    %v1707 = vpop.f32.mrb[0].mxu0
    %1708 = vmatprep.mubr.f32.mxu0 0.0
    %1709 = vmatmul.mubr.f32.gmra.mrb[0].mxu0 %v1599
    %v1710 = vpop.f32.mrb[0].mxu0
    %v1711 = vadd.f32 %v1571, %v1710
    %v1712 = vpop.f32.mrb[0].mxu0
    %1713 = vmatprep.mubr.f32.mxu0 0.0
    %1714 = vmatmul.mubr.f32.gmra.mrb[0].mxu0 %v1602
    %v1715 = vpop.f32.mrb[0].mxu0
    %v1716 = vadd.f32 %v1571, %v1715
    %v1717 = vpop.f32.mrb[0].mxu0
    %1718 = vdwg.mxu0
    %v1719 = vmax.f32 %v1671, 0.0
    %v1720 = vmax.f32 %v1676, 0.0
    %v1721 = vmax.f32 %v1681, 0.0
    %v1722 = vmax.f32 %v1686, 0.0
    %v1723 = vmax.f32 %v1691, 0.0
    %v1724 = vmax.f32 %v1696, 0.0
    %v1725 = vmax.f32 %v1701, 0.0
    %v1726 = vmax.f32 %v1706, 0.0
    %v1727 = vmax.f32 %v1711, 0.0
    %v1728 = vmax.f32 %v1716, 0.0
    %v1729 = vld [vmem:[%s4] sm:$0xff]
    %v1730 = vld [vmem:[%s4 + $0x8] sm:$0xff]
    %v1731 = vld [vmem:[%s4 + $0x10] sm:$0xff]
    %v1732 = vld [vmem:[%s4 + $0x18] sm:$0xff]
    %v1733 = vld [vmem:[%s4 + $0x20] sm:$0xff]
    %v1734 = vld [vmem:[%s4 + $0x28] sm:$0xff]
    %v1735 = vld [vmem:[%s4 + $0x30] sm:$0xff]
    %v1736 = vld [vmem:[%s4 + $0x38] sm:$0xff]
    %v1737 = vld [vmem:[%s2 + $0x1] sm:$0x1]
    %v1739 = vlaneseq
    %v1740 = vshrl.u32 %v1739, 7
    %v1741 = vsub.s32 0, %v1740
    %v1742 = vrot.slane %v1737, %v1741
    %vm1744 = vcmask 523264
    %v1746 = vsel %vm1744, %v1719, 0
    %v1749 = vsel %vm1744, %v1720, 0
    %v1752 = vsel %vm1744, %v1721, 0
    %v1755 = vsel %vm1744, %v1722, 0
    %v1758 = vsel %vm1744, %v1723, 0
    %v1761 = vsel %vm1744, %v1724, 0
    %v1764 = vsel %vm1744, %v1725, 0
    %v1767 = vsel %vm1744, %v1726, 0
    %v1770 = vsel %vm1744, %v1727, 0
    %v1773 = vsel %vm1744, %v1728, 0
    %1775 = vmatprep.subr.mxu0 0.0
    %1776 = vmatpush1.msra.mxu0 %v1729
    %1777 = vmatprep.subr.mxu0 0.0
    %1778 = vmatpush1.msra.mxu0 %v1730
    %1779 = vmatprep.subr.mxu0 0.0
    %1780 = vmatpush1.msra.mxu0 %v1731
    %1781 = vmatprep.subr.mxu0 0.0
    %1782 = vmatpush1.msra.mxu0 %v1732
    %1783 = vmatprep.subr.mxu0 0.0
    %1784 = vmatpush1.msra.mxu0 %v1733
    %1785 = vmatprep.subr.mxu0 0.0
    %1786 = vmatpush1.msra.mxu0 %v1734
    %1787 = vmatprep.subr.mxu0 0.0
    %1788 = vmatpush1.msra.mxu0 %v1735
    %1789 = vmatprep.subr.mxu0 0.0
    %1790 = vmatpush1.msra.mxu0 %v1736
    %1791 = vmatprep.subr.mxu0 0.0
    %1792 = vmatpush1.msra.mxu0 0.0
    %1793 = vmatprep.subr.mxu0 0.0
    %1794 = vmatpush1.msra.mxu0 0.0
    %1795 = vmatprep.subr.mxu0 0.0
    %1796 = vmatpush1.msra.mxu0 0.0
    %1797 = vmatprep.subr.mxu0 0.0
    %1798 = vmatpush1.msra.mxu0 0.0
    %1799 = vmatprep.subr.mxu0 0.0
    %1800 = vmatpush1.msra.mxu0 0.0
    %1801 = vmatprep.subr.mxu0 0.0
    %1802 = vmatpush1.msra.mxu0 0.0
    %1803 = vmatprep.subr.mxu0 0.0
    %1804 = vmatpush1.msra.mxu0 0.0
    %1805 = vmatprep.subr.mxu0 0.0
    %1806 = vmatpush1.msra.mxu0 0.0
    %1807 = vmatprep.subr.mxu0 0.0
    %1808 = vmatpush1.msra.mxu0 0.0
    %1809 = vmatprep.subr.mxu0 0.0
    %1810 = vmatpush1.msra.mxu0 0.0
    %1811 = vmatprep.subr.mxu0 0.0
    %1812 = vmatpush1.msra.mxu0 0.0
    %1813 = vmatprep.subr.mxu0 0.0
    %1814 = vmatpush1.msra.mxu0 0.0
    %1815 = vmatprep.subr.mxu0 0.0
    %1816 = vmatpush1.msra.mxu0 0.0
    %1817 = vmatprep.subr.mxu0 0.0
    %1818 = vmatpush1.msra.mxu0 0.0
    %1819 = vmatprep.subr.mxu0 0.0
    %1820 = vmatpush1.msra.mxu0 0.0
    %1821 = vmatprep.subr.mxu0 0.0
    %1822 = vmatpush1.msra.mxu0 0.0
    %1823 = vmatprep.subr.mxu0 0.0
    %1824 = vmatpush1.msra.mxu0 0.0
    %1825 = vmatprep.subr.mxu0 0.0
    %1826 = vmatpush1.msra.mxu0 0.0
    %1827 = vmatprep.subr.mxu0 0.0
    %1828 = vmatpush1.msra.mxu0 0.0
    %1829 = vmatprep.subr.mxu0 0.0
    %1830 = vmatpush1.msra.mxu0 0.0
    %1831 = vmatprep.subr.mxu0 0.0
    %1832 = vmatpush1.msra.mxu0 0.0
    %1833 = vmatprep.subr.mxu0 0.0
    %1834 = vmatpush1.msra.mxu0 0.0
    %1835 = vmatprep.subr.mxu0 0.0
    %1836 = vmatpush1.msra.mxu0 0.0
    %1837 = vmatprep.subr.mxu0 0.0
    %1838 = vmatpush1.msra.mxu0 0.0
    %1839 = vmatprep.mubr.f32.mxu0 0.0
    %1840 = vmatmul.mubr.f32.gmra.mrb[0].mxu0 %v1746
    %v1841 = vpop.f32.mrb[0].mxu0
    %v1842 = vadd.f32 %v1742, %v1841
    %v1843 = vpop.f32.mrb[0].mxu0
    %1844 = vmatprep.mubr.f32.mxu0 0.0
    %1845 = vmatmul.mubr.f32.gmra.mrb[0].mxu0 %v1749
    %v1846 = vpop.f32.mrb[0].mxu0
    %v1847 = vadd.f32 %v1742, %v1846
    %v1848 = vpop.f32.mrb[0].mxu0
    %1849 = vmatprep.mubr.f32.mxu0 0.0
    %1850 = vmatmul.mubr.f32.gmra.mrb[0].mxu0 %v1752
    %v1851 = vpop.f32.mrb[0].mxu0
    %v1852 = vadd.f32 %v1742, %v1851
    %v1853 = vpop.f32.mrb[0].mxu0
    %1854 = vmatprep.mubr.f32.mxu0 0.0
    %1855 = vmatmul.mubr.f32.gmra.mrb[0].mxu0 %v1755
    %v1856 = vpop.f32.mrb[0].mxu0
    %v1857 = vadd.f32 %v1742, %v1856
    %v1858 = vpop.f32.mrb[0].mxu0
    %1859 = vmatprep.mubr.f32.mxu0 0.0
    %1860 = vmatmul.mubr.f32.gmra.mrb[0].mxu0 %v1758
    %v1861 = vpop.f32.mrb[0].mxu0
    %v1862 = vadd.f32 %v1742, %v1861
    %v1863 = vpop.f32.mrb[0].mxu0
    %1864 = vmatprep.mubr.f32.mxu0 0.0
    %1865 = vmatmul.mubr.f32.gmra.mrb[0].mxu0 %v1761
    %v1866 = vpop.f32.mrb[0].mxu0
    %v1867 = vadd.f32 %v1742, %v1866
    %v1868 = vpop.f32.mrb[0].mxu0
    %1869 = vmatprep.mubr.f32.mxu0 0.0
    %1870 = vmatmul.mubr.f32.gmra.mrb[0].mxu0 %v1764
    %v1871 = vpop.f32.mrb[0].mxu0
    %v1872 = vadd.f32 %v1742, %v1871
    %v1873 = vpop.f32.mrb[0].mxu0
    %1874 = vmatprep.mubr.f32.mxu0 0.0
    %1875 = vmatmul.mubr.f32.gmra.mrb[0].mxu0 %v1767
    %v1876 = vpop.f32.mrb[0].mxu0
    %v1877 = vadd.f32 %v1742, %v1876
    %v1878 = vpop.f32.mrb[0].mxu0
    %1879 = vmatprep.mubr.f32.mxu0 0.0
    %1880 = vmatmul.mubr.f32.gmra.mrb[0].mxu0 %v1770
    %v1881 = vpop.f32.mrb[0].mxu0
    %v1882 = vadd.f32 %v1742, %v1881
    %v1883 = vpop.f32.mrb[0].mxu0
    %1884 = vmatprep.mubr.f32.mxu0 0.0
    %1885 = vmatmul.mubr.f32.gmra.mrb[0].mxu0 %v1773
    %v1886 = vpop.f32.mrb[0].mxu0
    %v1887 = vadd.f32 %v1742, %v1886
    %v1888 = vpop.f32.mrb[0].mxu0
    %1889 = vdwg.mxu0
    %v1890 = vsub.f32 %v1852, %v1842
    %v1891 = vsub.f32 %v1857, %v1847
    %v1892 = vsub.f32 %v1862, %v1842
    %v1893 = vsub.f32 %v1867, %v1847
    %v1894 = vsub.f32 %v1872, %v1842
    %v1895 = vsub.f32 %v1877, %v1847
    %v1896 = vsub.f32 %v1882, %v1842
    %v1897 = vsub.f32 %v1887, %v1847
    %v1898 = vld [vmem:[%s5] sm:$0xff]
    %v1899 = vld [vmem:[%s5 + $0x8] sm:$0xff]
    %v1900 = vld [vmem:[%s2 + $0x2] sm:$0x1]
    %v1902 = vlaneseq
    %v1903 = vshrl.u32 %v1902, 7
    %v1904 = vsub.s32 0, %v1903
    %v1905 = vrot.slane %v1900, %v1904
    %vm1907 = vcmask 130048
    %v1909 = vsel %vm1907, %v1890, 0
    %v1912 = vsel %vm1907, %v1891, 0
    %v1915 = vsel %vm1907, %v1892, 0
    %v1918 = vsel %vm1907, %v1893, 0
    %v1921 = vsel %vm1907, %v1894, 0
    %v1924 = vsel %vm1907, %v1895, 0
    %v1927 = vsel %vm1907, %v1896, 0
    %v1930 = vsel %vm1907, %v1897, 0
    %1932 = vmatprep.subr.mxu0 0.0
    %1933 = vmatpush1.msra.mxu0 %v1898
    %1934 = vmatprep.subr.mxu0 0.0
    %1935 = vmatpush1.msra.mxu0 %v1899
    %1936 = vmatprep.subr.mxu0 0.0
    %1937 = vmatpush1.msra.mxu0 0.0
    %1938 = vmatprep.subr.mxu0 0.0
    %1939 = vmatpush1.msra.mxu0 0.0
    %1940 = vmatprep.subr.mxu0 0.0
    %1941 = vmatpush1.msra.mxu0 0.0
    %1942 = vmatprep.subr.mxu0 0.0
    %1943 = vmatpush1.msra.mxu0 0.0
    %1944 = vmatprep.subr.mxu0 0.0
    %1945 = vmatpush1.msra.mxu0 0.0
    %1946 = vmatprep.subr.mxu0 0.0
    %1947 = vmatpush1.msra.mxu0 0.0
    %1948 = vmatprep.subr.mxu0 0.0
    %1949 = vmatpush1.msra.mxu0 0.0
    %1950 = vmatprep.subr.mxu0 0.0
    %1951 = vmatpush1.msra.mxu0 0.0
    %1952 = vmatprep.subr.mxu0 0.0
    %1953 = vmatpush1.msra.mxu0 0.0
    %1954 = vmatprep.subr.mxu0 0.0
    %1955 = vmatpush1.msra.mxu0 0.0
    %1956 = vmatprep.subr.mxu0 0.0
    %1957 = vmatpush1.msra.mxu0 0.0
    %1958 = vmatprep.subr.mxu0 0.0
    %1959 = vmatpush1.msra.mxu0 0.0
    %1960 = vmatprep.subr.mxu0 0.0
    %1961 = vmatpush1.msra.mxu0 0.0
    %1962 = vmatprep.subr.mxu0 0.0
    %1963 = vmatpush1.msra.mxu0 0.0
    %1964 = vmatprep.subr.mxu0 0.0
    %1965 = vmatpush1.msra.mxu0 0.0
    %1966 = vmatprep.subr.mxu0 0.0
    %1967 = vmatpush1.msra.mxu0 0.0
    %1968 = vmatprep.subr.mxu0 0.0
    %1969 = vmatpush1.msra.mxu0 0.0
    %1970 = vmatprep.subr.mxu0 0.0
    %1971 = vmatpush1.msra.mxu0 0.0
    %1972 = vmatprep.subr.mxu0 0.0
    %1973 = vmatpush1.msra.mxu0 0.0
    %1974 = vmatprep.subr.mxu0 0.0
    %1975 = vmatpush1.msra.mxu0 0.0
    %1976 = vmatprep.subr.mxu0 0.0
    %1977 = vmatpush1.msra.mxu0 0.0
    %1978 = vmatprep.subr.mxu0 0.0
    %1979 = vmatpush1.msra.mxu0 0.0
    %1980 = vmatprep.subr.mxu0 0.0
    %1981 = vmatpush1.msra.mxu0 0.0
    %1982 = vmatprep.subr.mxu0 0.0
    %1983 = vmatpush1.msra.mxu0 0.0
    %1984 = vmatprep.subr.mxu0 0.0
    %1985 = vmatpush1.msra.mxu0 0.0
    %1986 = vmatprep.subr.mxu0 0.0
    %1987 = vmatpush1.msra.mxu0 0.0
    %1988 = vmatprep.subr.mxu0 0.0
    %1989 = vmatpush1.msra.mxu0 0.0
    %1990 = vmatprep.subr.mxu0 0.0
    %1991 = vmatpush1.msra.mxu0 0.0
    %1992 = vmatprep.subr.mxu0 0.0
    %1993 = vmatpush1.msra.mxu0 0.0
    %1994 = vmatprep.subr.mxu0 0.0
    %1995 = vmatpush1.msra.mxu0 0.0
    %1996 = vmatprep.mubr.f32.mxu0 0.0
    %1997 = vmatmul.mubr.f32.gmra.mrb[0].mxu0 %v1909
    %v1998 = vpop.f32.mrb[0].mxu0
    %v1999 = vadd.f32 %v1905, %v1998
    %v2000 = vpop.f32.mrb[0].mxu0
    %2001 = vmatprep.mubr.f32.mxu0 0.0
    %2002 = vmatmul.mubr.f32.gmra.mrb[0].mxu0 %v1912
    %v2003 = vpop.f32.mrb[0].mxu0
    %v2004 = vadd.f32 %v1905, %v2003
    %v2005 = vpop.f32.mrb[0].mxu0
    %2006 = vmatprep.mubr.f32.mxu0 0.0
    %2007 = vmatmul.mubr.f32.gmra.mrb[0].mxu0 %v1915
    %v2008 = vpop.f32.mrb[0].mxu0
    %v2009 = vadd.f32 %v1905, %v2008
    %v2010 = vpop.f32.mrb[0].mxu0
    %2011 = vmatprep.mubr.f32.mxu0 0.0
    %2012 = vmatmul.mubr.f32.gmra.mrb[0].mxu0 %v1918
    %v2013 = vpop.f32.mrb[0].mxu0
    %v2014 = vadd.f32 %v1905, %v2013
    %v2015 = vpop.f32.mrb[0].mxu0
    %2016 = vmatprep.mubr.f32.mxu0 0.0
    %2017 = vmatmul.mubr.f32.gmra.mrb[0].mxu0 %v1921
    %v2018 = vpop.f32.mrb[0].mxu0
    %v2019 = vadd.f32 %v1905, %v2018
    %v2020 = vpop.f32.mrb[0].mxu0
    %2021 = vmatprep.mubr.f32.mxu0 0.0
    %2022 = vmatmul.mubr.f32.gmra.mrb[0].mxu0 %v1924
    %v2023 = vpop.f32.mrb[0].mxu0
    %v2024 = vadd.f32 %v1905, %v2023
    %v2025 = vpop.f32.mrb[0].mxu0
    %2026 = vmatprep.mubr.f32.mxu0 0.0
    %2027 = vmatmul.mubr.f32.gmra.mrb[0].mxu0 %v1927
    %v2028 = vpop.f32.mrb[0].mxu0
    %v2029 = vadd.f32 %v1905, %v2028
    %v2030 = vpop.f32.mrb[0].mxu0
    %2031 = vmatprep.mubr.f32.mxu0 0.0
    %2032 = vmatmul.mubr.f32.gmra.mrb[0].mxu0 %v1930
    %v2033 = vpop.f32.mrb[0].mxu0
    %v2034 = vadd.f32 %v1905, %v2033
    %v2035 = vpop.f32.mrb[0].mxu0
    %2036 = vdwg.mxu0
    %v2037 = vmax.f32 %v1999, 0.0
    %v2038 = vmax.f32 %v2004, 0.0
    %v2039 = vmax.f32 %v2009, 0.0
    %v2040 = vmax.f32 %v2014, 0.0
    %v2041 = vmax.f32 %v2019, 0.0
    %v2042 = vmax.f32 %v2024, 0.0
    %v2043 = vmax.f32 %v2029, 0.0
    %v2044 = vmax.f32 %v2034, 0.0
    %v2045 = vpack.c.bf16 %v2038, %v2037
    %v2046 = vpack.c.bf16 %v2040, %v2039
    %v2047 = vpack.c.bf16 %v2042, %v2041
    %v2048 = vpack.c.bf16 %v2044, %v2043
    %v2049 = vld [vmem:[%s6] sm:$0xff]
    %v2050 = vld [vmem:[%s6 + $0x8] sm:$0xff]
    %v2051 = vld [vmem:[%s6 + $0x10] sm:$0xff]
    %v2052 = vld [vmem:[%s6 + $0x18] sm:$0xff]
    %v2053 = vld [vmem:[%s6 + $0x20] sm:$0xff]
    %v2054 = vld [vmem:[%s6 + $0x28] sm:$0xff]
    %v2055 = vld [vmem:[%s6 + $0x30] sm:$0xff]
    %v2056 = vld [vmem:[%s6 + $0x38] sm:$0xff]
    %v2057 = vld [vmem:[%s6 + $0x40] sm:$0xff]
    %v2058 = vld [vmem:[%s6 + $0x48] sm:$0xff]
    %v2059 = vld [vmem:[%s6 + $0x50] sm:$0xff]
    %v2060 = vld [vmem:[%s6 + $0x58] sm:$0xff]
    %v2061 = vld [vmem:[%s6 + $0x60] sm:$0xff]
    %v2062 = vld [vmem:[%s6 + $0x68] sm:$0xff]
    %v2063 = vld [vmem:[%s6 + $0x70] sm:$0xff]
    %v2064 = vld [vmem:[%s6 + $0x78] sm:$0xff]
    %v2065 = vld [vmem:[%s2 + $0x3] sm:$0x3]
    %v2067 = vlaneseq
    %v2068 = vshrl.u32 %v2067, 7
    %v2069 = vsub.s32 0, %v2068
    %v2070 = vrot.slane %v2065, %v2069
    %v2071 = vlaneseq
    %v2072 = vshrl.u32 %v2071, 7
    %v2073 = vsub.s32 1, %v2072
    %v2074 = vrot.slane %v2065, %v2073
    %v2093 = vunpack.c.l.b16 %v2049
    %v2094 = vunpack.c.h.b16 %v2049
    %v2095 = vunpack.c.l.b16 %v2050
    %v2096 = vunpack.c.h.b16 %v2050
    %v2097 = vunpack.c.l.b16 %v2051
    %v2098 = vunpack.c.h.b16 %v2051
    %v2099 = vunpack.c.l.b16 %v2052
    %v2100 = vunpack.c.h.b16 %v2052
    %v2101 = vunpack.c.l.b16 %v2053
    %v2102 = vunpack.c.h.b16 %v2053
    %v2103 = vunpack.c.l.b16 %v2054
    %v2104 = vunpack.c.h.b16 %v2054
    %v2105 = vunpack.c.l.b16 %v2055
    %v2106 = vunpack.c.h.b16 %v2055
    %v2107 = vunpack.c.l.b16 %v2056
    %v2108 = vunpack.c.h.b16 %v2056
    %v2109 = vunpack.c.l.b16 %v2057
    %v2110 = vunpack.c.h.b16 %v2057
    %v2111 = vunpack.c.l.b16 %v2058
    %v2112 = vunpack.c.h.b16 %v2058
    %v2113 = vunpack.c.l.b16 %v2059
    %v2114 = vunpack.c.h.b16 %v2059
    %v2115 = vunpack.c.l.b16 %v2060
    %v2116 = vunpack.c.h.b16 %v2060
    %v2117 = vunpack.c.l.b16 %v2061
    %v2118 = vunpack.c.h.b16 %v2061
    %v2119 = vunpack.c.l.b16 %v2062
    %v2120 = vunpack.c.h.b16 %v2062
    %v2121 = vunpack.c.l.b16 %v2063
    %v2122 = vunpack.c.h.b16 %v2063
    %v2123 = vunpack.c.l.b16 %v2064
    %v2124 = vunpack.c.h.b16 %v2064
    %v2125 = vpack.c.b16 %v2095, %v2093
    %v2126 = vpack.c.b16 %v2096, %v2094
    %v2127 = vpack.c.b16 %v2099, %v2097
    %v2128 = vpack.c.b16 %v2100, %v2098
    %v2129 = vpack.c.b16 %v2103, %v2101
    %v2130 = vpack.c.b16 %v2104, %v2102
    %v2131 = vpack.c.b16 %v2107, %v2105
    %v2132 = vpack.c.b16 %v2108, %v2106
    %v2133 = vpack.c.b16 %v2111, %v2109
    %v2134 = vpack.c.b16 %v2112, %v2110
    %v2135 = vpack.c.b16 %v2115, %v2113
    %v2136 = vpack.c.b16 %v2116, %v2114
    %v2137 = vpack.c.b16 %v2119, %v2117
    %v2138 = vpack.c.b16 %v2120, %v2118
    %v2139 = vpack.c.b16 %v2123, %v2121
    %v2140 = vpack.c.b16 %v2124, %v2122
    %2157 = vmatprep.subr.bf16.mxu0 %v2126
    %2158 = vmatpush1.bf16.msra.mxu0 %v2125
    %2159 = vmatprep.subr.bf16.mxu0 %v2128
    %2160 = vmatpush1.bf16.msra.mxu0 %v2127
    %2161 = vmatprep.subr.bf16.mxu0 %v2130
    %2162 = vmatpush1.bf16.msra.mxu0 %v2129
    %2163 = vmatprep.subr.bf16.mxu0 %v2132
    %2164 = vmatpush1.bf16.msra.mxu0 %v2131
    %2165 = vmatprep.subr.bf16.mxu0 %v2134
    %2166 = vmatpush1.bf16.msra.mxu0 %v2133
    %2167 = vmatprep.subr.bf16.mxu0 %v2136
    %2168 = vmatpush1.bf16.msra.mxu0 %v2135
    %2169 = vmatprep.subr.bf16.mxu0 %v2138
    %2170 = vmatpush1.bf16.msra.mxu0 %v2137
    %2171 = vmatprep.subr.bf16.mxu0 %v2140
    %2172 = vmatpush1.bf16.msra.mxu0 %v2139
    %2173 = vmatprep.subr.bf16.mxu0 0
    %2174 = vmatpush1.bf16.msra.mxu0 0
    %2175 = vmatprep.subr.bf16.mxu0 0
    %2176 = vmatpush1.bf16.msra.mxu0 0
    %2177 = vmatprep.subr.bf16.mxu0 0
    %2178 = vmatpush1.bf16.msra.mxu0 0
    %2179 = vmatprep.subr.bf16.mxu0 0
    %2180 = vmatpush1.bf16.msra.mxu0 0
    %2181 = vmatprep.subr.bf16.mxu0 0
    %2182 = vmatpush1.bf16.msra.mxu0 0
    %2183 = vmatprep.subr.bf16.mxu0 0
    %2184 = vmatpush1.bf16.msra.mxu0 0
    %2185 = vmatprep.subr.bf16.mxu0 0
    %2186 = vmatpush1.bf16.msra.mxu0 0
    %2187 = vmatprep.subr.bf16.mxu0 0
    %2188 = vmatpush1.bf16.msra.mxu0 0
    %2189 = vmatprep.mubr.bf16.mxu0 0
    %2190 = vmatmul.mubr.bf16.gmra.mrb[0].mxu0 %v2045
    %v2191 = vpop.f32.mrb[0].mxu0
    %v2192 = vadd.f32 %v2070, %v2191
    %v2193 = vpop.f32.mrb[0].mxu0
    %v2194 = vadd.f32 %v2074, %v2193
    %v2195 = vpop.f32.mrb[0].mxu0
    %v2196 = vadd.f32 %v2070, %v2195
    %v2197 = vpop.f32.mrb[0].mxu0
    %v2198 = vadd.f32 %v2074, %v2197
    %2199 = vmatprep.mubr.bf16.mxu0 0
    %2200 = vmatmul.mubr.bf16.gmra.mrb[0].mxu0 %v2046
    %v2201 = vpop.f32.mrb[0].mxu0
    %v2202 = vadd.f32 %v2070, %v2201
    %v2203 = vpop.f32.mrb[0].mxu0
    %v2204 = vadd.f32 %v2074, %v2203
    %v2205 = vpop.f32.mrb[0].mxu0
    %v2206 = vadd.f32 %v2070, %v2205
    %v2207 = vpop.f32.mrb[0].mxu0
    %v2208 = vadd.f32 %v2074, %v2207
    %2209 = vmatprep.mubr.bf16.mxu0 0
    %2210 = vmatmul.mubr.bf16.gmra.mrb[0].mxu0 %v2047
    %v2211 = vpop.f32.mrb[0].mxu0
    %v2212 = vadd.f32 %v2070, %v2211
    %v2213 = vpop.f32.mrb[0].mxu0
    %v2214 = vadd.f32 %v2074, %v2213
    %v2215 = vpop.f32.mrb[0].mxu0
    %v2216 = vadd.f32 %v2070, %v2215
    %v2217 = vpop.f32.mrb[0].mxu0
    %v2218 = vadd.f32 %v2074, %v2217
    %2219 = vmatprep.mubr.bf16.mxu0 0
    %2220 = vmatmul.mubr.bf16.gmra.mrb[0].mxu0 %v2048
    %v2221 = vpop.f32.mrb[0].mxu0
    %v2222 = vadd.f32 %v2070, %v2221
    %v2223 = vpop.f32.mrb[0].mxu0
    %v2224 = vadd.f32 %v2074, %v2223
    %v2225 = vpop.f32.mrb[0].mxu0
    %v2226 = vadd.f32 %v2070, %v2225
    %v2227 = vpop.f32.mrb[0].mxu0
    %v2228 = vadd.f32 %v2074, %v2227
    %2229 = vdwg.mxu0
    %v2230 = vmax.f32 %v2192, 0.0
    %v2231 = vmax.f32 %v2194, 0.0
    %v2232 = vmax.f32 %v2196, 0.0
    %v2233 = vmax.f32 %v2198, 0.0
    %v2234 = vmax.f32 %v2202, 0.0
    %v2235 = vmax.f32 %v2204, 0.0
    %v2236 = vmax.f32 %v2206, 0.0
    %v2237 = vmax.f32 %v2208, 0.0
    %v2238 = vmax.f32 %v2212, 0.0
    %v2239 = vmax.f32 %v2214, 0.0
    %v2240 = vmax.f32 %v2216, 0.0
    %v2241 = vmax.f32 %v2218, 0.0
    %v2242 = vmax.f32 %v2222, 0.0
    %v2243 = vmax.f32 %v2224, 0.0
    %v2244 = vmax.f32 %v2226, 0.0
    %v2245 = vmax.f32 %v2228, 0.0
    %v2246 = vpack.c.bf16 %v2232, %v2230
    %v2247 = vpack.c.bf16 %v2233, %v2231
    %v2248 = vpack.c.bf16 %v2236, %v2234
    %v2249 = vpack.c.bf16 %v2237, %v2235
    %v2250 = vpack.c.bf16 %v2240, %v2238
    %v2251 = vpack.c.bf16 %v2241, %v2239
    %v2252 = vpack.c.bf16 %v2244, %v2242
    %v2253 = vpack.c.bf16 %v2245, %v2243
    %v2254 = vld [vmem:[#allocation8] sm:$0xf]
    %v2255 = vld [vmem:[#allocation8 + $0x4] sm:$0xf]
    %v2256 = vld [vmem:[#allocation8 + $0x8] sm:$0xf]
    %v2257 = vld [vmem:[#allocation8 + $0xc] sm:$0xf]
    %v2258 = vld [vmem:[#allocation8 + $0x10] sm:$0xf]
    %v2259 = vld [vmem:[#allocation8 + $0x14] sm:$0xf]
    %v2260 = vld [vmem:[#allocation8 + $0x18] sm:$0xf]
    %v2261 = vld [vmem:[#allocation8 + $0x1c] sm:$0xf]
    %v2262 = vld [vmem:[#allocation8 + $0x20] sm:$0xf]
    %v2263 = vld [vmem:[#allocation8 + $0x24] sm:$0xf]
    %v2264 = vld [vmem:[#allocation8 + $0x28] sm:$0xf]
    %v2265 = vld [vmem:[#allocation8 + $0x2c] sm:$0xf]
    %v2266 = vld [vmem:[#allocation8 + $0x30] sm:$0xf]
    %v2267 = vld [vmem:[#allocation8 + $0x34] sm:$0xf]
    %v2268 = vld [vmem:[#allocation8 + $0x38] sm:$0xf]
    %v2269 = vld [vmem:[#allocation8 + $0x3c] sm:$0xf]
    %v2270 = vld [vmem:[#allocation8 + $0x40] sm:$0xf]
    %v2271 = vld [vmem:[#allocation8 + $0x44] sm:$0xf]
    %v2272 = vld [vmem:[#allocation8 + $0x48] sm:$0xf]
    %v2273 = vld [vmem:[#allocation8 + $0x4c] sm:$0xf]
    %v2274 = vld [vmem:[#allocation8 + $0x50] sm:$0xf]
    %v2275 = vld [vmem:[#allocation8 + $0x54] sm:$0xf]
    %v2276 = vld [vmem:[#allocation8 + $0x58] sm:$0xf]
    %v2277 = vld [vmem:[#allocation8 + $0x5c] sm:$0xf]
    %v2278 = vld [vmem:[#allocation8 + $0x60] sm:$0xf]
    %v2279 = vld [vmem:[#allocation8 + $0x64] sm:$0xf]
    %v2280 = vld [vmem:[#allocation8 + $0x68] sm:$0xf]
    %v2281 = vld [vmem:[#allocation8 + $0x6c] sm:$0xf]
    %v2282 = vld [vmem:[#allocation8 + $0x70] sm:$0xf]
    %v2283 = vld [vmem:[#allocation8 + $0x74] sm:$0xf]
    %v2284 = vld [vmem:[#allocation8 + $0x78] sm:$0xf]
    %v2285 = vld [vmem:[#allocation8 + $0x7c] sm:$0xf]
    %v2286 = vld [vmem:[%s2 + $0x5] sm:$0x1]
    %v2288 = vlaneseq
    %v2289 = vshrl.u32 %v2288, 7
    %v2290 = vsub.s32 0, %v2289
    %v2291 = vrot.slane %v2286, %v2290
    %v2325 = vunpack.c.l.b16 %v2254
    %v2326 = vunpack.c.l.b16 %v2255
    %v2327 = vunpack.c.l.b16 %v2256
    %v2328 = vunpack.c.l.b16 %v2257
    %v2329 = vunpack.c.l.b16 %v2258
    %v2330 = vunpack.c.l.b16 %v2259
    %v2331 = vunpack.c.l.b16 %v2260
    %v2332 = vunpack.c.l.b16 %v2261
    %v2333 = vunpack.c.l.b16 %v2262
    %v2334 = vunpack.c.l.b16 %v2263
    %v2335 = vunpack.c.l.b16 %v2264
    %v2336 = vunpack.c.l.b16 %v2265
    %v2337 = vunpack.c.l.b16 %v2266
    %v2338 = vunpack.c.l.b16 %v2267
    %v2339 = vunpack.c.l.b16 %v2268
    %v2340 = vunpack.c.l.b16 %v2269
    %v2341 = vunpack.c.l.b16 %v2270
    %v2342 = vunpack.c.l.b16 %v2271
    %v2343 = vunpack.c.l.b16 %v2272
    %v2344 = vunpack.c.l.b16 %v2273
    %v2345 = vunpack.c.l.b16 %v2274
    %v2346 = vunpack.c.l.b16 %v2275
    %v2347 = vunpack.c.l.b16 %v2276
    %v2348 = vunpack.c.l.b16 %v2277
    %v2349 = vunpack.c.l.b16 %v2278
    %v2350 = vunpack.c.l.b16 %v2279
    %v2351 = vunpack.c.l.b16 %v2280
    %v2352 = vunpack.c.l.b16 %v2281
    %v2353 = vunpack.c.l.b16 %v2282
    %v2354 = vunpack.c.l.b16 %v2283
    %v2355 = vunpack.c.l.b16 %v2284
    %v2356 = vunpack.c.l.b16 %v2285
    %v2357 = vpack.c.b16 %v2326, %v2325
    %v2358 = vpack.c.b16 %v2328, %v2327
    %v2359 = vpack.c.b16 %v2330, %v2329
    %v2360 = vpack.c.b16 %v2332, %v2331
    %v2361 = vpack.c.b16 %v2334, %v2333
    %v2362 = vpack.c.b16 %v2336, %v2335
    %v2363 = vpack.c.b16 %v2338, %v2337
    %v2364 = vpack.c.b16 %v2340, %v2339
    %v2365 = vpack.c.b16 %v2342, %v2341
    %v2366 = vpack.c.b16 %v2344, %v2343
    %v2367 = vpack.c.b16 %v2346, %v2345
    %v2368 = vpack.c.b16 %v2348, %v2347
    %v2369 = vpack.c.b16 %v2350, %v2349
    %v2370 = vpack.c.b16 %v2352, %v2351
    %v2371 = vpack.c.b16 %v2354, %v2353
    %v2372 = vpack.c.b16 %v2356, %v2355
    %2389 = vmatprep.subr.bf16.mxu0 0
    %2390 = vmatpush1.bf16.msra.mxu0 %v2357
    %2391 = vmatprep.subr.bf16.mxu0 0
    %2392 = vmatpush1.bf16.msra.mxu0 %v2358
    %2393 = vmatprep.subr.bf16.mxu0 0
    %2394 = vmatpush1.bf16.msra.mxu0 %v2359
    %2395 = vmatprep.subr.bf16.mxu0 0
    %2396 = vmatpush1.bf16.msra.mxu0 %v2360
    %2397 = vmatprep.subr.bf16.mxu0 0
    %2398 = vmatpush1.bf16.msra.mxu0 %v2361
    %2399 = vmatprep.subr.bf16.mxu0 0
    %2400 = vmatpush1.bf16.msra.mxu0 %v2362
    %2401 = vmatprep.subr.bf16.mxu0 0
    %2402 = vmatpush1.bf16.msra.mxu0 %v2363
    %2403 = vmatprep.subr.bf16.mxu0 0
    %2404 = vmatpush1.bf16.msra.mxu0 %v2364
    %2405 = vmatprep.subr.bf16.mxu0 0
    %2406 = vmatpush1.bf16.msra.mxu0 %v2365
    %2407 = vmatprep.subr.bf16.mxu0 0
    %2408 = vmatpush1.bf16.msra.mxu0 %v2366
    %2409 = vmatprep.subr.bf16.mxu0 0
    %2410 = vmatpush1.bf16.msra.mxu0 %v2367
    %2411 = vmatprep.subr.bf16.mxu0 0
    %2412 = vmatpush1.bf16.msra.mxu0 %v2368
    %2413 = vmatprep.subr.bf16.mxu0 0
    %2414 = vmatpush1.bf16.msra.mxu0 %v2369
    %2415 = vmatprep.subr.bf16.mxu0 0
    %2416 = vmatpush1.bf16.msra.mxu0 %v2370
    %2417 = vmatprep.subr.bf16.mxu0 0
    %2418 = vmatpush1.bf16.msra.mxu0 %v2371
    %2419 = vmatprep.subr.bf16.mxu0 0
    %2420 = vmatpush1.bf16.msra.mxu0 %v2372
    %2421 = vmatprep.mubr.bf16.mxu0 %v2247
    %2422 = vmatmul.mubr.bf16.gmra.mrb[0].mxu0 %v2246
    %v2423 = vpop.f32.mrb[0].mxu0
    %v2424 = vadd.f32 %v2291, %v2423
    %v2425 = vpop.f32.mrb[0].mxu0
    %v2426 = vpop.f32.mrb[0].mxu0
    %v2427 = vadd.f32 %v2291, %v2426
    %v2428 = vpop.f32.mrb[0].mxu0
    %2429 = vmatprep.mubr.bf16.mxu0 %v2249
    %2430 = vmatmul.mubr.bf16.gmra.mrb[0].mxu0 %v2248
    %v2431 = vpop.f32.mrb[0].mxu0
    %v2432 = vadd.f32 %v2291, %v2431
    %v2433 = vpop.f32.mrb[0].mxu0
    %v2434 = vpop.f32.mrb[0].mxu0
    %v2435 = vadd.f32 %v2291, %v2434
    %v2436 = vpop.f32.mrb[0].mxu0
    %2437 = vmatprep.mubr.bf16.mxu0 %v2251
    %2438 = vmatmul.mubr.bf16.gmra.mrb[0].mxu0 %v2250
    %v2439 = vpop.f32.mrb[0].mxu0
    %v2440 = vadd.f32 %v2291, %v2439
    %v2441 = vpop.f32.mrb[0].mxu0
    %v2442 = vpop.f32.mrb[0].mxu0
    %v2443 = vadd.f32 %v2291, %v2442
    %v2444 = vpop.f32.mrb[0].mxu0
    %2445 = vmatprep.mubr.bf16.mxu0 %v2253
    %2446 = vmatmul.mubr.bf16.gmra.mrb[0].mxu0 %v2252
    %v2447 = vpop.f32.mrb[0].mxu0
    %v2448 = vadd.f32 %v2291, %v2447
    %v2449 = vpop.f32.mrb[0].mxu0
    %v2450 = vpop.f32.mrb[0].mxu0
    %v2451 = vadd.f32 %v2291, %v2450
    %v2452 = vpop.f32.mrb[0].mxu0
    %2453 = vdwg.mxu0
    %v2454 = vld [vmem:[%s8] sm:$0xff]
    %v2455 = vld [vmem:[%s2 + $0x14] sm:$0x1]
    %v2457 = vlaneseq
    %v2458 = vshrl.u32 %v2457, 7
    %v2459 = vsub.s32 0, %v2458
    %v2460 = vrot.slane %v2455, %v2459
    %2462 = vmatprep.subr.mxu0 0.0
    %2463 = vmatpush1.msra.mxu0 %v2454
    %2464 = vmatprep.subr.mxu0 0.0
    %2465 = vmatpush1.msra.mxu0 0.0
    %2466 = vmatprep.subr.mxu0 0.0
    %2467 = vmatpush1.msra.mxu0 0.0
    %2468 = vmatprep.subr.mxu0 0.0
    %2469 = vmatpush1.msra.mxu0 0.0
    %2470 = vmatprep.subr.mxu0 0.0
    %2471 = vmatpush1.msra.mxu0 0.0
    %2472 = vmatprep.subr.mxu0 0.0
    %2473 = vmatpush1.msra.mxu0 0.0
    %2474 = vmatprep.subr.mxu0 0.0
    %2475 = vmatpush1.msra.mxu0 0.0
    %2476 = vmatprep.subr.mxu0 0.0
    %2477 = vmatpush1.msra.mxu0 0.0
    %2478 = vmatprep.subr.mxu0 0.0
    %2479 = vmatpush1.msra.mxu0 0.0
    %2480 = vmatprep.subr.mxu0 0.0
    %2481 = vmatpush1.msra.mxu0 0.0
    %2482 = vmatprep.subr.mxu0 0.0
    %2483 = vmatpush1.msra.mxu0 0.0
    %2484 = vmatprep.subr.mxu0 0.0
    %2485 = vmatpush1.msra.mxu0 0.0
    %2486 = vmatprep.subr.mxu0 0.0
    %2487 = vmatpush1.msra.mxu0 0.0
    %2488 = vmatprep.subr.mxu0 0.0
    %2489 = vmatpush1.msra.mxu0 0.0
    %2490 = vmatprep.subr.mxu0 0.0
    %2491 = vmatpush1.msra.mxu0 0.0
    %2492 = vmatprep.subr.mxu0 0.0
    %2493 = vmatpush1.msra.mxu0 0.0
    %2494 = vmatprep.subr.mxu0 0.0
    %2495 = vmatpush1.msra.mxu0 0.0
    %2496 = vmatprep.subr.mxu0 0.0
    %2497 = vmatpush1.msra.mxu0 0.0
    %2498 = vmatprep.subr.mxu0 0.0
    %2499 = vmatpush1.msra.mxu0 0.0
    %2500 = vmatprep.subr.mxu0 0.0
    %2501 = vmatpush1.msra.mxu0 0.0
    %2502 = vmatprep.subr.mxu0 0.0
    %2503 = vmatpush1.msra.mxu0 0.0
    %2504 = vmatprep.subr.mxu0 0.0
    %2505 = vmatpush1.msra.mxu0 0.0
    %2506 = vmatprep.subr.mxu0 0.0
    %2507 = vmatpush1.msra.mxu0 0.0
    %2508 = vmatprep.subr.mxu0 0.0
    %2509 = vmatpush1.msra.mxu0 0.0
    %2510 = vmatprep.subr.mxu0 0.0
    %2511 = vmatpush1.msra.mxu0 0.0
    %2512 = vmatprep.subr.mxu0 0.0
    %2513 = vmatpush1.msra.mxu0 0.0
    %2514 = vmatprep.subr.mxu0 0.0
    %2515 = vmatpush1.msra.mxu0 0.0
    %2516 = vmatprep.subr.mxu0 0.0
    %2517 = vmatpush1.msra.mxu0 0.0
    %2518 = vmatprep.subr.mxu0 0.0
    %2519 = vmatpush1.msra.mxu0 0.0
    %2520 = vmatprep.subr.mxu0 0.0
    %2521 = vmatpush1.msra.mxu0 0.0
    %2522 = vmatprep.subr.mxu0 0.0
    %2523 = vmatpush1.msra.mxu0 0.0
    %2524 = vmatprep.subr.mxu0 0.0
    %2525 = vmatpush1.msra.mxu0 0.0
    %2526 = vmatprep.mubr.f32.mxu0 0.0
    %2527 = vmatmul.mubr.f32.gmra.mrb[0].mxu0 %v1575
    %v2528 = vpop.f32.mrb[0].mxu0
    %v2529 = vadd.f32 %v2460, %v2528
    %v2530 = vpop.f32.mrb[0].mxu0
    %2531 = vmatprep.mubr.f32.mxu0 0.0
    %2532 = vmatmul.mubr.f32.gmra.mrb[0].mxu0 %v1578
    %v2533 = vpop.f32.mrb[0].mxu0
    %v2534 = vadd.f32 %v2460, %v2533
    %v2535 = vpop.f32.mrb[0].mxu0
    %2536 = vdwg.mxu0
    %v2537 = vmax.f32 %v2529, 0.0
    %v2538 = vmax.f32 %v2534, 0.0
    %v2539 = vld [vmem:[#allocation10] sm:$0xff]
    %v2540 = vld [vmem:[#allocation10 + $0x8] sm:$0xff]
    %v2541 = vld [vmem:[#allocation10 + $0x10] sm:$0xff]
    %v2542 = vld [vmem:[#allocation10 + $0x18] sm:$0xff]
    %v2543 = vld [vmem:[#allocation10 + $0x20] sm:$0xff]
    %v2544 = vld [vmem:[#allocation10 + $0x28] sm:$0xff]
    %v2545 = vld [vmem:[#allocation10 + $0x30] sm:$0xff]
    %v2546 = vld [vmem:[#allocation10 + $0x38] sm:$0xff]
    %v2547 = vld [vmem:[#allocation10 + $0x40] sm:$0xff]
    %v2548 = vld [vmem:[#allocation10 + $0x48] sm:$0xff]
    %v2549 = vld [vmem:[#allocation10 + $0x50] sm:$0xff]
    %v2550 = vld [vmem:[#allocation10 + $0x58] sm:$0xff]
    %v2551 = vld [vmem:[#allocation10 + $0x60] sm:$0xff]
    %v2552 = vld [vmem:[#allocation10 + $0x68] sm:$0xff]
    %v2553 = vld [vmem:[#allocation10 + $0x70] sm:$0xff]
    %v2554 = vld [vmem:[#allocation10 + $0x78] sm:$0xff]
    %v2555 = vld [vmem:[%s2 + $0x15] sm:$0x1]
    %v2557 = vlaneseq
    %v2558 = vshrl.u32 %v2557, 7
    %v2559 = vsub.s32 0, %v2558
    %v2560 = vrot.slane %v2555, %v2559
    %2562 = vmatprep.subr.mxu0 0.0
    %2563 = vmatpush1.msra.mxu0 %v2539
    %2564 = vmatprep.subr.mxu0 0.0
    %2565 = vmatpush1.msra.mxu0 %v2540
    %2566 = vmatprep.subr.mxu0 0.0
    %2567 = vmatpush1.msra.mxu0 %v2541
    %2568 = vmatprep.subr.mxu0 0.0
    %2569 = vmatpush1.msra.mxu0 %v2542
    %2570 = vmatprep.subr.mxu0 0.0
    %2571 = vmatpush1.msra.mxu0 %v2543
    %2572 = vmatprep.subr.mxu0 0.0
    %2573 = vmatpush1.msra.mxu0 %v2544
    %2574 = vmatprep.subr.mxu0 0.0
    %2575 = vmatpush1.msra.mxu0 %v2545
    %2576 = vmatprep.subr.mxu0 0.0
    %2577 = vmatpush1.msra.mxu0 %v2546
    %2578 = vmatprep.subr.mxu0 0.0
    %2579 = vmatpush1.msra.mxu0 %v2547
    %2580 = vmatprep.subr.mxu0 0.0
    %2581 = vmatpush1.msra.mxu0 %v2548
    %2582 = vmatprep.subr.mxu0 0.0
    %2583 = vmatpush1.msra.mxu0 %v2549
    %2584 = vmatprep.subr.mxu0 0.0
    %2585 = vmatpush1.msra.mxu0 %v2550
    %2586 = vmatprep.subr.mxu0 0.0
    %2587 = vmatpush1.msra.mxu0 %v2551
    %2588 = vmatprep.subr.mxu0 0.0
    %2589 = vmatpush1.msra.mxu0 %v2552
    %2590 = vmatprep.subr.mxu0 0.0
    %2591 = vmatpush1.msra.mxu0 %v2553
    %2592 = vmatprep.subr.mxu0 0.0
    %2593 = vmatpush1.msra.mxu0 %v2554
    %2594 = vmatprep.subr.mxu0 0.0
    %2595 = vmatpush1.msra.mxu0 0.0
    %2596 = vmatprep.subr.mxu0 0.0
    %2597 = vmatpush1.msra.mxu0 0.0
    %2598 = vmatprep.subr.mxu0 0.0
    %2599 = vmatpush1.msra.mxu0 0.0
    %2600 = vmatprep.subr.mxu0 0.0
    %2601 = vmatpush1.msra.mxu0 0.0
    %2602 = vmatprep.subr.mxu0 0.0
    %2603 = vmatpush1.msra.mxu0 0.0
    %2604 = vmatprep.subr.mxu0 0.0
    %2605 = vmatpush1.msra.mxu0 0.0
    %2606 = vmatprep.subr.mxu0 0.0
    %2607 = vmatpush1.msra.mxu0 0.0
    %2608 = vmatprep.subr.mxu0 0.0
    %2609 = vmatpush1.msra.mxu0 0.0
    %2610 = vmatprep.subr.mxu0 0.0
    %2611 = vmatpush1.msra.mxu0 0.0
    %2612 = vmatprep.subr.mxu0 0.0
    %2613 = vmatpush1.msra.mxu0 0.0
    %2614 = vmatprep.subr.mxu0 0.0
    %2615 = vmatpush1.msra.mxu0 0.0
    %2616 = vmatprep.subr.mxu0 0.0
    %2617 = vmatpush1.msra.mxu0 0.0
    %2618 = vmatprep.subr.mxu0 0.0
    %2619 = vmatpush1.msra.mxu0 0.0
    %2620 = vmatprep.subr.mxu0 0.0
    %2621 = vmatpush1.msra.mxu0 0.0
    %2622 = vmatprep.subr.mxu0 0.0
    %2623 = vmatpush1.msra.mxu0 0.0
    %2624 = vmatprep.subr.mxu0 0.0
    %2625 = vmatpush1.msra.mxu0 0.0
    %2626 = vmatprep.mubr.f32.mxu0 0.0
    %2627 = vmatmul.mubr.f32.gmra.mrb[0].mxu0 %v2537
    %v2628 = vpop.f32.mrb[0].mxu0
    %v2629 = vadd.f32 %v2560, %v2628
    %v2630 = vpop.f32.mrb[0].mxu0
    %2631 = vmatprep.mubr.f32.mxu0 0.0
    %2632 = vmatmul.mubr.f32.gmra.mrb[0].mxu0 %v2538
    %v2633 = vpop.f32.mrb[0].mxu0
    %v2634 = vadd.f32 %v2560, %v2633
    %v2635 = vpop.f32.mrb[0].mxu0
    %2636 = vdwg.mxu0
    %s2637 = smul.u32 4, 64
    %s2638 = smul.u32 %s2637, 4
    %s2639 = sshll.u32 %s2638, 4
    %2640 = dma.done [#allocation7], %s2639
    %v2641 = vpack.c.bf16 %v2427, %v2424
    %v2642 = vpack.c.bf16 %v2435, %v2432
    %v2643 = vpack.c.bf16 %v2443, %v2440
    %v2644 = vpack.c.bf16 %v2451, %v2448
    %v2645 = vld [vmem:[#allocation2] sm:$0xff]
    %v2646 = vld [vmem:[#allocation2 + $0x8] sm:$0xff]
    %v2647 = vld [vmem:[#allocation2 + $0x10] sm:$0xff]
    %v2648 = vld [vmem:[#allocation2 + $0x18] sm:$0xff]
    %v2649 = vld [vmem:[#allocation2 + $0x20] sm:$0xff]
    %v2650 = vld [vmem:[#allocation2 + $0x28] sm:$0xff]
    %v2651 = vld [vmem:[#allocation2 + $0x30] sm:$0xff]
    %v2652 = vld [vmem:[#allocation2 + $0x38] sm:$0xff]
    %v2653 = vld [vmem:[#allocation2 + $0x40] sm:$0xff]
    %v2654 = vld [vmem:[#allocation2 + $0x48] sm:$0xff]
    %v2655 = vld [vmem:[#allocation2 + $0x50] sm:$0xff]
    %v2656 = vld [vmem:[#allocation2 + $0x58] sm:$0xff]
    %v2657 = vld [vmem:[#allocation2 + $0x60] sm:$0xff]
    %v2658 = vld [vmem:[#allocation2 + $0x68] sm:$0xff]
    %v2659 = vld [vmem:[#allocation2 + $0x70] sm:$0xff]
    %v2660 = vld [vmem:[#allocation2 + $0x78] sm:$0xff]
    %v2661 = vld [vmem:[#allocation2 + $0x80] sm:$0xff]
    %v2662 = vld [vmem:[#allocation2 + $0x88] sm:$0xff]
    %v2663 = vld [vmem:[#allocation2 + $0x90] sm:$0xff]
    %v2664 = vld [vmem:[#allocation2 + $0x98] sm:$0xff]
    %v2665 = vld [vmem:[#allocation2 + $0xa0] sm:$0xff]
    %v2666 = vld [vmem:[#allocation2 + $0xa8] sm:$0xff]
    %v2667 = vld [vmem:[#allocation2 + $0xb0] sm:$0xff]
    %v2668 = vld [vmem:[#allocation2 + $0xb8] sm:$0xff]
    %v2669 = vld [vmem:[#allocation2 + $0xc0] sm:$0xff]
    %v2670 = vld [vmem:[#allocation2 + $0xc8] sm:$0xff]
    %v2671 = vld [vmem:[#allocation2 + $0xd0] sm:$0xff]
    %v2672 = vld [vmem:[#allocation2 + $0xd8] sm:$0xff]
    %v2673 = vld [vmem:[#allocation2 + $0xe0] sm:$0xff]
    %v2674 = vld [vmem:[#allocation2 + $0xe8] sm:$0xff]
    %v2675 = vld [vmem:[#allocation2 + $0xf0] sm:$0xff]
    %v2676 = vld [vmem:[#allocation2 + $0xf8] sm:$0xff]
    %v2677 = vld [vmem:[#allocation2 + $0x100] sm:$0xff]
    %v2678 = vld [vmem:[#allocation2 + $0x108] sm:$0xff]
    %v2679 = vld [vmem:[#allocation2 + $0x110] sm:$0xff]
    %v2680 = vld [vmem:[#allocation2 + $0x118] sm:$0xff]
    %v2681 = vld [vmem:[#allocation2 + $0x120] sm:$0xff]
    %v2682 = vld [vmem:[#allocation2 + $0x128] sm:$0xff]
    %v2683 = vld [vmem:[#allocation2 + $0x130] sm:$0xff]
    %v2684 = vld [vmem:[#allocation2 + $0x138] sm:$0xff]
    %v2685 = vld [vmem:[#allocation2 + $0x140] sm:$0xff]
    %v2686 = vld [vmem:[#allocation2 + $0x148] sm:$0xff]
    %v2687 = vld [vmem:[#allocation2 + $0x150] sm:$0xff]
    %v2688 = vld [vmem:[#allocation2 + $0x158] sm:$0xff]
    %v2689 = vld [vmem:[#allocation2 + $0x160] sm:$0xff]
    %v2690 = vld [vmem:[#allocation2 + $0x168] sm:$0xff]
    %v2691 = vld [vmem:[#allocation2 + $0x170] sm:$0xff]
    %v2692 = vld [vmem:[#allocation2 + $0x178] sm:$0xff]
    %v2693 = vld [vmem:[#allocation2 + $0x180] sm:$0xff]
    %v2694 = vld [vmem:[#allocation2 + $0x188] sm:$0xff]
    %v2695 = vld [vmem:[#allocation2 + $0x190] sm:$0xff]
    %v2696 = vld [vmem:[#allocation2 + $0x198] sm:$0xff]
    %v2697 = vld [vmem:[#allocation2 + $0x1a0] sm:$0xff]
    %v2698 = vld [vmem:[#allocation2 + $0x1a8] sm:$0xff]
    %v2699 = vld [vmem:[#allocation2 + $0x1b0] sm:$0xff]
    %v2700 = vld [vmem:[#allocation2 + $0x1b8] sm:$0xff]
    %v2701 = vld [vmem:[#allocation2 + $0x1c0] sm:$0xff]
    %v2702 = vld [vmem:[#allocation2 + $0x1c8] sm:$0xff]
    %v2703 = vld [vmem:[#allocation2 + $0x1d0] sm:$0xff]
    %v2704 = vld [vmem:[#allocation2 + $0x1d8] sm:$0xff]
    %v2705 = vld [vmem:[#allocation2 + $0x1e0] sm:$0xff]
    %v2706 = vld [vmem:[#allocation2 + $0x1e8] sm:$0xff]
    %v2707 = vld [vmem:[#allocation2 + $0x1f0] sm:$0xff]
    %v2708 = vld [vmem:[#allocation2 + $0x1f8] sm:$0xff]
    %2709 = vmatprep.subr.bf16.mxu0 %v2678
    %2710 = vmatpush1.bf16.msra.mxu0 %v2677
    %2711 = vmatprep.subr.bf16.mxu0 %v2682
    %2712 = vmatpush1.bf16.msra.mxu0 %v2681
    %2713 = vmatprep.subr.bf16.mxu0 %v2686
    %2714 = vmatpush1.bf16.msra.mxu0 %v2685
    %2715 = vmatprep.subr.bf16.mxu0 %v2690
    %2716 = vmatpush1.bf16.msra.mxu0 %v2689
    %2717 = vmatprep.subr.bf16.mxu0 %v2694
    %2718 = vmatpush1.bf16.msra.mxu0 %v2693
    %2719 = vmatprep.subr.bf16.mxu0 %v2698
    %2720 = vmatpush1.bf16.msra.mxu0 %v2697
    %2721 = vmatprep.subr.bf16.mxu0 %v2702
    %2722 = vmatpush1.bf16.msra.mxu0 %v2701
    %2723 = vmatprep.subr.bf16.mxu0 %v2706
    %2724 = vmatpush1.bf16.msra.mxu0 %v2705
    %2725 = vmatprep.subr.bf16.mxu0 0
    %2726 = vmatpush1.bf16.msra.mxu0 0
    %2727 = vmatprep.subr.bf16.mxu0 0
    %2728 = vmatpush1.bf16.msra.mxu0 0
    %2729 = vmatprep.subr.bf16.mxu0 0
    %2730 = vmatpush1.bf16.msra.mxu0 0
    %2731 = vmatprep.subr.bf16.mxu0 0
    %2732 = vmatpush1.bf16.msra.mxu0 0
    %2733 = vmatprep.subr.bf16.mxu0 0
    %2734 = vmatpush1.bf16.msra.mxu0 0
    %2735 = vmatprep.subr.bf16.mxu0 0
    %2736 = vmatpush1.bf16.msra.mxu0 0
    %2737 = vmatprep.subr.bf16.mxu0 0
    %2738 = vmatpush1.bf16.msra.mxu0 0
    %2739 = vmatprep.subr.bf16.mxu0 0
    %2740 = vmatpush1.bf16.msra.mxu0 0
    %2741 = vmatprep.mubr.bf16.mxu0 0
    %2742 = vmatmul.mubr.bf16.gmra.mrb[0].mxu0 %v2642
    %v2743 = vpop.f32.mrb[0].mxu0
    %v2744 = vadd.f32 0.0, %v2743
    %v2745 = vpop.f32.mrb[0].mxu0
    %v2746 = vadd.f32 0.0, %v2745
    %v2747 = vpop.f32.mrb[0].mxu0
    %v2748 = vadd.f32 0.0, %v2747
    %v2749 = vpop.f32.mrb[0].mxu0
    %v2750 = vadd.f32 0.0, %v2749
    %2751 = vdwg.mxu0
    %2752 = vmatprep.subr.bf16.mxu0 %v2680
    %2753 = vmatpush1.bf16.msra.mxu0 %v2679
    %2754 = vmatprep.subr.bf16.mxu0 %v2684
    %2755 = vmatpush1.bf16.msra.mxu0 %v2683
    %2756 = vmatprep.subr.bf16.mxu0 %v2688
    %2757 = vmatpush1.bf16.msra.mxu0 %v2687
    %2758 = vmatprep.subr.bf16.mxu0 %v2692
    %2759 = vmatpush1.bf16.msra.mxu0 %v2691
    %2760 = vmatprep.subr.bf16.mxu0 %v2696
    %2761 = vmatpush1.bf16.msra.mxu0 %v2695
    %2762 = vmatprep.subr.bf16.mxu0 %v2700
    %2763 = vmatpush1.bf16.msra.mxu0 %v2699
    %2764 = vmatprep.subr.bf16.mxu0 %v2704
    %2765 = vmatpush1.bf16.msra.mxu0 %v2703
    %2766 = vmatprep.subr.bf16.mxu0 %v2708
    %2767 = vmatpush1.bf16.msra.mxu0 %v2707
    %2768 = vmatprep.subr.bf16.mxu0 0
    %2769 = vmatpush1.bf16.msra.mxu0 0
    %2770 = vmatprep.subr.bf16.mxu0 0
    %2771 = vmatpush1.bf16.msra.mxu0 0
    %2772 = vmatprep.subr.bf16.mxu0 0
    %2773 = vmatpush1.bf16.msra.mxu0 0
    %2774 = vmatprep.subr.bf16.mxu0 0
    %2775 = vmatpush1.bf16.msra.mxu0 0
    %2776 = vmatprep.subr.bf16.mxu0 0
    %2777 = vmatpush1.bf16.msra.mxu0 0
    %2778 = vmatprep.subr.bf16.mxu0 0
    %2779 = vmatpush1.bf16.msra.mxu0 0
    %2780 = vmatprep.subr.bf16.mxu0 0
    %2781 = vmatpush1.bf16.msra.mxu0 0
    %2782 = vmatprep.subr.bf16.mxu0 0
    %2783 = vmatpush1.bf16.msra.mxu0 0
    %2784 = vmatprep.mubr.bf16.mxu0 0
    %2785 = vmatmul.mubr.bf16.gmra.mrb[0].mxu0 %v2642
    %v2786 = vpop.f32.mrb[0].mxu0
    %v2787 = vadd.f32 0.0, %v2786
    %v2788 = vpop.f32.mrb[0].mxu0
    %v2789 = vadd.f32 0.0, %v2788
    %v2790 = vpop.f32.mrb[0].mxu0
    %v2791 = vadd.f32 0.0, %v2790
    %v2792 = vpop.f32.mrb[0].mxu0
    %v2793 = vadd.f32 0.0, %v2792
    %2794 = vdwg.mxu0
    %2795 = vmatprep.subr.bf16.mxu0 %v2646
    %2796 = vmatpush1.bf16.msra.mxu0 %v2645
    %2797 = vmatprep.subr.bf16.mxu0 %v2650
    %2798 = vmatpush1.bf16.msra.mxu0 %v2649
    %2799 = vmatprep.subr.bf16.mxu0 %v2654
    %2800 = vmatpush1.bf16.msra.mxu0 %v2653
    %2801 = vmatprep.subr.bf16.mxu0 %v2658
    %2802 = vmatpush1.bf16.msra.mxu0 %v2657
    %2803 = vmatprep.subr.bf16.mxu0 %v2662
    %2804 = vmatpush1.bf16.msra.mxu0 %v2661
    %2805 = vmatprep.subr.bf16.mxu0 %v2666
    %2806 = vmatpush1.bf16.msra.mxu0 %v2665
    %2807 = vmatprep.subr.bf16.mxu0 %v2670
    %2808 = vmatpush1.bf16.msra.mxu0 %v2669
    %2809 = vmatprep.subr.bf16.mxu0 %v2674
    %2810 = vmatpush1.bf16.msra.mxu0 %v2673
    %2811 = vmatprep.subr.bf16.mxu0 0
    %2812 = vmatpush1.bf16.msra.mxu0 0
    %2813 = vmatprep.subr.bf16.mxu0 0
    %2814 = vmatpush1.bf16.msra.mxu0 0
    %2815 = vmatprep.subr.bf16.mxu0 0
    %2816 = vmatpush1.bf16.msra.mxu0 0
    %2817 = vmatprep.subr.bf16.mxu0 0
    %2818 = vmatpush1.bf16.msra.mxu0 0
    %2819 = vmatprep.subr.bf16.mxu0 0
    %2820 = vmatpush1.bf16.msra.mxu0 0
    %2821 = vmatprep.subr.bf16.mxu0 0
    %2822 = vmatpush1.bf16.msra.mxu0 0
    %2823 = vmatprep.subr.bf16.mxu0 0
    %2824 = vmatpush1.bf16.msra.mxu0 0
    %2825 = vmatprep.subr.bf16.mxu0 0
    %2826 = vmatpush1.bf16.msra.mxu0 0
    %2827 = vmatprep.mubr.bf16.mxu0 0
    %2828 = vmatmul.mubr.bf16.gmra.mrb[0].mxu0 %v2641
    %v2829 = vpop.f32.mrb[0].mxu0
    %v2830 = vadd.f32 %v2744, %v2829
    %v2831 = vpop.f32.mrb[0].mxu0
    %v2832 = vadd.f32 %v2746, %v2831
    %v2833 = vpop.f32.mrb[0].mxu0
    %v2834 = vadd.f32 %v2748, %v2833
    %v2835 = vpop.f32.mrb[0].mxu0
    %v2836 = vadd.f32 %v2750, %v2835
    %2837 = vdwg.mxu0
    %2838 = vmatprep.subr.bf16.mxu0 %v2648
    %2839 = vmatpush1.bf16.msra.mxu0 %v2647
    %2840 = vmatprep.subr.bf16.mxu0 %v2652
    %2841 = vmatpush1.bf16.msra.mxu0 %v2651
    %2842 = vmatprep.subr.bf16.mxu0 %v2656
    %2843 = vmatpush1.bf16.msra.mxu0 %v2655
    %2844 = vmatprep.subr.bf16.mxu0 %v2660
    %2845 = vmatpush1.bf16.msra.mxu0 %v2659
    %2846 = vmatprep.subr.bf16.mxu0 %v2664
    %2847 = vmatpush1.bf16.msra.mxu0 %v2663
    %2848 = vmatprep.subr.bf16.mxu0 %v2668
    %2849 = vmatpush1.bf16.msra.mxu0 %v2667
    %2850 = vmatprep.subr.bf16.mxu0 %v2672
    %2851 = vmatpush1.bf16.msra.mxu0 %v2671
    %2852 = vmatprep.subr.bf16.mxu0 %v2676
    %2853 = vmatpush1.bf16.msra.mxu0 %v2675
    %2854 = vmatprep.subr.bf16.mxu0 0
    %2855 = vmatpush1.bf16.msra.mxu0 0
    %2856 = vmatprep.subr.bf16.mxu0 0
    %2857 = vmatpush1.bf16.msra.mxu0 0
    %2858 = vmatprep.subr.bf16.mxu0 0
    %2859 = vmatpush1.bf16.msra.mxu0 0
    %2860 = vmatprep.subr.bf16.mxu0 0
    %2861 = vmatpush1.bf16.msra.mxu0 0
    %2862 = vmatprep.subr.bf16.mxu0 0
    %2863 = vmatpush1.bf16.msra.mxu0 0
    %2864 = vmatprep.subr.bf16.mxu0 0
    %2865 = vmatpush1.bf16.msra.mxu0 0
    %2866 = vmatprep.subr.bf16.mxu0 0
    %2867 = vmatpush1.bf16.msra.mxu0 0
    %2868 = vmatprep.subr.bf16.mxu0 0
    %2869 = vmatpush1.bf16.msra.mxu0 0
    %2870 = vmatprep.mubr.bf16.mxu0 0
    %2871 = vmatmul.mubr.bf16.gmra.mrb[0].mxu0 %v2641
    %v2872 = vpop.f32.mrb[0].mxu0
    %v2873 = vadd.f32 %v2787, %v2872
    %v2874 = vpop.f32.mrb[0].mxu0
    %v2875 = vadd.f32 %v2789, %v2874
    %v2876 = vpop.f32.mrb[0].mxu0
    %v2877 = vadd.f32 %v2791, %v2876
    %v2878 = vpop.f32.mrb[0].mxu0
    %v2879 = vadd.f32 %v2793, %v2878
    %2880 = vdwg.mxu0
    %v2881 = vld [vmem:[#allocation2 + $0x200] sm:$0xff]
    %v2882 = vld [vmem:[#allocation2 + $0x208] sm:$0xff]
    %v2883 = vld [vmem:[#allocation2 + $0x210] sm:$0xff]
    %v2884 = vld [vmem:[#allocation2 + $0x218] sm:$0xff]
    %v2885 = vld [vmem:[#allocation2 + $0x220] sm:$0xff]
    %v2886 = vld [vmem:[#allocation2 + $0x228] sm:$0xff]
    %v2887 = vld [vmem:[#allocation2 + $0x230] sm:$0xff]
    %v2888 = vld [vmem:[#allocation2 + $0x238] sm:$0xff]
    %v2889 = vld [vmem:[#allocation2 + $0x240] sm:$0xff]
    %v2890 = vld [vmem:[#allocation2 + $0x248] sm:$0xff]
    %v2891 = vld [vmem:[#allocation2 + $0x250] sm:$0xff]
    %v2892 = vld [vmem:[#allocation2 + $0x258] sm:$0xff]
    %v2893 = vld [vmem:[#allocation2 + $0x260] sm:$0xff]
    %v2894 = vld [vmem:[#allocation2 + $0x268] sm:$0xff]
    %v2895 = vld [vmem:[#allocation2 + $0x270] sm:$0xff]
    %v2896 = vld [vmem:[#allocation2 + $0x278] sm:$0xff]
    %v2897 = vld [vmem:[#allocation2 + $0x280] sm:$0xff]
    %v2898 = vld [vmem:[#allocation2 + $0x288] sm:$0xff]
    %v2899 = vld [vmem:[#allocation2 + $0x290] sm:$0xff]
    %v2900 = vld [vmem:[#allocation2 + $0x298] sm:$0xff]
    %v2901 = vld [vmem:[#allocation2 + $0x2a0] sm:$0xff]
    %v2902 = vld [vmem:[#allocation2 + $0x2a8] sm:$0xff]
    %v2903 = vld [vmem:[#allocation2 + $0x2b0] sm:$0xff]
    %v2904 = vld [vmem:[#allocation2 + $0x2b8] sm:$0xff]
    %v2905 = vld [vmem:[#allocation2 + $0x2c0] sm:$0xff]
    %v2906 = vld [vmem:[#allocation2 + $0x2c8] sm:$0xff]
    %v2907 = vld [vmem:[#allocation2 + $0x2d0] sm:$0xff]
    %v2908 = vld [vmem:[#allocation2 + $0x2d8] sm:$0xff]
    %v2909 = vld [vmem:[#allocation2 + $0x2e0] sm:$0xff]
    %v2910 = vld [vmem:[#allocation2 + $0x2e8] sm:$0xff]
    %v2911 = vld [vmem:[#allocation2 + $0x2f0] sm:$0xff]
    %v2912 = vld [vmem:[#allocation2 + $0x2f8] sm:$0xff]
    %2913 = vmatprep.subr.bf16.mxu0 %v2882
    %2914 = vmatpush1.bf16.msra.mxu0 %v2881
    %2915 = vmatprep.subr.bf16.mxu0 %v2886
    %2916 = vmatpush1.bf16.msra.mxu0 %v2885
    %2917 = vmatprep.subr.bf16.mxu0 %v2890
    %2918 = vmatpush1.bf16.msra.mxu0 %v2889
    %2919 = vmatprep.subr.bf16.mxu0 %v2894
    %2920 = vmatpush1.bf16.msra.mxu0 %v2893
    %2921 = vmatprep.subr.bf16.mxu0 %v2898
    %2922 = vmatpush1.bf16.msra.mxu0 %v2897
    %2923 = vmatprep.subr.bf16.mxu0 %v2902
    %2924 = vmatpush1.bf16.msra.mxu0 %v2901
    %2925 = vmatprep.subr.bf16.mxu0 %v2906
    %2926 = vmatpush1.bf16.msra.mxu0 %v2905
    %2927 = vmatprep.subr.bf16.mxu0 %v2910
    %2928 = vmatpush1.bf16.msra.mxu0 %v2909
    %2929 = vmatprep.subr.bf16.mxu0 0
    %2930 = vmatpush1.bf16.msra.mxu0 0
    %2931 = vmatprep.subr.bf16.mxu0 0
    %2932 = vmatpush1.bf16.msra.mxu0 0
    %2933 = vmatprep.subr.bf16.mxu0 0
    %2934 = vmatpush1.bf16.msra.mxu0 0
    %2935 = vmatprep.subr.bf16.mxu0 0
    %2936 = vmatpush1.bf16.msra.mxu0 0
    %2937 = vmatprep.subr.bf16.mxu0 0
    %2938 = vmatpush1.bf16.msra.mxu0 0
    %2939 = vmatprep.subr.bf16.mxu0 0
    %2940 = vmatpush1.bf16.msra.mxu0 0
    %2941 = vmatprep.subr.bf16.mxu0 0
    %2942 = vmatpush1.bf16.msra.mxu0 0
    %2943 = vmatprep.subr.bf16.mxu0 0
    %2944 = vmatpush1.bf16.msra.mxu0 0
    %2945 = vmatprep.mubr.bf16.mxu0 0
    %2946 = vmatmul.mubr.bf16.gmra.mrb[0].mxu0 %v2643
    %v2947 = vpop.f32.mrb[0].mxu0
    %v2948 = vadd.f32 0.0, %v2947
    %v2949 = vpop.f32.mrb[0].mxu0
    %v2950 = vadd.f32 0.0, %v2949
    %v2951 = vpop.f32.mrb[0].mxu0
    %v2952 = vadd.f32 0.0, %v2951
    %v2953 = vpop.f32.mrb[0].mxu0
    %v2954 = vadd.f32 0.0, %v2953
    %2955 = vdwg.mxu0
    %2956 = vmatprep.subr.bf16.mxu0 %v2884
    %2957 = vmatpush1.bf16.msra.mxu0 %v2883
    %2958 = vmatprep.subr.bf16.mxu0 %v2888
    %2959 = vmatpush1.bf16.msra.mxu0 %v2887
    %2960 = vmatprep.subr.bf16.mxu0 %v2892
    %2961 = vmatpush1.bf16.msra.mxu0 %v2891
    %2962 = vmatprep.subr.bf16.mxu0 %v2896
    %2963 = vmatpush1.bf16.msra.mxu0 %v2895
    %2964 = vmatprep.subr.bf16.mxu0 %v2900
    %2965 = vmatpush1.bf16.msra.mxu0 %v2899
    %2966 = vmatprep.subr.bf16.mxu0 %v2904
    %2967 = vmatpush1.bf16.msra.mxu0 %v2903
    %2968 = vmatprep.subr.bf16.mxu0 %v2908
    %2969 = vmatpush1.bf16.msra.mxu0 %v2907
    %2970 = vmatprep.subr.bf16.mxu0 %v2912
    %2971 = vmatpush1.bf16.msra.mxu0 %v2911
    %2972 = vmatprep.subr.bf16.mxu0 0
    %2973 = vmatpush1.bf16.msra.mxu0 0
    %2974 = vmatprep.subr.bf16.mxu0 0
    %2975 = vmatpush1.bf16.msra.mxu0 0
    %2976 = vmatprep.subr.bf16.mxu0 0
    %2977 = vmatpush1.bf16.msra.mxu0 0
    %2978 = vmatprep.subr.bf16.mxu0 0
    %2979 = vmatpush1.bf16.msra.mxu0 0
    %2980 = vmatprep.subr.bf16.mxu0 0
    %2981 = vmatpush1.bf16.msra.mxu0 0
    %2982 = vmatprep.subr.bf16.mxu0 0
    %2983 = vmatpush1.bf16.msra.mxu0 0
    %2984 = vmatprep.subr.bf16.mxu0 0
    %2985 = vmatpush1.bf16.msra.mxu0 0
    %2986 = vmatprep.subr.bf16.mxu0 0
    %2987 = vmatpush1.bf16.msra.mxu0 0
    %2988 = vmatprep.mubr.bf16.mxu0 0
    %2989 = vmatmul.mubr.bf16.gmra.mrb[0].mxu0 %v2643
    %v2990 = vpop.f32.mrb[0].mxu0
    %v2991 = vadd.f32 0.0, %v2990
    %v2992 = vpop.f32.mrb[0].mxu0
    %v2993 = vadd.f32 0.0, %v2992
    %v2994 = vpop.f32.mrb[0].mxu0
    %v2995 = vadd.f32 0.0, %v2994
    %v2996 = vpop.f32.mrb[0].mxu0
    %v2997 = vadd.f32 0.0, %v2996
    %2998 = vdwg.mxu0
    %v2999 = vadd.f32 %v2830, %v2948
    %v3000 = vadd.f32 %v2832, %v2950
    %v3001 = vadd.f32 %v2873, %v2991
    %v3002 = vadd.f32 %v2875, %v2993
    %v3003 = vadd.f32 %v2834, %v2952
    %v3004 = vadd.f32 %v2836, %v2954
    %v3005 = vadd.f32 %v2877, %v2995
    %v3006 = vadd.f32 %v2879, %v2997
    %v3007 = vld [vmem:[#allocation2 + $0x300] sm:$0xff]
    %v3008 = vld [vmem:[#allocation2 + $0x308] sm:$0xff]
    %v3009 = vld [vmem:[#allocation2 + $0x310] sm:$0xff]
    %v3010 = vld [vmem:[#allocation2 + $0x318] sm:$0xff]
    %v3011 = vld [vmem:[#allocation2 + $0x320] sm:$0xff]
    %v3012 = vld [vmem:[#allocation2 + $0x328] sm:$0xff]
    %v3013 = vld [vmem:[#allocation2 + $0x330] sm:$0xff]
    %v3014 = vld [vmem:[#allocation2 + $0x338] sm:$0xff]
    %v3015 = vld [vmem:[#allocation2 + $0x340] sm:$0xff]
    %v3016 = vld [vmem:[#allocation2 + $0x348] sm:$0xff]
    %v3017 = vld [vmem:[#allocation2 + $0x350] sm:$0xff]
    %v3018 = vld [vmem:[#allocation2 + $0x358] sm:$0xff]
    %v3019 = vld [vmem:[#allocation2 + $0x360] sm:$0xff]
    %v3020 = vld [vmem:[#allocation2 + $0x368] sm:$0xff]
    %v3021 = vld [vmem:[#allocation2 + $0x370] sm:$0xff]
    %v3022 = vld [vmem:[#allocation2 + $0x378] sm:$0xff]
    %v3023 = vld [vmem:[#allocation2 + $0x380] sm:$0xff]
    %v3024 = vld [vmem:[#allocation2 + $0x388] sm:$0xff]
    %v3025 = vld [vmem:[#allocation2 + $0x390] sm:$0xff]
    %v3026 = vld [vmem:[#allocation2 + $0x398] sm:$0xff]
    %v3027 = vld [vmem:[#allocation2 + $0x3a0] sm:$0xff]
    %v3028 = vld [vmem:[#allocation2 + $0x3a8] sm:$0xff]
    %v3029 = vld [vmem:[#allocation2 + $0x3b0] sm:$0xff]
    %v3030 = vld [vmem:[#allocation2 + $0x3b8] sm:$0xff]
    %v3031 = vld [vmem:[#allocation2 + $0x3c0] sm:$0xff]
    %v3032 = vld [vmem:[#allocation2 + $0x3c8] sm:$0xff]
    %v3033 = vld [vmem:[#allocation2 + $0x3d0] sm:$0xff]
    %v3034 = vld [vmem:[#allocation2 + $0x3d8] sm:$0xff]
    %v3035 = vld [vmem:[#allocation2 + $0x3e0] sm:$0xff]
    %v3036 = vld [vmem:[#allocation2 + $0x3e8] sm:$0xff]
    %v3037 = vld [vmem:[#allocation2 + $0x3f0] sm:$0xff]
    %v3038 = vld [vmem:[#allocation2 + $0x3f8] sm:$0xff]
    %3039 = vmatprep.subr.bf16.mxu0 %v3008
    %3040 = vmatpush1.bf16.msra.mxu0 %v3007
    %3041 = vmatprep.subr.bf16.mxu0 %v3012
    %3042 = vmatpush1.bf16.msra.mxu0 %v3011
    %3043 = vmatprep.subr.bf16.mxu0 %v3016
    %3044 = vmatpush1.bf16.msra.mxu0 %v3015
    %3045 = vmatprep.subr.bf16.mxu0 %v3020
    %3046 = vmatpush1.bf16.msra.mxu0 %v3019
    %3047 = vmatprep.subr.bf16.mxu0 %v3024
    %3048 = vmatpush1.bf16.msra.mxu0 %v3023
    %3049 = vmatprep.subr.bf16.mxu0 %v3028
    %3050 = vmatpush1.bf16.msra.mxu0 %v3027
    %3051 = vmatprep.subr.bf16.mxu0 %v3032
    %3052 = vmatpush1.bf16.msra.mxu0 %v3031
    %3053 = vmatprep.subr.bf16.mxu0 %v3036
    %3054 = vmatpush1.bf16.msra.mxu0 %v3035
    %3055 = vmatprep.subr.bf16.mxu0 0
    %3056 = vmatpush1.bf16.msra.mxu0 0
    %3057 = vmatprep.subr.bf16.mxu0 0
    %3058 = vmatpush1.bf16.msra.mxu0 0
    %3059 = vmatprep.subr.bf16.mxu0 0
    %3060 = vmatpush1.bf16.msra.mxu0 0
    %3061 = vmatprep.subr.bf16.mxu0 0
    %3062 = vmatpush1.bf16.msra.mxu0 0
    %3063 = vmatprep.subr.bf16.mxu0 0
    %3064 = vmatpush1.bf16.msra.mxu0 0
    %3065 = vmatprep.subr.bf16.mxu0 0
    %3066 = vmatpush1.bf16.msra.mxu0 0
    %3067 = vmatprep.subr.bf16.mxu0 0
    %3068 = vmatpush1.bf16.msra.mxu0 0
    %3069 = vmatprep.subr.bf16.mxu0 0
    %3070 = vmatpush1.bf16.msra.mxu0 0
    %3071 = vmatprep.mubr.bf16.mxu0 0
    %3072 = vmatmul.mubr.bf16.gmra.mrb[0].mxu0 %v2644
    %v3073 = vpop.f32.mrb[0].mxu0
    %v3074 = vadd.f32 0.0, %v3073
    %v3075 = vpop.f32.mrb[0].mxu0
    %v3076 = vadd.f32 0.0, %v3075
    %v3077 = vpop.f32.mrb[0].mxu0
    %v3078 = vadd.f32 0.0, %v3077
    %v3079 = vpop.f32.mrb[0].mxu0
    %v3080 = vadd.f32 0.0, %v3079
    %3081 = vdwg.mxu0
    %3082 = vmatprep.subr.bf16.mxu0 %v3010
    %3083 = vmatpush1.bf16.msra.mxu0 %v3009
    %3084 = vmatprep.subr.bf16.mxu0 %v3014
    %3085 = vmatpush1.bf16.msra.mxu0 %v3013
    %3086 = vmatprep.subr.bf16.mxu0 %v3018
    %3087 = vmatpush1.bf16.msra.mxu0 %v3017
    %3088 = vmatprep.subr.bf16.mxu0 %v3022
    %3089 = vmatpush1.bf16.msra.mxu0 %v3021
    %3090 = vmatprep.subr.bf16.mxu0 %v3026
    %3091 = vmatpush1.bf16.msra.mxu0 %v3025
    %3092 = vmatprep.subr.bf16.mxu0 %v3030
    %3093 = vmatpush1.bf16.msra.mxu0 %v3029
    %3094 = vmatprep.subr.bf16.mxu0 %v3034
    %3095 = vmatpush1.bf16.msra.mxu0 %v3033
    %3096 = vmatprep.subr.bf16.mxu0 %v3038
    %3097 = vmatpush1.bf16.msra.mxu0 %v3037
    %3098 = vmatprep.subr.bf16.mxu0 0
    %3099 = vmatpush1.bf16.msra.mxu0 0
    %3100 = vmatprep.subr.bf16.mxu0 0
    %3101 = vmatpush1.bf16.msra.mxu0 0
    %3102 = vmatprep.subr.bf16.mxu0 0
    %3103 = vmatpush1.bf16.msra.mxu0 0
    %3104 = vmatprep.subr.bf16.mxu0 0
    %3105 = vmatpush1.bf16.msra.mxu0 0
    %3106 = vmatprep.subr.bf16.mxu0 0
    %3107 = vmatpush1.bf16.msra.mxu0 0
    %3108 = vmatprep.subr.bf16.mxu0 0
    %3109 = vmatpush1.bf16.msra.mxu0 0
    %3110 = vmatprep.subr.bf16.mxu0 0
    %3111 = vmatpush1.bf16.msra.mxu0 0
    %3112 = vmatprep.subr.bf16.mxu0 0
    %3113 = vmatpush1.bf16.msra.mxu0 0
    %3114 = vmatprep.mubr.bf16.mxu0 0
    %3115 = vmatmul.mubr.bf16.gmra.mrb[0].mxu0 %v2644
    %v3116 = vpop.f32.mrb[0].mxu0
    %v3117 = vadd.f32 0.0, %v3116
    %v3118 = vpop.f32.mrb[0].mxu0
    %v3119 = vadd.f32 0.0, %v3118
    %v3120 = vpop.f32.mrb[0].mxu0
    %v3121 = vadd.f32 0.0, %v3120
    %v3122 = vpop.f32.mrb[0].mxu0
    %v3123 = vadd.f32 0.0, %v3122
    %3124 = vdwg.mxu0
    %v3125 = vadd.f32 %v2999, %v3074
    %v3126 = vadd.f32 %v3000, %v3076
    %v3127 = vadd.f32 %v3001, %v3117
    %v3128 = vadd.f32 %v3002, %v3119
    %v3129 = vadd.f32 %v3003, %v3078
    %v3130 = vadd.f32 %v3004, %v3080
    %v3131 = vadd.f32 %v3005, %v3121
    %v3132 = vadd.f32 %v3006, %v3123
    %v3133 = vld [vmem:[%s2 + $0x6] sm:$0xf]
    %v3135 = vlaneseq
    %v3136 = vshrl.u32 %v3135, 7
    %v3137 = vsub.s32 0, %v3136
    %v3138 = vrot.slane %v3133, %v3137
    %v3139 = vlaneseq
    %v3140 = vshrl.u32 %v3139, 7
    %v3141 = vsub.s32 1, %v3140
    %v3142 = vrot.slane %v3133, %v3141
    %v3143 = vlaneseq
    %v3144 = vshrl.u32 %v3143, 7
    %v3145 = vsub.s32 2, %v3144
    %v3146 = vrot.slane %v3133, %v3145
    %v3147 = vlaneseq
    %v3148 = vshrl.u32 %v3147, 7
    %v3149 = vsub.s32 3, %v3148
    %v3150 = vrot.slane %v3133, %v3149
    %v3155 = vadd.f32 %v3125, %v3138
    %v3156 = vadd.f32 %v3126, %v3142
    %v3157 = vadd.f32 %v3127, %v3146
    %v3158 = vadd.f32 %v3128, %v3150
    %v3159 = vadd.f32 %v3129, %v3138
    %v3160 = vadd.f32 %v3130, %v3142
    %v3161 = vadd.f32 %v3131, %v3146
    %v3162 = vadd.f32 %v3132, %v3150
    %v3163 = vadd.f32 %v3155, %v3156
    %v3164 = vadd.f32 %v3163, %v3157
    %v3165 = vadd.f32 %v3164, %v3158
    %3166 = vadd.xlane.f32.xlu0 %v3165
    %v3167 = vpop.xlane.xlu0 %3166
    %v3168 = vadd.f32 %v3159, %v3160
    %v3169 = vadd.f32 %v3168, %v3161
    %v3170 = vadd.f32 %v3169, %v3162
    %3171 = vadd.xlane.f32.xlu0 %v3170
    %v3172 = vpop.xlane.xlu0 %3171
    %v3173 = vrcp.pop 512.0
    %v3174 = vmul.f32 %v3167, %v3173
    %v3175 = vmul.f32 %v3172, %v3173
    %v3176 = vsub.f32 %v3155, %v3174
    %v3177 = vsub.f32 %v3156, %v3174
    %v3178 = vsub.f32 %v3157, %v3174
    %v3179 = vsub.f32 %v3158, %v3174
    %v3180 = vsub.f32 %v3159, %v3175
    %v3181 = vsub.f32 %v3160, %v3175
    %v3182 = vsub.f32 %v3161, %v3175
    %v3183 = vsub.f32 %v3162, %v3175
    %v3184 = vmul.f32 %v3176, %v3176
    %v3185 = vmul.f32 %v3177, %v3177
    %v3186 = vmul.f32 %v3178, %v3178
    %v3187 = vmul.f32 %v3179, %v3179
    %v3188 = vmul.f32 %v3180, %v3180
    %v3189 = vmul.f32 %v3181, %v3181
    %v3190 = vmul.f32 %v3182, %v3182
    %v3191 = vmul.f32 %v3183, %v3183
    %v3192 = vadd.f32 %v3184, %v3185
    %v3193 = vadd.f32 %v3192, %v3186
    %v3194 = vadd.f32 %v3193, %v3187
    %3195 = vadd.xlane.f32.xlu0 %v3194
    %v3196 = vpop.xlane.xlu0 %3195
    %v3197 = vadd.f32 %v3188, %v3189
    %v3198 = vadd.f32 %v3197, %v3190
    %v3199 = vadd.f32 %v3198, %v3191
    %3200 = vadd.xlane.f32.xlu0 %v3199
    %v3201 = vpop.xlane.xlu0 %3200
    %v3202 = vmul.f32 %v3196, %v3173
    %v3203 = vmul.f32 %v3201, %v3173
    %v3204 = vadd.f32 %v3202, 1e-05
    %v3205 = vadd.f32 %v3203, 1e-05
    %v3206 = vrsqrt.pop %v3204
    %v3207 = vrsqrt.pop %v3205
    %v3208 = vmul.f32 %v3176, %v3206
    %v3209 = vmul.f32 %v3177, %v3206
    %v3210 = vmul.f32 %v3178, %v3206
    %v3211 = vmul.f32 %v3179, %v3206
    %v3212 = vmul.f32 %v3180, %v3207
    %v3213 = vmul.f32 %v3181, %v3207
    %v3214 = vmul.f32 %v3182, %v3207
    %v3215 = vmul.f32 %v3183, %v3207
    %v3216 = vld [vmem:[%s2 + $0xa] sm:$0xf]
    %v3218 = vlaneseq
    %v3219 = vshrl.u32 %v3218, 7
    %v3220 = vsub.s32 0, %v3219
    %v3221 = vrot.slane %v3216, %v3220
    %v3222 = vlaneseq
    %v3223 = vshrl.u32 %v3222, 7
    %v3224 = vsub.s32 1, %v3223
    %v3225 = vrot.slane %v3216, %v3224
    %v3226 = vlaneseq
    %v3227 = vshrl.u32 %v3226, 7
    %v3228 = vsub.s32 2, %v3227
    %v3229 = vrot.slane %v3216, %v3228
    %v3230 = vlaneseq
    %v3231 = vshrl.u32 %v3230, 7
    %v3232 = vsub.s32 3, %v3231
    %v3233 = vrot.slane %v3216, %v3232
    %v3238 = vmul.f32 %v3208, %v3221
    %v3239 = vmul.f32 %v3209, %v3225
    %v3240 = vmul.f32 %v3210, %v3229
    %v3241 = vmul.f32 %v3211, %v3233
    %v3242 = vmul.f32 %v3212, %v3221
    %v3243 = vmul.f32 %v3213, %v3225
    %v3244 = vmul.f32 %v3214, %v3229
    %v3245 = vmul.f32 %v3215, %v3233
    %v3246 = vld [vmem:[%s2 + $0xe] sm:$0xf]
    %v3248 = vlaneseq
    %v3249 = vshrl.u32 %v3248, 7
    %v3250 = vsub.s32 0, %v3249
    %v3251 = vrot.slane %v3246, %v3250
    %v3252 = vlaneseq
    %v3253 = vshrl.u32 %v3252, 7
    %v3254 = vsub.s32 1, %v3253
    %v3255 = vrot.slane %v3246, %v3254
    %v3256 = vlaneseq
    %v3257 = vshrl.u32 %v3256, 7
    %v3258 = vsub.s32 2, %v3257
    %v3259 = vrot.slane %v3246, %v3258
    %v3260 = vlaneseq
    %v3261 = vshrl.u32 %v3260, 7
    %v3262 = vsub.s32 3, %v3261
    %v3263 = vrot.slane %v3246, %v3262
    %v3268 = vadd.f32 %v3238, %v3251
    %v3269 = vadd.f32 %v3239, %v3255
    %v3270 = vadd.f32 %v3240, %v3259
    %v3271 = vadd.f32 %v3241, %v3263
    %v3272 = vadd.f32 %v3242, %v3251
    %v3273 = vadd.f32 %v3243, %v3255
    %v3274 = vadd.f32 %v3244, %v3259
    %v3275 = vadd.f32 %v3245, %v3263
    %v3276 = vmax.f32 %v3268, 0.0
    %v3277 = vmax.f32 %v3269, 0.0
    %v3278 = vmax.f32 %v3270, 0.0
    %v3279 = vmax.f32 %v3271, 0.0
    %v3280 = vmax.f32 %v3272, 0.0
    %v3281 = vmax.f32 %v3273, 0.0
    %v3282 = vmax.f32 %v3274, 0.0
    %v3283 = vmax.f32 %v3275, 0.0
    %s3284 = smul.u32 %s2637, 2
    %s3285 = sshll.u32 %s3284, 4
    %3286 = dma.done %s1144, %s3285
    %v3287 = vpack.c.bf16 %v3280, %v3276
    %v3288 = vpack.c.bf16 %v3281, %v3277
    %v3289 = vpack.c.bf16 %v3282, %v3278
    %v3290 = vpack.c.bf16 %v3283, %v3279
    %v3291 = vld [vmem:[#allocation3] sm:$0xff]
    %v3292 = vld [vmem:[#allocation3 + $0x8] sm:$0xff]
    %v3293 = vld [vmem:[#allocation3 + $0x10] sm:$0xff]
    %v3294 = vld [vmem:[#allocation3 + $0x18] sm:$0xff]
    %v3295 = vld [vmem:[#allocation3 + $0x20] sm:$0xff]
    %v3296 = vld [vmem:[#allocation3 + $0x28] sm:$0xff]
    %v3297 = vld [vmem:[#allocation3 + $0x30] sm:$0xff]
    %v3298 = vld [vmem:[#allocation3 + $0x38] sm:$0xff]
    %v3299 = vld [vmem:[#allocation3 + $0x40] sm:$0xff]
    %v3300 = vld [vmem:[#allocation3 + $0x48] sm:$0xff]
    %v3301 = vld [vmem:[#allocation3 + $0x50] sm:$0xff]
    %v3302 = vld [vmem:[#allocation3 + $0x58] sm:$0xff]
    %v3303 = vld [vmem:[#allocation3 + $0x60] sm:$0xff]
    %v3304 = vld [vmem:[#allocation3 + $0x68] sm:$0xff]
    %v3305 = vld [vmem:[#allocation3 + $0x70] sm:$0xff]
    %v3306 = vld [vmem:[#allocation3 + $0x78] sm:$0xff]
    %v3307 = vld [vmem:[#allocation3 + $0x80] sm:$0xff]
    %v3308 = vld [vmem:[#allocation3 + $0x88] sm:$0xff]
    %v3309 = vld [vmem:[#allocation3 + $0x90] sm:$0xff]
    %v3310 = vld [vmem:[#allocation3 + $0x98] sm:$0xff]
    %v3311 = vld [vmem:[#allocation3 + $0xa0] sm:$0xff]
    %v3312 = vld [vmem:[#allocation3 + $0xa8] sm:$0xff]
    %v3313 = vld [vmem:[#allocation3 + $0xb0] sm:$0xff]
    %v3314 = vld [vmem:[#allocation3 + $0xb8] sm:$0xff]
    %v3315 = vld [vmem:[#allocation3 + $0xc0] sm:$0xff]
    %v3316 = vld [vmem:[#allocation3 + $0xc8] sm:$0xff]
    %v3317 = vld [vmem:[#allocation3 + $0xd0] sm:$0xff]
    %v3318 = vld [vmem:[#allocation3 + $0xd8] sm:$0xff]
    %v3319 = vld [vmem:[#allocation3 + $0xe0] sm:$0xff]
    %v3320 = vld [vmem:[#allocation3 + $0xe8] sm:$0xff]
    %v3321 = vld [vmem:[#allocation3 + $0xf0] sm:$0xff]
    %v3322 = vld [vmem:[#allocation3 + $0xf8] sm:$0xff]
    %v3323 = vld [vmem:[#allocation3 + $0x100] sm:$0xff]
    %v3324 = vld [vmem:[#allocation3 + $0x108] sm:$0xff]
    %v3325 = vld [vmem:[#allocation3 + $0x110] sm:$0xff]
    %v3326 = vld [vmem:[#allocation3 + $0x118] sm:$0xff]
    %v3327 = vld [vmem:[#allocation3 + $0x120] sm:$0xff]
    %v3328 = vld [vmem:[#allocation3 + $0x128] sm:$0xff]
    %v3329 = vld [vmem:[#allocation3 + $0x130] sm:$0xff]
    %v3330 = vld [vmem:[#allocation3 + $0x138] sm:$0xff]
    %v3331 = vld [vmem:[#allocation3 + $0x140] sm:$0xff]
    %v3332 = vld [vmem:[#allocation3 + $0x148] sm:$0xff]
    %v3333 = vld [vmem:[#allocation3 + $0x150] sm:$0xff]
    %v3334 = vld [vmem:[#allocation3 + $0x158] sm:$0xff]
    %v3335 = vld [vmem:[#allocation3 + $0x160] sm:$0xff]
    %v3336 = vld [vmem:[#allocation3 + $0x168] sm:$0xff]
    %v3337 = vld [vmem:[#allocation3 + $0x170] sm:$0xff]
    %v3338 = vld [vmem:[#allocation3 + $0x178] sm:$0xff]
    %v3339 = vld [vmem:[#allocation3 + $0x180] sm:$0xff]
    %v3340 = vld [vmem:[#allocation3 + $0x188] sm:$0xff]
    %v3341 = vld [vmem:[#allocation3 + $0x190] sm:$0xff]
    %v3342 = vld [vmem:[#allocation3 + $0x198] sm:$0xff]
    %v3343 = vld [vmem:[#allocation3 + $0x1a0] sm:$0xff]
    %v3344 = vld [vmem:[#allocation3 + $0x1a8] sm:$0xff]
    %v3345 = vld [vmem:[#allocation3 + $0x1b0] sm:$0xff]
    %v3346 = vld [vmem:[#allocation3 + $0x1b8] sm:$0xff]
    %v3347 = vld [vmem:[#allocation3 + $0x1c0] sm:$0xff]
    %v3348 = vld [vmem:[#allocation3 + $0x1c8] sm:$0xff]
    %v3349 = vld [vmem:[#allocation3 + $0x1d0] sm:$0xff]
    %v3350 = vld [vmem:[#allocation3 + $0x1d8] sm:$0xff]
    %v3351 = vld [vmem:[#allocation3 + $0x1e0] sm:$0xff]
    %v3352 = vld [vmem:[#allocation3 + $0x1e8] sm:$0xff]
    %v3353 = vld [vmem:[#allocation3 + $0x1f0] sm:$0xff]
    %v3354 = vld [vmem:[#allocation3 + $0x1f8] sm:$0xff]
    %v3355 = vld [vmem:[%s2 + $0x12] sm:$0x3]
    %v3357 = vlaneseq
    %v3358 = vshrl.u32 %v3357, 7
    %v3359 = vsub.s32 0, %v3358
    %v3360 = vrot.slane %v3355, %v3359
    %v3361 = vlaneseq
    %v3362 = vshrl.u32 %v3361, 7
    %v3363 = vsub.s32 1, %v3362
    %v3364 = vrot.slane %v3355, %v3363
    %3367 = vmatprep.subr.bf16.mxu0 %v3292
    %3368 = vmatpush1.bf16.msra.mxu0 %v3291
    %3369 = vmatprep.subr.bf16.mxu0 %v3294
    %3370 = vmatpush1.bf16.msra.mxu0 %v3293
    %3371 = vmatprep.subr.bf16.mxu0 %v3296
    %3372 = vmatpush1.bf16.msra.mxu0 %v3295
    %3373 = vmatprep.subr.bf16.mxu0 %v3298
    %3374 = vmatpush1.bf16.msra.mxu0 %v3297
    %3375 = vmatprep.subr.bf16.mxu0 %v3300
    %3376 = vmatpush1.bf16.msra.mxu0 %v3299
    %3377 = vmatprep.subr.bf16.mxu0 %v3302
    %3378 = vmatpush1.bf16.msra.mxu0 %v3301
    %3379 = vmatprep.subr.bf16.mxu0 %v3304
    %3380 = vmatpush1.bf16.msra.mxu0 %v3303
    %3381 = vmatprep.subr.bf16.mxu0 %v3306
    %3382 = vmatpush1.bf16.msra.mxu0 %v3305
    %3383 = vmatprep.subr.bf16.mxu0 %v3308
    %3384 = vmatpush1.bf16.msra.mxu0 %v3307
    %3385 = vmatprep.subr.bf16.mxu0 %v3310
    %3386 = vmatpush1.bf16.msra.mxu0 %v3309
    %3387 = vmatprep.subr.bf16.mxu0 %v3312
    %3388 = vmatpush1.bf16.msra.mxu0 %v3311
    %3389 = vmatprep.subr.bf16.mxu0 %v3314
    %3390 = vmatpush1.bf16.msra.mxu0 %v3313
    %3391 = vmatprep.subr.bf16.mxu0 %v3316
    %3392 = vmatpush1.bf16.msra.mxu0 %v3315
    %3393 = vmatprep.subr.bf16.mxu0 %v3318
    %3394 = vmatpush1.bf16.msra.mxu0 %v3317
    %3395 = vmatprep.subr.bf16.mxu0 %v3320
    %3396 = vmatpush1.bf16.msra.mxu0 %v3319
    %3397 = vmatprep.subr.bf16.mxu0 %v3322
    %3398 = vmatpush1.bf16.msra.mxu0 %v3321
    %3399 = vmatprep.mubr.bf16.mxu0 %v3288
    %3400 = vmatmul.mubr.bf16.gmra.mrb[0].mxu0 %v3287
    %v3401 = vpop.f32.mrb[0].mxu0
    %v3402 = vadd.f32 %v3360, %v3401
    %v3403 = vpop.f32.mrb[0].mxu0
    %v3404 = vadd.f32 %v3364, %v3403
    %v3405 = vpop.f32.mrb[0].mxu0
    %v3406 = vadd.f32 %v3360, %v3405
    %v3407 = vpop.f32.mrb[0].mxu0
    %v3408 = vadd.f32 %v3364, %v3407
    %3409 = vdwg.mxu0
    %3410 = vmatprep.subr.bf16.mxu0 %v3324
    %3411 = vmatpush1.bf16.msra.mxu0 %v3323
    %3412 = vmatprep.subr.bf16.mxu0 %v3326
    %3413 = vmatpush1.bf16.msra.mxu0 %v3325
    %3414 = vmatprep.subr.bf16.mxu0 %v3328
    %3415 = vmatpush1.bf16.msra.mxu0 %v3327
    %3416 = vmatprep.subr.bf16.mxu0 %v3330
    %3417 = vmatpush1.bf16.msra.mxu0 %v3329
    %3418 = vmatprep.subr.bf16.mxu0 %v3332
    %3419 = vmatpush1.bf16.msra.mxu0 %v3331
    %3420 = vmatprep.subr.bf16.mxu0 %v3334
    %3421 = vmatpush1.bf16.msra.mxu0 %v3333
    %3422 = vmatprep.subr.bf16.mxu0 %v3336
    %3423 = vmatpush1.bf16.msra.mxu0 %v3335
    %3424 = vmatprep.subr.bf16.mxu0 %v3338
    %3425 = vmatpush1.bf16.msra.mxu0 %v3337
    %3426 = vmatprep.subr.bf16.mxu0 %v3340
    %3427 = vmatpush1.bf16.msra.mxu0 %v3339
    %3428 = vmatprep.subr.bf16.mxu0 %v3342
    %3429 = vmatpush1.bf16.msra.mxu0 %v3341
    %3430 = vmatprep.subr.bf16.mxu0 %v3344
    %3431 = vmatpush1.bf16.msra.mxu0 %v3343
    %3432 = vmatprep.subr.bf16.mxu0 %v3346
    %3433 = vmatpush1.bf16.msra.mxu0 %v3345
    %3434 = vmatprep.subr.bf16.mxu0 %v3348
    %3435 = vmatpush1.bf16.msra.mxu0 %v3347
    %3436 = vmatprep.subr.bf16.mxu0 %v3350
    %3437 = vmatpush1.bf16.msra.mxu0 %v3349
    %3438 = vmatprep.subr.bf16.mxu0 %v3352
    %3439 = vmatpush1.bf16.msra.mxu0 %v3351
    %3440 = vmatprep.subr.bf16.mxu0 %v3354
    %3441 = vmatpush1.bf16.msra.mxu0 %v3353
    %3442 = vmatprep.mubr.bf16.mxu0 %v3290
    %3443 = vmatmul.mubr.bf16.gmra.mrb[0].mxu0 %v3289
    %v3444 = vpop.f32.mrb[0].mxu0
    %v3445 = vadd.f32 %v3402, %v3444
    %v3446 = vpop.f32.mrb[0].mxu0
    %v3447 = vadd.f32 %v3404, %v3446
    %v3448 = vpop.f32.mrb[0].mxu0
    %v3449 = vadd.f32 %v3406, %v3448
    %v3450 = vpop.f32.mrb[0].mxu0
    %v3451 = vadd.f32 %v3408, %v3450
    %3452 = vdwg.mxu0
    %s3453 = smul.u32 4, 32
    %s3454 = smul.u32 %s3453, 4
    %s3455 = sshll.u32 %s3454, 4
    %3456 = dma.done %s1180, %s3455
    %v3457 = vpack.c.bf16 %v3449, %v3445
    %v3458 = vpack.c.bf16 %v3451, %v3447
    %v3459 = vld [vmem:[#allocation4] sm:$0xff]
    %v3460 = vld [vmem:[#allocation4 + $0x8] sm:$0xff]
    %v3461 = vld [vmem:[#allocation4 + $0x10] sm:$0xff]
    %v3462 = vld [vmem:[#allocation4 + $0x18] sm:$0xff]
    %v3463 = vld [vmem:[#allocation4 + $0x20] sm:$0xff]
    %v3464 = vld [vmem:[#allocation4 + $0x28] sm:$0xff]
    %v3465 = vld [vmem:[#allocation4 + $0x30] sm:$0xff]
    %v3466 = vld [vmem:[#allocation4 + $0x38] sm:$0xff]
    %v3467 = vld [vmem:[#allocation4 + $0x40] sm:$0xff]
    %v3468 = vld [vmem:[#allocation4 + $0x48] sm:$0xff]
    %v3469 = vld [vmem:[#allocation4 + $0x50] sm:$0xff]
    %v3470 = vld [vmem:[#allocation4 + $0x58] sm:$0xff]
    %v3471 = vld [vmem:[#allocation4 + $0x60] sm:$0xff]
    %v3472 = vld [vmem:[#allocation4 + $0x68] sm:$0xff]
    %v3473 = vld [vmem:[#allocation4 + $0x70] sm:$0xff]
    %v3474 = vld [vmem:[#allocation4 + $0x78] sm:$0xff]
    %v3475 = vld [vmem:[#allocation4 + $0x80] sm:$0xff]
    %v3476 = vld [vmem:[#allocation4 + $0x88] sm:$0xff]
    %v3477 = vld [vmem:[#allocation4 + $0x90] sm:$0xff]
    %v3478 = vld [vmem:[#allocation4 + $0x98] sm:$0xff]
    %v3479 = vld [vmem:[#allocation4 + $0xa0] sm:$0xff]
    %v3480 = vld [vmem:[#allocation4 + $0xa8] sm:$0xff]
    %v3481 = vld [vmem:[#allocation4 + $0xb0] sm:$0xff]
    %v3482 = vld [vmem:[#allocation4 + $0xb8] sm:$0xff]
    %v3483 = vld [vmem:[#allocation4 + $0xc0] sm:$0xff]
    %v3484 = vld [vmem:[#allocation4 + $0xc8] sm:$0xff]
    %v3485 = vld [vmem:[#allocation4 + $0xd0] sm:$0xff]
    %v3486 = vld [vmem:[#allocation4 + $0xd8] sm:$0xff]
    %v3487 = vld [vmem:[#allocation4 + $0xe0] sm:$0xff]
    %v3488 = vld [vmem:[#allocation4 + $0xe8] sm:$0xff]
    %v3489 = vld [vmem:[#allocation4 + $0xf0] sm:$0xff]
    %v3490 = vld [vmem:[#allocation4 + $0xf8] sm:$0xff]
    %v3491 = vld [vmem:[#allocation4 + $0x100] sm:$0xff]
    %v3492 = vld [vmem:[#allocation4 + $0x108] sm:$0xff]
    %v3493 = vld [vmem:[#allocation4 + $0x110] sm:$0xff]
    %v3494 = vld [vmem:[#allocation4 + $0x118] sm:$0xff]
    %v3495 = vld [vmem:[#allocation4 + $0x120] sm:$0xff]
    %v3496 = vld [vmem:[#allocation4 + $0x128] sm:$0xff]
    %v3497 = vld [vmem:[#allocation4 + $0x130] sm:$0xff]
    %v3498 = vld [vmem:[#allocation4 + $0x138] sm:$0xff]
    %v3499 = vld [vmem:[#allocation4 + $0x140] sm:$0xff]
    %v3500 = vld [vmem:[#allocation4 + $0x148] sm:$0xff]
    %v3501 = vld [vmem:[#allocation4 + $0x150] sm:$0xff]
    %v3502 = vld [vmem:[#allocation4 + $0x158] sm:$0xff]
    %v3503 = vld [vmem:[#allocation4 + $0x160] sm:$0xff]
    %v3504 = vld [vmem:[#allocation4 + $0x168] sm:$0xff]
    %v3505 = vld [vmem:[#allocation4 + $0x170] sm:$0xff]
    %v3506 = vld [vmem:[#allocation4 + $0x178] sm:$0xff]
    %v3507 = vld [vmem:[#allocation4 + $0x180] sm:$0xff]
    %v3508 = vld [vmem:[#allocation4 + $0x188] sm:$0xff]
    %v3509 = vld [vmem:[#allocation4 + $0x190] sm:$0xff]
    %v3510 = vld [vmem:[#allocation4 + $0x198] sm:$0xff]
    %v3511 = vld [vmem:[#allocation4 + $0x1a0] sm:$0xff]
    %v3512 = vld [vmem:[#allocation4 + $0x1a8] sm:$0xff]
    %v3513 = vld [vmem:[#allocation4 + $0x1b0] sm:$0xff]
    %v3514 = vld [vmem:[#allocation4 + $0x1b8] sm:$0xff]
    %v3515 = vld [vmem:[#allocation4 + $0x1c0] sm:$0xff]
    %v3516 = vld [vmem:[#allocation4 + $0x1c8] sm:$0xff]
    %v3517 = vld [vmem:[#allocation4 + $0x1d0] sm:$0xff]
    %v3518 = vld [vmem:[#allocation4 + $0x1d8] sm:$0xff]
    %v3519 = vld [vmem:[#allocation4 + $0x1e0] sm:$0xff]
    %v3520 = vld [vmem:[#allocation4 + $0x1e8] sm:$0xff]
    %v3521 = vld [vmem:[#allocation4 + $0x1f0] sm:$0xff]
    %v3522 = vld [vmem:[#allocation4 + $0x1f8] sm:$0xff]
    %3523 = vmatprep.subr.bf16.mxu0 %v3460
    %3524 = vmatpush1.bf16.msra.mxu0 %v3459
    %3525 = vmatprep.subr.bf16.mxu0 %v3464
    %3526 = vmatpush1.bf16.msra.mxu0 %v3463
    %3527 = vmatprep.subr.bf16.mxu0 %v3468
    %3528 = vmatpush1.bf16.msra.mxu0 %v3467
    %3529 = vmatprep.subr.bf16.mxu0 %v3472
    %3530 = vmatpush1.bf16.msra.mxu0 %v3471
    %3531 = vmatprep.subr.bf16.mxu0 %v3476
    %3532 = vmatpush1.bf16.msra.mxu0 %v3475
    %3533 = vmatprep.subr.bf16.mxu0 %v3480
    %3534 = vmatpush1.bf16.msra.mxu0 %v3479
    %3535 = vmatprep.subr.bf16.mxu0 %v3484
    %3536 = vmatpush1.bf16.msra.mxu0 %v3483
    %3537 = vmatprep.subr.bf16.mxu0 %v3488
    %3538 = vmatpush1.bf16.msra.mxu0 %v3487
    %3539 = vmatprep.subr.bf16.mxu0 %v3492
    %3540 = vmatpush1.bf16.msra.mxu0 %v3491
    %3541 = vmatprep.subr.bf16.mxu0 %v3496
    %3542 = vmatpush1.bf16.msra.mxu0 %v3495
    %3543 = vmatprep.subr.bf16.mxu0 %v3500
    %3544 = vmatpush1.bf16.msra.mxu0 %v3499
    %3545 = vmatprep.subr.bf16.mxu0 %v3504
    %3546 = vmatpush1.bf16.msra.mxu0 %v3503
    %3547 = vmatprep.subr.bf16.mxu0 %v3508
    %3548 = vmatpush1.bf16.msra.mxu0 %v3507
    %3549 = vmatprep.subr.bf16.mxu0 %v3512
    %3550 = vmatpush1.bf16.msra.mxu0 %v3511
    %3551 = vmatprep.subr.bf16.mxu0 %v3516
    %3552 = vmatpush1.bf16.msra.mxu0 %v3515
    %3553 = vmatprep.subr.bf16.mxu0 %v3520
    %3554 = vmatpush1.bf16.msra.mxu0 %v3519
    %3555 = vmatprep.mubr.bf16.mxu0 %v3458
    %3556 = vmatmul.mubr.bf16.gmra.mrb[0].mxu0 %v3457
    %v3557 = vpop.f32.mrb[0].mxu0
    %v3558 = vadd.f32 0.0, %v3557
    %v3559 = vpop.f32.mrb[0].mxu0
    %v3560 = vadd.f32 0.0, %v3559
    %v3561 = vpop.f32.mrb[0].mxu0
    %v3562 = vadd.f32 0.0, %v3561
    %v3563 = vpop.f32.mrb[0].mxu0
    %v3564 = vadd.f32 0.0, %v3563
    %3565 = vdwg.mxu0
    %3566 = vmatprep.subr.bf16.mxu0 %v3462
    %3567 = vmatpush1.bf16.msra.mxu0 %v3461
    %3568 = vmatprep.subr.bf16.mxu0 %v3466
    %3569 = vmatpush1.bf16.msra.mxu0 %v3465
    %3570 = vmatprep.subr.bf16.mxu0 %v3470
    %3571 = vmatpush1.bf16.msra.mxu0 %v3469
    %3572 = vmatprep.subr.bf16.mxu0 %v3474
    %3573 = vmatpush1.bf16.msra.mxu0 %v3473
    %3574 = vmatprep.subr.bf16.mxu0 %v3478
    %3575 = vmatpush1.bf16.msra.mxu0 %v3477
    %3576 = vmatprep.subr.bf16.mxu0 %v3482
    %3577 = vmatpush1.bf16.msra.mxu0 %v3481
    %3578 = vmatprep.subr.bf16.mxu0 %v3486
    %3579 = vmatpush1.bf16.msra.mxu0 %v3485
    %3580 = vmatprep.subr.bf16.mxu0 %v3490
    %3581 = vmatpush1.bf16.msra.mxu0 %v3489
    %3582 = vmatprep.subr.bf16.mxu0 %v3494
    %3583 = vmatpush1.bf16.msra.mxu0 %v3493
    %3584 = vmatprep.subr.bf16.mxu0 %v3498
    %3585 = vmatpush1.bf16.msra.mxu0 %v3497
    %3586 = vmatprep.subr.bf16.mxu0 %v3502
    %3587 = vmatpush1.bf16.msra.mxu0 %v3501
    %3588 = vmatprep.subr.bf16.mxu0 %v3506
    %3589 = vmatpush1.bf16.msra.mxu0 %v3505
    %3590 = vmatprep.subr.bf16.mxu0 %v3510
    %3591 = vmatpush1.bf16.msra.mxu0 %v3509
    %3592 = vmatprep.subr.bf16.mxu0 %v3514
    %3593 = vmatpush1.bf16.msra.mxu0 %v3513
    %3594 = vmatprep.subr.bf16.mxu0 %v3518
    %3595 = vmatpush1.bf16.msra.mxu0 %v3517
    %3596 = vmatprep.subr.bf16.mxu0 %v3522
    %3597 = vmatpush1.bf16.msra.mxu0 %v3521
    %3598 = vmatprep.mubr.bf16.mxu0 %v3458
    %3599 = vmatmul.mubr.bf16.gmra.mrb[0].mxu0 %v3457
    %v3600 = vpop.f32.mrb[0].mxu0
    %v3601 = vadd.f32 0.0, %v3600
    %v3602 = vpop.f32.mrb[0].mxu0
    %v3603 = vadd.f32 0.0, %v3602
    %v3604 = vpop.f32.mrb[0].mxu0
    %v3605 = vadd.f32 0.0, %v3604
    %v3606 = vpop.f32.mrb[0].mxu0
    %v3607 = vadd.f32 0.0, %v3606
    %3608 = vdwg.mxu0
    %s3609 = smul.u32 4, 16
    %s3610 = smul.u32 %s3609, 4
    %s3611 = sshll.u32 %s3610, 4
    %3612 = dma.done %s1215, %s3611
    %v3613 = vpack.c.bf16 %v2634, %v2629
    %v3614 = vld [vmem:[#allocation5] sm:$0xff]
    %v3615 = vld [vmem:[#allocation5 + $0x8] sm:$0xff]
    %v3616 = vld [vmem:[#allocation5 + $0x10] sm:$0xff]
    %v3617 = vld [vmem:[#allocation5 + $0x18] sm:$0xff]
    %v3618 = vld [vmem:[#allocation5 + $0x20] sm:$0xff]
    %v3619 = vld [vmem:[#allocation5 + $0x28] sm:$0xff]
    %v3620 = vld [vmem:[#allocation5 + $0x30] sm:$0xff]
    %v3621 = vld [vmem:[#allocation5 + $0x38] sm:$0xff]
    %v3622 = vld [vmem:[#allocation5 + $0x40] sm:$0xff]
    %v3623 = vld [vmem:[#allocation5 + $0x48] sm:$0xff]
    %v3624 = vld [vmem:[#allocation5 + $0x50] sm:$0xff]
    %v3625 = vld [vmem:[#allocation5 + $0x58] sm:$0xff]
    %v3626 = vld [vmem:[#allocation5 + $0x60] sm:$0xff]
    %v3627 = vld [vmem:[#allocation5 + $0x68] sm:$0xff]
    %v3628 = vld [vmem:[#allocation5 + $0x70] sm:$0xff]
    %v3629 = vld [vmem:[#allocation5 + $0x78] sm:$0xff]
    %v3630 = vld [vmem:[#allocation5 + $0x80] sm:$0xff]
    %v3631 = vld [vmem:[#allocation5 + $0x88] sm:$0xff]
    %v3632 = vld [vmem:[#allocation5 + $0x90] sm:$0xff]
    %v3633 = vld [vmem:[#allocation5 + $0x98] sm:$0xff]
    %v3634 = vld [vmem:[#allocation5 + $0xa0] sm:$0xff]
    %v3635 = vld [vmem:[#allocation5 + $0xa8] sm:$0xff]
    %v3636 = vld [vmem:[#allocation5 + $0xb0] sm:$0xff]
    %v3637 = vld [vmem:[#allocation5 + $0xb8] sm:$0xff]
    %v3638 = vld [vmem:[#allocation5 + $0xc0] sm:$0xff]
    %v3639 = vld [vmem:[#allocation5 + $0xc8] sm:$0xff]
    %v3640 = vld [vmem:[#allocation5 + $0xd0] sm:$0xff]
    %v3641 = vld [vmem:[#allocation5 + $0xd8] sm:$0xff]
    %v3642 = vld [vmem:[#allocation5 + $0xe0] sm:$0xff]
    %v3643 = vld [vmem:[#allocation5 + $0xe8] sm:$0xff]
    %v3644 = vld [vmem:[#allocation5 + $0xf0] sm:$0xff]
    %v3645 = vld [vmem:[#allocation5 + $0xf8] sm:$0xff]
    %3646 = vmatprep.subr.bf16.mxu0 %v3615
    %3647 = vmatpush1.bf16.msra.mxu0 %v3614
    %3648 = vmatprep.subr.bf16.mxu0 %v3619
    %3649 = vmatpush1.bf16.msra.mxu0 %v3618
    %3650 = vmatprep.subr.bf16.mxu0 %v3623
    %3651 = vmatpush1.bf16.msra.mxu0 %v3622
    %3652 = vmatprep.subr.bf16.mxu0 %v3627
    %3653 = vmatpush1.bf16.msra.mxu0 %v3626
    %3654 = vmatprep.subr.bf16.mxu0 %v3631
    %3655 = vmatpush1.bf16.msra.mxu0 %v3630
    %3656 = vmatprep.subr.bf16.mxu0 %v3635
    %3657 = vmatpush1.bf16.msra.mxu0 %v3634
    %3658 = vmatprep.subr.bf16.mxu0 %v3639
    %3659 = vmatpush1.bf16.msra.mxu0 %v3638
    %3660 = vmatprep.subr.bf16.mxu0 %v3643
    %3661 = vmatpush1.bf16.msra.mxu0 %v3642
    %3662 = vmatprep.subr.bf16.mxu0 0
    %3663 = vmatpush1.bf16.msra.mxu0 0
    %3664 = vmatprep.subr.bf16.mxu0 0
    %3665 = vmatpush1.bf16.msra.mxu0 0
    %3666 = vmatprep.subr.bf16.mxu0 0
    %3667 = vmatpush1.bf16.msra.mxu0 0
    %3668 = vmatprep.subr.bf16.mxu0 0
    %3669 = vmatpush1.bf16.msra.mxu0 0
    %3670 = vmatprep.subr.bf16.mxu0 0
    %3671 = vmatpush1.bf16.msra.mxu0 0
    %3672 = vmatprep.subr.bf16.mxu0 0
    %3673 = vmatpush1.bf16.msra.mxu0 0
    %3674 = vmatprep.subr.bf16.mxu0 0
    %3675 = vmatpush1.bf16.msra.mxu0 0
    %3676 = vmatprep.subr.bf16.mxu0 0
    %3677 = vmatpush1.bf16.msra.mxu0 0
    %3678 = vmatprep.mubr.bf16.mxu0 0
    %3679 = vmatmul.mubr.bf16.gmra.mrb[0].mxu0 %v3613
    %v3680 = vpop.f32.mrb[0].mxu0
    %v3681 = vadd.f32 0.0, %v3680
    %v3682 = vpop.f32.mrb[0].mxu0
    %v3683 = vadd.f32 0.0, %v3682
    %v3684 = vpop.f32.mrb[0].mxu0
    %v3685 = vadd.f32 0.0, %v3684
    %v3686 = vpop.f32.mrb[0].mxu0
    %v3687 = vadd.f32 0.0, %v3686
    %3688 = vdwg.mxu0
    %3689 = vmatprep.subr.bf16.mxu0 %v3617
    %3690 = vmatpush1.bf16.msra.mxu0 %v3616
    %3691 = vmatprep.subr.bf16.mxu0 %v3621
    %3692 = vmatpush1.bf16.msra.mxu0 %v3620
    %3693 = vmatprep.subr.bf16.mxu0 %v3625
    %3694 = vmatpush1.bf16.msra.mxu0 %v3624
    %3695 = vmatprep.subr.bf16.mxu0 %v3629
    %3696 = vmatpush1.bf16.msra.mxu0 %v3628
    %3697 = vmatprep.subr.bf16.mxu0 %v3633
    %3698 = vmatpush1.bf16.msra.mxu0 %v3632
    %3699 = vmatprep.subr.bf16.mxu0 %v3637
    %3700 = vmatpush1.bf16.msra.mxu0 %v3636
    %3701 = vmatprep.subr.bf16.mxu0 %v3641
    %3702 = vmatpush1.bf16.msra.mxu0 %v3640
    %3703 = vmatprep.subr.bf16.mxu0 %v3645
    %3704 = vmatpush1.bf16.msra.mxu0 %v3644
    %3705 = vmatprep.subr.bf16.mxu0 0
    %3706 = vmatpush1.bf16.msra.mxu0 0
    %3707 = vmatprep.subr.bf16.mxu0 0
    %3708 = vmatpush1.bf16.msra.mxu0 0
    %3709 = vmatprep.subr.bf16.mxu0 0
    %3710 = vmatpush1.bf16.msra.mxu0 0
    %3711 = vmatprep.subr.bf16.mxu0 0
    %3712 = vmatpush1.bf16.msra.mxu0 0
    %3713 = vmatprep.subr.bf16.mxu0 0
    %3714 = vmatpush1.bf16.msra.mxu0 0
    %3715 = vmatprep.subr.bf16.mxu0 0
    %3716 = vmatpush1.bf16.msra.mxu0 0
    %3717 = vmatprep.subr.bf16.mxu0 0
    %3718 = vmatpush1.bf16.msra.mxu0 0
    %3719 = vmatprep.subr.bf16.mxu0 0
    %3720 = vmatpush1.bf16.msra.mxu0 0
    %3721 = vmatprep.mubr.bf16.mxu0 0
    %3722 = vmatmul.mubr.bf16.gmra.mrb[0].mxu0 %v3613
    %v3723 = vpop.f32.mrb[0].mxu0
    %v3724 = vadd.f32 0.0, %v3723
    %v3725 = vpop.f32.mrb[0].mxu0
    %v3726 = vadd.f32 0.0, %v3725
    %v3727 = vpop.f32.mrb[0].mxu0
    %v3728 = vadd.f32 0.0, %v3727
    %v3729 = vpop.f32.mrb[0].mxu0
    %v3730 = vadd.f32 0.0, %v3729
    %3731 = vdwg.mxu0
    %v3732 = vld [vmem:[%s1] sm:$0xff]
    %v3733 = vld [vmem:[%s1 + $0x8] sm:$0xff]
    %v3734 = vld [vmem:[%s2 + $0x16] sm:$0xf]
    %v3735 = vadd.f32 %v3558, %v3681
    %v3736 = vadd.f32 %v3560, %v3683
    %v3737 = vadd.f32 %v3601, %v3724
    %v3738 = vadd.f32 %v3603, %v3726
    %v3739 = vadd.f32 %v3562, %v3685
    %v3740 = vadd.f32 %v3564, %v3687
    %v3741 = vadd.f32 %v3605, %v3728
    %v3742 = vadd.f32 %v3607, %v3730
    %v3744 = vlaneseq
    %v3745 = vshrl.u32 %v3744, 7
    %v3746 = vsub.s32 0, %v3745
    %v3747 = vrot.slane %v3734, %v3746
    %v3748 = vlaneseq
    %v3749 = vshrl.u32 %v3748, 7
    %v3750 = vsub.s32 1, %v3749
    %v3751 = vrot.slane %v3734, %v3750
    %v3752 = vlaneseq
    %v3753 = vshrl.u32 %v3752, 7
    %v3754 = vsub.s32 2, %v3753
    %v3755 = vrot.slane %v3734, %v3754
    %v3756 = vlaneseq
    %v3757 = vshrl.u32 %v3756, 7
    %v3758 = vsub.s32 3, %v3757
    %v3759 = vrot.slane %v3734, %v3758
    %v3764 = vadd.f32 %v3735, %v3747
    %v3765 = vadd.f32 %v3736, %v3751
    %v3766 = vadd.f32 %v3737, %v3755
    %v3767 = vadd.f32 %v3738, %v3759
    %v3768 = vadd.f32 %v3739, %v3747
    %v3769 = vadd.f32 %v3740, %v3751
    %v3770 = vadd.f32 %v3741, %v3755
    %v3771 = vadd.f32 %v3742, %v3759
    %v3772 = vmax.f32 %v3764, 0.0
    %v3773 = vmax.f32 %v3765, 0.0
    %v3774 = vmax.f32 %v3766, 0.0
    %v3775 = vmax.f32 %v3767, 0.0
    %v3776 = vmax.f32 %v3768, 0.0
    %v3777 = vmax.f32 %v3769, 0.0
    %v3778 = vmax.f32 %v3770, 0.0
    %v3779 = vmax.f32 %v3771, 0.0
    %v3781 = vsel %vm1907, %v3732, 0
    %v3784 = vsel %vm1907, %v3733, 0
    %3786 = vmatprep.subr.mxu0 %v3560
    %3787 = vmatpush1.msra.mxu0 %v3558
    %3788 = vmatprep.subr.mxu0 %v3564
    %3789 = vmatpush1.msra.mxu0 %v3562
    %3790 = vmatprep.subr.mxu0 0.0
    %3791 = vmatpush1.msra.mxu0 0.0
    %3792 = vmatprep.subr.mxu0 0.0
    %3793 = vmatpush1.msra.mxu0 0.0
    %3794 = vmatprep.subr.mxu0 0.0
    %3795 = vmatpush1.msra.mxu0 0.0
    %3796 = vmatprep.subr.mxu0 0.0
    %3797 = vmatpush1.msra.mxu0 0.0
    %3798 = vmatprep.subr.mxu0 0.0
    %3799 = vmatpush1.msra.mxu0 0.0
    %3800 = vmatprep.subr.mxu0 0.0
    %3801 = vmatpush1.msra.mxu0 0.0
    %3802 = vmatprep.subr.mxu0 0.0
    %3803 = vmatpush1.msra.mxu0 0.0
    %3804 = vmatprep.subr.mxu0 0.0
    %3805 = vmatpush1.msra.mxu0 0.0
    %3806 = vmatprep.subr.mxu0 0.0
    %3807 = vmatpush1.msra.mxu0 0.0
    %3808 = vmatprep.subr.mxu0 0.0
    %3809 = vmatpush1.msra.mxu0 0.0
    %3810 = vmatprep.subr.mxu0 0.0
    %3811 = vmatpush1.msra.mxu0 0.0
    %3812 = vmatprep.subr.mxu0 0.0
    %3813 = vmatpush1.msra.mxu0 0.0
    %3814 = vmatprep.subr.mxu0 0.0
    %3815 = vmatpush1.msra.mxu0 0.0
    %3816 = vmatprep.subr.mxu0 0.0
    %3817 = vmatpush1.msra.mxu0 0.0
    %3818 = vmatprep.subr.mxu0 0.0
    %3819 = vmatpush1.msra.mxu0 0.0
    %3820 = vmatprep.subr.mxu0 0.0
    %3821 = vmatpush1.msra.mxu0 0.0
    %3822 = vmatprep.subr.mxu0 0.0
    %3823 = vmatpush1.msra.mxu0 0.0
    %3824 = vmatprep.subr.mxu0 0.0
    %3825 = vmatpush1.msra.mxu0 0.0
    %3826 = vmatprep.subr.mxu0 0.0
    %3827 = vmatpush1.msra.mxu0 0.0
    %3828 = vmatprep.subr.mxu0 0.0
    %3829 = vmatpush1.msra.mxu0 0.0
    %3830 = vmatprep.subr.mxu0 0.0
    %3831 = vmatpush1.msra.mxu0 0.0
    %3832 = vmatprep.subr.mxu0 0.0
    %3833 = vmatpush1.msra.mxu0 0.0
    %3834 = vmatprep.subr.mxu0 0.0
    %3835 = vmatpush1.msra.mxu0 0.0
    %3836 = vmatprep.subr.mxu0 0.0
    %3837 = vmatpush1.msra.mxu0 0.0
    %3838 = vmatprep.subr.mxu0 0.0
    %3839 = vmatpush1.msra.mxu0 0.0
    %3840 = vmatprep.subr.mxu0 0.0
    %3841 = vmatpush1.msra.mxu0 0.0
    %3842 = vmatprep.subr.mxu0 0.0
    %3843 = vmatpush1.msra.mxu0 0.0
    %3844 = vmatprep.subr.mxu0 0.0
    %3845 = vmatpush1.msra.mxu0 0.0
    %3846 = vmatprep.subr.mxu0 0.0
    %3847 = vmatpush1.msra.mxu0 0.0
    %3848 = vmatprep.subr.mxu0 0.0
    %3849 = vmatpush1.msra.mxu0 0.0
    %3850 = vmatprep.mubr.f32.mxu0 0.0
    %3851 = vmatmul.mubr.f32.gmra.mrb[0].mxu0 %v3781
    %v3852 = vpop.f32.mrb[0].mxu0
    %v3853 = vadd.f32 %v3681, %v3852
    %v3854 = vpop.f32.mrb[0].mxu0
    %v3855 = vadd.f32 %v3683, %v3854
    %3856 = vmatprep.mubr.f32.mxu0 0.0
    %3857 = vmatmul.mubr.f32.gmra.mrb[0].mxu0 %v3784
    %v3858 = vpop.f32.mrb[0].mxu0
    %v3859 = vadd.f32 %v3685, %v3858
    %v3860 = vpop.f32.mrb[0].mxu0
    %v3861 = vadd.f32 %v3687, %v3860
    %3862 = vdwg.mxu0
    %3863 = vmatprep.subr.mxu0 %v3603
    %3864 = vmatpush1.msra.mxu0 %v3601
    %3865 = vmatprep.subr.mxu0 %v3607
    %3866 = vmatpush1.msra.mxu0 %v3605
    %3867 = vmatprep.subr.mxu0 0.0
    %3868 = vmatpush1.msra.mxu0 0.0
    %3869 = vmatprep.subr.mxu0 0.0
    %3870 = vmatpush1.msra.mxu0 0.0
    %3871 = vmatprep.subr.mxu0 0.0
    %3872 = vmatpush1.msra.mxu0 0.0
    %3873 = vmatprep.subr.mxu0 0.0
    %3874 = vmatpush1.msra.mxu0 0.0
    %3875 = vmatprep.subr.mxu0 0.0
    %3876 = vmatpush1.msra.mxu0 0.0
    %3877 = vmatprep.subr.mxu0 0.0
    %3878 = vmatpush1.msra.mxu0 0.0
    %3879 = vmatprep.subr.mxu0 0.0
    %3880 = vmatpush1.msra.mxu0 0.0
    %3881 = vmatprep.subr.mxu0 0.0
    %3882 = vmatpush1.msra.mxu0 0.0
    %3883 = vmatprep.subr.mxu0 0.0
    %3884 = vmatpush1.msra.mxu0 0.0
    %3885 = vmatprep.subr.mxu0 0.0
    %3886 = vmatpush1.msra.mxu0 0.0
    %3887 = vmatprep.subr.mxu0 0.0
    %3888 = vmatpush1.msra.mxu0 0.0
    %3889 = vmatprep.subr.mxu0 0.0
    %3890 = vmatpush1.msra.mxu0 0.0
    %3891 = vmatprep.subr.mxu0 0.0
    %3892 = vmatpush1.msra.mxu0 0.0
    %3893 = vmatprep.subr.mxu0 0.0
    %3894 = vmatpush1.msra.mxu0 0.0
    %3895 = vmatprep.subr.mxu0 0.0
    %3896 = vmatpush1.msra.mxu0 0.0
    %3897 = vmatprep.subr.mxu0 0.0
    %3898 = vmatpush1.msra.mxu0 0.0
    %3899 = vmatprep.subr.mxu0 0.0
    %3900 = vmatpush1.msra.mxu0 0.0
    %3901 = vmatprep.subr.mxu0 0.0
    %3902 = vmatpush1.msra.mxu0 0.0
    %3903 = vmatprep.subr.mxu0 0.0
    %3904 = vmatpush1.msra.mxu0 0.0
    %3905 = vmatprep.subr.mxu0 0.0
    %3906 = vmatpush1.msra.mxu0 0.0
    %3907 = vmatprep.subr.mxu0 0.0
    %3908 = vmatpush1.msra.mxu0 0.0
    %3909 = vmatprep.subr.mxu0 0.0
    %3910 = vmatpush1.msra.mxu0 0.0
    %3911 = vmatprep.subr.mxu0 0.0
    %3912 = vmatpush1.msra.mxu0 0.0
    %3913 = vmatprep.subr.mxu0 0.0
    %3914 = vmatpush1.msra.mxu0 0.0
    %3915 = vmatprep.subr.mxu0 0.0
    %3916 = vmatpush1.msra.mxu0 0.0
    %3917 = vmatprep.subr.mxu0 0.0
    %3918 = vmatpush1.msra.mxu0 0.0
    %3919 = vmatprep.subr.mxu0 0.0
    %3920 = vmatpush1.msra.mxu0 0.0
    %3921 = vmatprep.subr.mxu0 0.0
    %3922 = vmatpush1.msra.mxu0 0.0
    %3923 = vmatprep.subr.mxu0 0.0
    %3924 = vmatpush1.msra.mxu0 0.0
    %3925 = vmatprep.subr.mxu0 0.0
    %3926 = vmatpush1.msra.mxu0 0.0
    %3927 = vmatprep.mubr.f32.mxu0 0.0
    %3928 = vmatmul.mubr.f32.gmra.mrb[0].mxu0 %v3781
    %v3929 = vpop.f32.mrb[0].mxu0
    %v3930 = vadd.f32 %v3724, %v3929
    %v3931 = vpop.f32.mrb[0].mxu0
    %v3932 = vadd.f32 %v3726, %v3931
    %3933 = vmatprep.mubr.f32.mxu0 0.0
    %3934 = vmatmul.mubr.f32.gmra.mrb[0].mxu0 %v3784
    %v3935 = vpop.f32.mrb[0].mxu0
    %v3936 = vadd.f32 %v3728, %v3935
    %v3937 = vpop.f32.mrb[0].mxu0
    %v3938 = vadd.f32 %v3730, %v3937
    %3939 = vdwg.mxu0
    %v3940 = vadd.f32 %v3853, %v3747
    %v3941 = vadd.f32 %v3855, %v3751
    %v3942 = vadd.f32 %v3930, %v3755
    %v3943 = vadd.f32 %v3932, %v3759
    %v3944 = vadd.f32 %v3859, %v3747
    %v3945 = vadd.f32 %v3861, %v3751
    %v3946 = vadd.f32 %v3936, %v3755
    %v3947 = vadd.f32 %v3938, %v3759
    %v3948 = vmax.f32 %v3940, 0.0
    %v3949 = vmax.f32 %v3941, 0.0
    %v3950 = vmax.f32 %v3942, 0.0
    %v3951 = vmax.f32 %v3943, 0.0
    %v3952 = vmax.f32 %v3944, 0.0
    %v3953 = vmax.f32 %v3945, 0.0
    %v3954 = vmax.f32 %v3946, 0.0
    %v3955 = vmax.f32 %v3947, 0.0
    %s3956 = sshll.u32 %s2638, 4
    %3957 = dma.done %s1520, %s3956
    %v3958 = vpack.c.bf16 %v3776, %v3772
    %v3959 = vpack.c.bf16 %v3777, %v3773
    %v3960 = vpack.c.bf16 %v3778, %v3774
    %v3961 = vpack.c.bf16 %v3779, %v3775
    %v3962 = vpack.c.bf16 %v3952, %v3948
    %v3963 = vpack.c.bf16 %v3953, %v3949
    %v3964 = vpack.c.bf16 %v3954, %v3950
    %v3965 = vpack.c.bf16 %v3955, %v3951
    %v3966 = vld [vmem:[#allocation6] sm:$0xff]
    %v3967 = vld [vmem:[#allocation6 + $0x8] sm:$0xff]
    %v3968 = vld [vmem:[#allocation6 + $0x10] sm:$0xff]
    %v3969 = vld [vmem:[#allocation6 + $0x18] sm:$0xff]
    %v3970 = vld [vmem:[#allocation6 + $0x20] sm:$0xff]
    %v3971 = vld [vmem:[#allocation6 + $0x28] sm:$0xff]
    %v3972 = vld [vmem:[#allocation6 + $0x30] sm:$0xff]
    %v3973 = vld [vmem:[#allocation6 + $0x38] sm:$0xff]
    %v3974 = vld [vmem:[#allocation6 + $0x40] sm:$0xff]
    %v3975 = vld [vmem:[#allocation6 + $0x48] sm:$0xff]
    %v3976 = vld [vmem:[#allocation6 + $0x50] sm:$0xff]
    %v3977 = vld [vmem:[#allocation6 + $0x58] sm:$0xff]
    %v3978 = vld [vmem:[#allocation6 + $0x60] sm:$0xff]
    %v3979 = vld [vmem:[#allocation6 + $0x68] sm:$0xff]
    %v3980 = vld [vmem:[#allocation6 + $0x70] sm:$0xff]
    %v3981 = vld [vmem:[#allocation6 + $0x78] sm:$0xff]
    %v3982 = vld [vmem:[#allocation6 + $0x80] sm:$0xff]
    %v3983 = vld [vmem:[#allocation6 + $0x88] sm:$0xff]
    %v3984 = vld [vmem:[#allocation6 + $0x90] sm:$0xff]
    %v3985 = vld [vmem:[#allocation6 + $0x98] sm:$0xff]
    %v3986 = vld [vmem:[#allocation6 + $0xa0] sm:$0xff]
    %v3987 = vld [vmem:[#allocation6 + $0xa8] sm:$0xff]
    %v3988 = vld [vmem:[#allocation6 + $0xb0] sm:$0xff]
    %v3989 = vld [vmem:[#allocation6 + $0xb8] sm:$0xff]
    %v3990 = vld [vmem:[#allocation6 + $0xc0] sm:$0xff]
    %v3991 = vld [vmem:[#allocation6 + $0xc8] sm:$0xff]
    %v3992 = vld [vmem:[#allocation6 + $0xd0] sm:$0xff]
    %v3993 = vld [vmem:[#allocation6 + $0xd8] sm:$0xff]
    %v3994 = vld [vmem:[#allocation6 + $0xe0] sm:$0xff]
    %v3995 = vld [vmem:[#allocation6 + $0xe8] sm:$0xff]
    %v3996 = vld [vmem:[#allocation6 + $0xf0] sm:$0xff]
    %v3997 = vld [vmem:[#allocation6 + $0xf8] sm:$0xff]
    %v3998 = vld [vmem:[#allocation6 + $0x100] sm:$0xff]
    %v3999 = vld [vmem:[#allocation6 + $0x108] sm:$0xff]
    %v4000 = vld [vmem:[#allocation6 + $0x110] sm:$0xff]
    %v4001 = vld [vmem:[#allocation6 + $0x118] sm:$0xff]
    %v4002 = vld [vmem:[#allocation6 + $0x120] sm:$0xff]
    %v4003 = vld [vmem:[#allocation6 + $0x128] sm:$0xff]
    %v4004 = vld [vmem:[#allocation6 + $0x130] sm:$0xff]
    %v4005 = vld [vmem:[#allocation6 + $0x138] sm:$0xff]
    %v4006 = vld [vmem:[#allocation6 + $0x140] sm:$0xff]
    %v4007 = vld [vmem:[#allocation6 + $0x148] sm:$0xff]
    %v4008 = vld [vmem:[#allocation6 + $0x150] sm:$0xff]
    %v4009 = vld [vmem:[#allocation6 + $0x158] sm:$0xff]
    %v4010 = vld [vmem:[#allocation6 + $0x160] sm:$0xff]
    %v4011 = vld [vmem:[#allocation6 + $0x168] sm:$0xff]
    %v4012 = vld [vmem:[#allocation6 + $0x170] sm:$0xff]
    %v4013 = vld [vmem:[#allocation6 + $0x178] sm:$0xff]
    %v4014 = vld [vmem:[#allocation6 + $0x180] sm:$0xff]
    %v4015 = vld [vmem:[#allocation6 + $0x188] sm:$0xff]
    %v4016 = vld [vmem:[#allocation6 + $0x190] sm:$0xff]
    %v4017 = vld [vmem:[#allocation6 + $0x198] sm:$0xff]
    %v4018 = vld [vmem:[#allocation6 + $0x1a0] sm:$0xff]
    %v4019 = vld [vmem:[#allocation6 + $0x1a8] sm:$0xff]
    %v4020 = vld [vmem:[#allocation6 + $0x1b0] sm:$0xff]
    %v4021 = vld [vmem:[#allocation6 + $0x1b8] sm:$0xff]
    %v4022 = vld [vmem:[#allocation6 + $0x1c0] sm:$0xff]
    %v4023 = vld [vmem:[#allocation6 + $0x1c8] sm:$0xff]
    %v4024 = vld [vmem:[#allocation6 + $0x1d0] sm:$0xff]
    %v4025 = vld [vmem:[#allocation6 + $0x1d8] sm:$0xff]
    %v4026 = vld [vmem:[#allocation6 + $0x1e0] sm:$0xff]
    %v4027 = vld [vmem:[#allocation6 + $0x1e8] sm:$0xff]
    %v4028 = vld [vmem:[#allocation6 + $0x1f0] sm:$0xff]
    %v4029 = vld [vmem:[#allocation6 + $0x1f8] sm:$0xff]
    %v4030 = vld [vmem:[#allocation6 + $0x200] sm:$0xff]
    %v4031 = vld [vmem:[#allocation6 + $0x208] sm:$0xff]
    %v4032 = vld [vmem:[#allocation6 + $0x210] sm:$0xff]
    %v4033 = vld [vmem:[#allocation6 + $0x218] sm:$0xff]
    %v4034 = vld [vmem:[#allocation6 + $0x220] sm:$0xff]
    %v4035 = vld [vmem:[#allocation6 + $0x228] sm:$0xff]
    %v4036 = vld [vmem:[#allocation6 + $0x230] sm:$0xff]
    %v4037 = vld [vmem:[#allocation6 + $0x238] sm:$0xff]
    %v4038 = vld [vmem:[#allocation6 + $0x240] sm:$0xff]
    %v4039 = vld [vmem:[#allocation6 + $0x248] sm:$0xff]
    %v4040 = vld [vmem:[#allocation6 + $0x250] sm:$0xff]
    %v4041 = vld [vmem:[#allocation6 + $0x258] sm:$0xff]
    %v4042 = vld [vmem:[#allocation6 + $0x260] sm:$0xff]
    %v4043 = vld [vmem:[#allocation6 + $0x268] sm:$0xff]
    %v4044 = vld [vmem:[#allocation6 + $0x270] sm:$0xff]
    %v4045 = vld [vmem:[#allocation6 + $0x278] sm:$0xff]
    %v4046 = vld [vmem:[#allocation6 + $0x280] sm:$0xff]
    %v4047 = vld [vmem:[#allocation6 + $0x288] sm:$0xff]
    %v4048 = vld [vmem:[#allocation6 + $0x290] sm:$0xff]
    %v4049 = vld [vmem:[#allocation6 + $0x298] sm:$0xff]
    %v4050 = vld [vmem:[#allocation6 + $0x2a0] sm:$0xff]
    %v4051 = vld [vmem:[#allocation6 + $0x2a8] sm:$0xff]
    %v4052 = vld [vmem:[#allocation6 + $0x2b0] sm:$0xff]
    %v4053 = vld [vmem:[#allocation6 + $0x2b8] sm:$0xff]
    %v4054 = vld [vmem:[#allocation6 + $0x2c0] sm:$0xff]
    %v4055 = vld [vmem:[#allocation6 + $0x2c8] sm:$0xff]
    %v4056 = vld [vmem:[#allocation6 + $0x2d0] sm:$0xff]
    %v4057 = vld [vmem:[#allocation6 + $0x2d8] sm:$0xff]
    %v4058 = vld [vmem:[#allocation6 + $0x2e0] sm:$0xff]
    %v4059 = vld [vmem:[#allocation6 + $0x2e8] sm:$0xff]
    %v4060 = vld [vmem:[#allocation6 + $0x2f0] sm:$0xff]
    %v4061 = vld [vmem:[#allocation6 + $0x2f8] sm:$0xff]
    %v4062 = vld [vmem:[#allocation6 + $0x300] sm:$0xff]
    %v4063 = vld [vmem:[#allocation6 + $0x308] sm:$0xff]
    %v4064 = vld [vmem:[#allocation6 + $0x310] sm:$0xff]
    %v4065 = vld [vmem:[#allocation6 + $0x318] sm:$0xff]
    %v4066 = vld [vmem:[#allocation6 + $0x320] sm:$0xff]
    %v4067 = vld [vmem:[#allocation6 + $0x328] sm:$0xff]
    %v4068 = vld [vmem:[#allocation6 + $0x330] sm:$0xff]
    %v4069 = vld [vmem:[#allocation6 + $0x338] sm:$0xff]
    %v4070 = vld [vmem:[#allocation6 + $0x340] sm:$0xff]
    %v4071 = vld [vmem:[#allocation6 + $0x348] sm:$0xff]
    %v4072 = vld [vmem:[#allocation6 + $0x350] sm:$0xff]
    %v4073 = vld [vmem:[#allocation6 + $0x358] sm:$0xff]
    %v4074 = vld [vmem:[#allocation6 + $0x360] sm:$0xff]
    %v4075 = vld [vmem:[#allocation6 + $0x368] sm:$0xff]
    %v4076 = vld [vmem:[#allocation6 + $0x370] sm:$0xff]
    %v4077 = vld [vmem:[#allocation6 + $0x378] sm:$0xff]
    %v4078 = vld [vmem:[#allocation6 + $0x380] sm:$0xff]
    %v4079 = vld [vmem:[#allocation6 + $0x388] sm:$0xff]
    %v4080 = vld [vmem:[#allocation6 + $0x390] sm:$0xff]
    %v4081 = vld [vmem:[#allocation6 + $0x398] sm:$0xff]
    %v4082 = vld [vmem:[#allocation6 + $0x3a0] sm:$0xff]
    %v4083 = vld [vmem:[#allocation6 + $0x3a8] sm:$0xff]
    %v4084 = vld [vmem:[#allocation6 + $0x3b0] sm:$0xff]
    %v4085 = vld [vmem:[#allocation6 + $0x3b8] sm:$0xff]
    %v4086 = vld [vmem:[#allocation6 + $0x3c0] sm:$0xff]
    %v4087 = vld [vmem:[#allocation6 + $0x3c8] sm:$0xff]
    %v4088 = vld [vmem:[#allocation6 + $0x3d0] sm:$0xff]
    %v4089 = vld [vmem:[#allocation6 + $0x3d8] sm:$0xff]
    %v4090 = vld [vmem:[#allocation6 + $0x3e0] sm:$0xff]
    %v4091 = vld [vmem:[#allocation6 + $0x3e8] sm:$0xff]
    %v4092 = vld [vmem:[#allocation6 + $0x3f0] sm:$0xff]
    %v4093 = vld [vmem:[#allocation6 + $0x3f8] sm:$0xff]
    %v4094 = vld [vmem:[%s2 + $0x1a] sm:$0xf]
    %v4096 = vlaneseq
    %v4097 = vshrl.u32 %v4096, 7
    %v4098 = vsub.s32 0, %v4097
    %v4099 = vrot.slane %v4094, %v4098
    %v4100 = vlaneseq
    %v4101 = vshrl.u32 %v4100, 7
    %v4102 = vsub.s32 1, %v4101
    %v4103 = vrot.slane %v4094, %v4102
    %v4104 = vlaneseq
    %v4105 = vshrl.u32 %v4104, 7
    %v4106 = vsub.s32 2, %v4105
    %v4107 = vrot.slane %v4094, %v4106
    %v4108 = vlaneseq
    %v4109 = vshrl.u32 %v4108, 7
    %v4110 = vsub.s32 3, %v4109
    %v4111 = vrot.slane %v4094, %v4110
    %4116 = vmatprep.subr.bf16.mxu0 %v3967
    %4117 = vmatpush1.bf16.msra.mxu0 %v3966
    %4118 = vmatprep.subr.bf16.mxu0 %v3971
    %4119 = vmatpush1.bf16.msra.mxu0 %v3970
    %4120 = vmatprep.subr.bf16.mxu0 %v3975
    %4121 = vmatpush1.bf16.msra.mxu0 %v3974
    %4122 = vmatprep.subr.bf16.mxu0 %v3979
    %4123 = vmatpush1.bf16.msra.mxu0 %v3978
    %4124 = vmatprep.subr.bf16.mxu0 %v3983
    %4125 = vmatpush1.bf16.msra.mxu0 %v3982
    %4126 = vmatprep.subr.bf16.mxu0 %v3987
    %4127 = vmatpush1.bf16.msra.mxu0 %v3986
    %4128 = vmatprep.subr.bf16.mxu0 %v3991
    %4129 = vmatpush1.bf16.msra.mxu0 %v3990
    %4130 = vmatprep.subr.bf16.mxu0 %v3995
    %4131 = vmatpush1.bf16.msra.mxu0 %v3994
    %4132 = vmatprep.subr.bf16.mxu0 %v3999
    %4133 = vmatpush1.bf16.msra.mxu0 %v3998
    %4134 = vmatprep.subr.bf16.mxu0 %v4003
    %4135 = vmatpush1.bf16.msra.mxu0 %v4002
    %4136 = vmatprep.subr.bf16.mxu0 %v4007
    %4137 = vmatpush1.bf16.msra.mxu0 %v4006
    %4138 = vmatprep.subr.bf16.mxu0 %v4011
    %4139 = vmatpush1.bf16.msra.mxu0 %v4010
    %4140 = vmatprep.subr.bf16.mxu0 %v4015
    %4141 = vmatpush1.bf16.msra.mxu0 %v4014
    %4142 = vmatprep.subr.bf16.mxu0 %v4019
    %4143 = vmatpush1.bf16.msra.mxu0 %v4018
    %4144 = vmatprep.subr.bf16.mxu0 %v4023
    %4145 = vmatpush1.bf16.msra.mxu0 %v4022
    %4146 = vmatprep.subr.bf16.mxu0 %v4027
    %4147 = vmatpush1.bf16.msra.mxu0 %v4026
    %4148 = vmatprep.mubr.bf16.mxu0 %v3959
    %4149 = vmatmul.mubr.bf16.gmra.mrb[0].mxu0 %v3958
    %v4150 = vpop.f32.mrb[0].mxu0
    %v4151 = vadd.f32 %v4099, %v4150
    %v4152 = vpop.f32.mrb[0].mxu0
    %v4153 = vadd.f32 %v4103, %v4152
    %v4154 = vpop.f32.mrb[0].mxu0
    %v4155 = vadd.f32 %v4099, %v4154
    %v4156 = vpop.f32.mrb[0].mxu0
    %v4157 = vadd.f32 %v4103, %v4156
    %4158 = vmatprep.mubr.bf16.mxu0 %v3963
    %4159 = vmatmul.mubr.bf16.gmra.mrb[0].mxu0 %v3962
    %v4160 = vpop.f32.mrb[0].mxu0
    %v4161 = vadd.f32 %v4099, %v4160
    %v4162 = vpop.f32.mrb[0].mxu0
    %v4163 = vadd.f32 %v4103, %v4162
    %v4164 = vpop.f32.mrb[0].mxu0
    %v4165 = vadd.f32 %v4099, %v4164
    %v4166 = vpop.f32.mrb[0].mxu0
    %v4167 = vadd.f32 %v4103, %v4166
    %4168 = vdwg.mxu0
    %4169 = vmatprep.subr.bf16.mxu0 %v4031
    %4170 = vmatpush1.bf16.msra.mxu0 %v4030
    %4171 = vmatprep.subr.bf16.mxu0 %v4035
    %4172 = vmatpush1.bf16.msra.mxu0 %v4034
    %4173 = vmatprep.subr.bf16.mxu0 %v4039
    %4174 = vmatpush1.bf16.msra.mxu0 %v4038
    %4175 = vmatprep.subr.bf16.mxu0 %v4043
    %4176 = vmatpush1.bf16.msra.mxu0 %v4042
    %4177 = vmatprep.subr.bf16.mxu0 %v4047
    %4178 = vmatpush1.bf16.msra.mxu0 %v4046
    %4179 = vmatprep.subr.bf16.mxu0 %v4051
    %4180 = vmatpush1.bf16.msra.mxu0 %v4050
    %4181 = vmatprep.subr.bf16.mxu0 %v4055
    %4182 = vmatpush1.bf16.msra.mxu0 %v4054
    %4183 = vmatprep.subr.bf16.mxu0 %v4059
    %4184 = vmatpush1.bf16.msra.mxu0 %v4058
    %4185 = vmatprep.subr.bf16.mxu0 %v4063
    %4186 = vmatpush1.bf16.msra.mxu0 %v4062
    %4187 = vmatprep.subr.bf16.mxu0 %v4067
    %4188 = vmatpush1.bf16.msra.mxu0 %v4066
    %4189 = vmatprep.subr.bf16.mxu0 %v4071
    %4190 = vmatpush1.bf16.msra.mxu0 %v4070
    %4191 = vmatprep.subr.bf16.mxu0 %v4075
    %4192 = vmatpush1.bf16.msra.mxu0 %v4074
    %4193 = vmatprep.subr.bf16.mxu0 %v4079
    %4194 = vmatpush1.bf16.msra.mxu0 %v4078
    %4195 = vmatprep.subr.bf16.mxu0 %v4083
    %4196 = vmatpush1.bf16.msra.mxu0 %v4082
    %4197 = vmatprep.subr.bf16.mxu0 %v4087
    %4198 = vmatpush1.bf16.msra.mxu0 %v4086
    %4199 = vmatprep.subr.bf16.mxu0 %v4091
    %4200 = vmatpush1.bf16.msra.mxu0 %v4090
    %4201 = vmatprep.mubr.bf16.mxu0 %v3961
    %4202 = vmatmul.mubr.bf16.gmra.mrb[0].mxu0 %v3960
    %v4203 = vpop.f32.mrb[0].mxu0
    %v4204 = vadd.f32 %v4151, %v4203
    %v4205 = vpop.f32.mrb[0].mxu0
    %v4206 = vadd.f32 %v4153, %v4205
    %v4207 = vpop.f32.mrb[0].mxu0
    %v4208 = vadd.f32 %v4155, %v4207
    %v4209 = vpop.f32.mrb[0].mxu0
    %v4210 = vadd.f32 %v4157, %v4209
    %4211 = vmatprep.mubr.bf16.mxu0 %v3965
    %4212 = vmatmul.mubr.bf16.gmra.mrb[0].mxu0 %v3964
    %v4213 = vpop.f32.mrb[0].mxu0
    %v4214 = vadd.f32 %v4161, %v4213
    %v4215 = vpop.f32.mrb[0].mxu0
    %v4216 = vadd.f32 %v4163, %v4215
    %v4217 = vpop.f32.mrb[0].mxu0
    %v4218 = vadd.f32 %v4165, %v4217
    %v4219 = vpop.f32.mrb[0].mxu0
    %v4220 = vadd.f32 %v4167, %v4219
    %4221 = vdwg.mxu0
    %4222 = vmatprep.subr.bf16.mxu0 %v3969
    %4223 = vmatpush1.bf16.msra.mxu0 %v3968
    %4224 = vmatprep.subr.bf16.mxu0 %v3973
    %4225 = vmatpush1.bf16.msra.mxu0 %v3972
    %4226 = vmatprep.subr.bf16.mxu0 %v3977
    %4227 = vmatpush1.bf16.msra.mxu0 %v3976
    %4228 = vmatprep.subr.bf16.mxu0 %v3981
    %4229 = vmatpush1.bf16.msra.mxu0 %v3980
    %4230 = vmatprep.subr.bf16.mxu0 %v3985
    %4231 = vmatpush1.bf16.msra.mxu0 %v3984
    %4232 = vmatprep.subr.bf16.mxu0 %v3989
    %4233 = vmatpush1.bf16.msra.mxu0 %v3988
    %4234 = vmatprep.subr.bf16.mxu0 %v3993
    %4235 = vmatpush1.bf16.msra.mxu0 %v3992
    %4236 = vmatprep.subr.bf16.mxu0 %v3997
    %4237 = vmatpush1.bf16.msra.mxu0 %v3996
    %4238 = vmatprep.subr.bf16.mxu0 %v4001
    %4239 = vmatpush1.bf16.msra.mxu0 %v4000
    %4240 = vmatprep.subr.bf16.mxu0 %v4005
    %4241 = vmatpush1.bf16.msra.mxu0 %v4004
    %4242 = vmatprep.subr.bf16.mxu0 %v4009
    %4243 = vmatpush1.bf16.msra.mxu0 %v4008
    %4244 = vmatprep.subr.bf16.mxu0 %v4013
    %4245 = vmatpush1.bf16.msra.mxu0 %v4012
    %4246 = vmatprep.subr.bf16.mxu0 %v4017
    %4247 = vmatpush1.bf16.msra.mxu0 %v4016
    %4248 = vmatprep.subr.bf16.mxu0 %v4021
    %4249 = vmatpush1.bf16.msra.mxu0 %v4020
    %4250 = vmatprep.subr.bf16.mxu0 %v4025
    %4251 = vmatpush1.bf16.msra.mxu0 %v4024
    %4252 = vmatprep.subr.bf16.mxu0 %v4029
    %4253 = vmatpush1.bf16.msra.mxu0 %v4028
    %4254 = vmatprep.mubr.bf16.mxu0 %v3959
    %4255 = vmatmul.mubr.bf16.gmra.mrb[0].mxu0 %v3958
    %v4256 = vpop.f32.mrb[0].mxu0
    %v4257 = vadd.f32 %v4107, %v4256
    %v4258 = vpop.f32.mrb[0].mxu0
    %v4259 = vadd.f32 %v4111, %v4258
    %v4260 = vpop.f32.mrb[0].mxu0
    %v4261 = vadd.f32 %v4107, %v4260
    %v4262 = vpop.f32.mrb[0].mxu0
    %v4263 = vadd.f32 %v4111, %v4262
    %4264 = vmatprep.mubr.bf16.mxu0 %v3963
    %4265 = vmatmul.mubr.bf16.gmra.mrb[0].mxu0 %v3962
    %v4266 = vpop.f32.mrb[0].mxu0
    %v4267 = vadd.f32 %v4107, %v4266
    %v4268 = vpop.f32.mrb[0].mxu0
    %v4269 = vadd.f32 %v4111, %v4268
    %v4270 = vpop.f32.mrb[0].mxu0
    %v4271 = vadd.f32 %v4107, %v4270
    %v4272 = vpop.f32.mrb[0].mxu0
    %v4273 = vadd.f32 %v4111, %v4272
    %4274 = vdwg.mxu0
    %4275 = vmatprep.subr.bf16.mxu0 %v4033
    %4276 = vmatpush1.bf16.msra.mxu0 %v4032
    %4277 = vmatprep.subr.bf16.mxu0 %v4037
    %4278 = vmatpush1.bf16.msra.mxu0 %v4036
    %4279 = vmatprep.subr.bf16.mxu0 %v4041
    %4280 = vmatpush1.bf16.msra.mxu0 %v4040
    %4281 = vmatprep.subr.bf16.mxu0 %v4045
    %4282 = vmatpush1.bf16.msra.mxu0 %v4044
    %4283 = vmatprep.subr.bf16.mxu0 %v4049
    %4284 = vmatpush1.bf16.msra.mxu0 %v4048
    %4285 = vmatprep.subr.bf16.mxu0 %v4053
    %4286 = vmatpush1.bf16.msra.mxu0 %v4052
    %4287 = vmatprep.subr.bf16.mxu0 %v4057
    %4288 = vmatpush1.bf16.msra.mxu0 %v4056
    %4289 = vmatprep.subr.bf16.mxu0 %v4061
    %4290 = vmatpush1.bf16.msra.mxu0 %v4060
    %4291 = vmatprep.subr.bf16.mxu0 %v4065
    %4292 = vmatpush1.bf16.msra.mxu0 %v4064
    %4293 = vmatprep.subr.bf16.mxu0 %v4069
    %4294 = vmatpush1.bf16.msra.mxu0 %v4068
    %4295 = vmatprep.subr.bf16.mxu0 %v4073
    %4296 = vmatpush1.bf16.msra.mxu0 %v4072
    %4297 = vmatprep.subr.bf16.mxu0 %v4077
    %4298 = vmatpush1.bf16.msra.mxu0 %v4076
    %4299 = vmatprep.subr.bf16.mxu0 %v4081
    %4300 = vmatpush1.bf16.msra.mxu0 %v4080
    %4301 = vmatprep.subr.bf16.mxu0 %v4085
    %4302 = vmatpush1.bf16.msra.mxu0 %v4084
    %4303 = vmatprep.subr.bf16.mxu0 %v4089
    %4304 = vmatpush1.bf16.msra.mxu0 %v4088
    %4305 = vmatprep.subr.bf16.mxu0 %v4093
    %4306 = vmatpush1.bf16.msra.mxu0 %v4092
    %4307 = vmatprep.mubr.bf16.mxu0 %v3961
    %4308 = vmatmul.mubr.bf16.gmra.mrb[0].mxu0 %v3960
    %v4309 = vpop.f32.mrb[0].mxu0
    %v4310 = vadd.f32 %v4257, %v4309
    %v4311 = vpop.f32.mrb[0].mxu0
    %v4312 = vadd.f32 %v4259, %v4311
    %v4313 = vpop.f32.mrb[0].mxu0
    %v4314 = vadd.f32 %v4261, %v4313
    %v4315 = vpop.f32.mrb[0].mxu0
    %v4316 = vadd.f32 %v4263, %v4315
    %4317 = vmatprep.mubr.bf16.mxu0 %v3965
    %4318 = vmatmul.mubr.bf16.gmra.mrb[0].mxu0 %v3964
    %v4319 = vpop.f32.mrb[0].mxu0
    %v4320 = vadd.f32 %v4267, %v4319
    %v4321 = vpop.f32.mrb[0].mxu0
    %v4322 = vadd.f32 %v4269, %v4321
    %v4323 = vpop.f32.mrb[0].mxu0
    %v4324 = vadd.f32 %v4271, %v4323
    %v4325 = vpop.f32.mrb[0].mxu0
    %v4326 = vadd.f32 %v4273, %v4325
    %4327 = vdwg.mxu0
    %v4328 = vmax.f32 %v4204, 0.0
    %v4329 = vmax.f32 %v4206, 0.0
    %v4330 = vmax.f32 %v4310, 0.0
    %v4331 = vmax.f32 %v4312, 0.0
    %v4332 = vmax.f32 %v4208, 0.0
    %v4333 = vmax.f32 %v4210, 0.0
    %v4334 = vmax.f32 %v4314, 0.0
    %v4335 = vmax.f32 %v4316, 0.0
    %v4336 = vmax.f32 %v4214, 0.0
    %v4337 = vmax.f32 %v4216, 0.0
    %v4338 = vmax.f32 %v4320, 0.0
    %v4339 = vmax.f32 %v4322, 0.0
    %v4340 = vmax.f32 %v4218, 0.0
    %v4341 = vmax.f32 %v4220, 0.0
    %v4342 = vmax.f32 %v4324, 0.0
    %v4343 = vmax.f32 %v4326, 0.0
    %v4344 = vld [vmem:[%s10] sm:$0xf]
    %v4346 = vlaneseq
    %v4347 = vshrl.u32 %v4346, 7
    %v4348 = vsub.s32 0, %v4347
    %v4349 = vrot.slane %v4344, %v4348
    %v4350 = vlaneseq
    %v4351 = vshrl.u32 %v4350, 7
    %v4352 = vsub.s32 1, %v4351
    %v4353 = vrot.slane %v4344, %v4352
    %v4354 = vlaneseq
    %v4355 = vshrl.u32 %v4354, 7
    %v4356 = vsub.s32 2, %v4355
    %v4357 = vrot.slane %v4344, %v4356
    %v4358 = vlaneseq
    %v4359 = vshrl.u32 %v4358, 7
    %v4360 = vsub.s32 3, %v4359
    %v4361 = vrot.slane %v4344, %v4360
    %v4366 = vmul.f32 %v4328, %v4349
    %v4367 = vmul.f32 %v4329, %v4353
    %v4368 = vmul.f32 %v4330, %v4357
    %v4369 = vmul.f32 %v4331, %v4361
    %v4370 = vmul.f32 %v4332, %v4349
    %v4371 = vmul.f32 %v4333, %v4353
    %v4372 = vmul.f32 %v4334, %v4357
    %v4373 = vmul.f32 %v4335, %v4361
    %v4374 = vmul.f32 %v4336, %v4349
    %v4375 = vmul.f32 %v4337, %v4353
    %v4376 = vmul.f32 %v4338, %v4357
    %v4377 = vmul.f32 %v4339, %v4361
    %v4378 = vmul.f32 %v4340, %v4349
    %v4379 = vmul.f32 %v4341, %v4353
    %v4380 = vmul.f32 %v4342, %v4357
    %v4381 = vmul.f32 %v4343, %v4361
    %v4382 = vadd.f32 %v4366, %v4367
    %v4383 = vadd.f32 %v4382, %v4368
    %v4384 = vadd.f32 %v4383, %v4369
    %4385 = vadd.xlane.f32.xlu0 %v4384
    %v4386 = vpop.xlane.xlu0 %4385
    %v4387 = vadd.f32 %v4370, %v4371
    %v4388 = vadd.f32 %v4387, %v4372
    %v4389 = vadd.f32 %v4388, %v4373
    %4390 = vadd.xlane.f32.xlu0 %v4389
    %v4391 = vpop.xlane.xlu0 %4390
    %v4392 = vadd.f32 %v4374, %v4375
    %v4393 = vadd.f32 %v4392, %v4376
    %v4394 = vadd.f32 %v4393, %v4377
    %4395 = vadd.xlane.f32.xlu0 %v4394
    %v4396 = vpop.xlane.xlu0 %4395
    %v4397 = vadd.f32 %v4378, %v4379
    %v4398 = vadd.f32 %v4397, %v4380
    %v4399 = vadd.f32 %v4398, %v4381
    %4400 = vadd.xlane.f32.xlu0 %v4399
    %v4401 = vpop.xlane.xlu0 %4400
    %v4402 = vld [vmem:[%s2 + $0x1e] sm:$0x1]
    %v4404 = vlaneseq
    %v4405 = vshrl.u32 %v4404, 7
    %v4406 = vsub.s32 0, %v4405
    %v4407 = vrot.slane %v4402, %v4406
    %v4409 = vadd.f32 %v4386, %v4407
    %v4410 = vadd.f32 %v4391, %v4407
    %v4411 = vadd.f32 %v4396, %v4407
    %v4412 = vadd.f32 %v4401, %v4407
    %v4413 = vlaneseq
    %v4414 = vshrl.u32 %v4413, 7
    %v4415 = vadd.s32 %v4414, 8
    %vm4416 = vcmp.lt.s32.totalorder %v4414, 10
    %vm4417 = vcmp.lt.s32.totalorder %v4415, 10
    %v4418 = vsel %vm4416, %v4409, 0.0
    %v4419 = vsel %vm4417, %v4410, 0.0
    %vm4420 = vcmask 7168
    %v4421 = vsel %vm4420, %v4418, 0.0
    %v4422 = vsel %vm4420, %v4419, 0.0
    %v4423 = vadd.f32 %v4421, %v4422
    %4424 = vadd.xlane.f32.xlu0 %v4423
    %v4425 = vpop.xlane.xlu0 %4424
    %v4426 = vrot.slane %v4425, 4
    %v4427 = vadd.f32 %v4425, %v4426
    %v4428 = vrot.slane %v4427, 2
    %v4429 = vadd.f32 %v4427, %v4428
    %v4430 = vrot.slane %v4429, 1
    %v4431 = vadd.f32 %v4429, %v4430
    %s4432 = vtos %v4431
    %v4433 = vrcp.pop 10.0
    %s4434 = vtos %v4433
    %s4435 = smul.f32 %s4432, %s4434
    %v4436 = vsel %vm4416, %v4411, -1e+30
    %v4437 = vsel %vm4417, %v4412, -1e+30
    %v4438 = vsel %vm4420, %v4436, -inf
    %v4439 = vsel %vm4420, %v4437, -inf
    %v4440 = vmax.f32 %v4438, %v4439
    %4441 = vmax.xlane.f32.xlu0 %v4440
    %v4442 = vpop.xlane.xlu0 %4441
    %v4443 = vrot.slane %v4442, 4
    %v4444 = vmax.f32 %v4442, %v4443
    %v4445 = vrot.slane %v4444, 2
    %v4446 = vmax.f32 %v4444, %v4445
    %v4447 = vrot.slane %v4446, 1
    %v4448 = vmax.f32 %v4446, %v4447
    %s4449 = vtos %v4448
    %v4450 = vstv %s4449
    %v4451 = vsub.f32 %v4436, %v4450
    %v4452 = vsub.f32 %v4437, %v4450
    %v4453 = vmul.f32 %v4451, 1.442695
    %v4454 = vpow.pop %v4453
    %v4455 = vmul.f32 %v4452, 1.442695
    %v4456 = vpow.pop %v4455
    %v4457 = vsel %vm4420, %v4454, 0.0
    %v4458 = vsel %vm4420, %v4456, 0.0
    %v4459 = vadd.f32 %v4457, %v4458
    %4460 = vadd.xlane.f32.xlu0 %v4459
    %v4461 = vpop.xlane.xlu0 %4460
    %v4462 = vrot.slane %v4461, 4
    %v4463 = vadd.f32 %v4461, %v4462
    %v4464 = vrot.slane %v4463, 2
    %v4465 = vadd.f32 %v4463, %v4464
    %v4466 = vrot.slane %v4465, 1
    %v4467 = vadd.f32 %v4465, %v4466
    %s4468 = vtos %v4467
    %v4469 = vrcp.pop 10.0
    %s4470 = vtos %v4469
    %s4471 = smul.f32 %s4468, %s4470
    %v4472 = vstv %s4471
    %v4473 = vlog2.pop %v4472
    %v4474 = vmul.f32 %v4473, 0.6931472
    %s4475 = vtos %v4474
    %s4476 = sadd.f32 %s4449, %s4475
    %s4477 = ssub.f32 %s4435, %s4476
    %s4478 = smax.f32 %s4477, 0.0
    %v4479 = vlaneseq
    %v4480 = vand.u32 %v4479, 127
    %vm4481 = vcmp.eq.s32.totalorder %v4480, 0
    %vm4482 = vcmp.eq.s32.totalorder %v4480, 1
    %vm4483 = vcmp.eq.s32.totalorder %v4480, 2
    %vm4484 = vcmp.eq.s32.totalorder %v4480, 3
    %v4485 = vstv %s4476
    %v4486 = vsel %vm4484, %v4485, 0.0
    %v4487 = vstv %s4435
    %v4488 = vsel %vm4483, %v4487, %v4486
    %v4489 = vstv %s4477
    %v4490 = vsel %vm4482, %v4489, %v4488
    %v4491 = vstv %s4478
    %v4492 = vsel %vm4481, %v4491, %v4490
    %4493 = vst [vmem:[%s16] sm:$0x1] %v4492
    // Predicated region
    $region128: #{forward.5} parent=1 // pred_check
      _
    $region129: #{forward.5} parent=1 // pred_check_branch
      %4495 = sbr.rel (0) target = $region131
    $region130: #{forward.5} parent=1 // pred_region
      _
    $region131: #{forward.5} parent=1 // pred_fallthru
      _
    // Predicated region
    $region132: #{forward.5} parent=1 // pred_check
      _
    $region133: #{forward.5} parent=1 // pred_check_branch
      %4497 = sbr.rel (0) target = $region135
    $region134: #{forward.5} parent=1 // pred_region
      _
    $region135: #{forward.5} parent=1 // pred_fallthru
      _
    %4498 = vsyncpa [#allocation9], 1
    %4499 = vsyncpa [#allocation11], 1
  %4500 = vsyncmov [#allocation7]
  %s4501 = vpop.sfrf %4500
  %p4502 = scmp.eq.s32.totalorder %s4501, 0
  %p4503 = pneg %p4502
  %4505 = shalt.err (%p4503)
  %s4506 = scalar_lea.sflag [#allocation7], 1
  %4507 = vsyncmov %s4506
  %s4508 = vpop.sfrf %4507
  %p4509 = scmp.eq.s32.totalorder %s4508, 0
  %p4510 = pneg %p4509
  %4512 = shalt.err (%p4510)
  %s4513 = scalar_lea.sflag [#allocation7], 2
  %4514 = vsyncmov %s4513
  %s4515 = vpop.sfrf %4514
  %p4516 = scmp.eq.s32.totalorder %s4515, 0
  %p4517 = pneg %p4516
  %4519 = shalt.err (%p4517)
  %s4520 = scalar_lea.sflag [#allocation7], 3
  %4521 = vsyncmov %s4520
  %s4522 = vpop.sfrf %4521
  %p4523 = scmp.eq.s32.totalorder %s4522, 0
  %p4524 = pneg %p4523
  %4526 = shalt.err (%p4524)
  %s4527 = scalar_lea.sflag [#allocation7], 4
  %4528 = vsyncmov %s4527
  %s4529 = vpop.sfrf %4528
  %p4530 = scmp.eq.s32.totalorder %s4529, 0
  %p4531 = pneg %p4530
  %4533 = shalt.err (%p4531)

</llo_original>
